<compile_context>
chip_gen: v7x
topology: tpu7x:2x2x1
jax: 0.10.0
libtpu: 0.0.40
codegen_flags: <defaults>
</compile_context>

<pallas_src>
import math

import jax
import jax.numpy as jnp
from jax.experimental import pallas as pl
from jax.experimental.pallas import tpu as pltpu


def make_siren_kernel(hidden_layers):
    """Build the fused SIREN forward kernel.

    Layout inside the kernel (samples on lanes, features on sublanes):
      x_ref   : (2, tm)      transposed coordinates
      w1t_ref : (H, 2)       first-layer weight, transposed, omega folded
      b1t_ref : (H, 1)       first-layer bias,   transposed, omega folded
      wht_ref : (L, H, H)    hidden weights, each transposed, omega folded
      bht_ref : (L, H, 1)    hidden biases,  transposed, omega folded
      wo_ref  : (H, 1)       final weight column
      bo_ref  : (1, 1)       final bias scalar (SMEM)
      o_ref   : (1, tm)      lane-dense output row
    """

    def kernel(x_ref, w1t_ref, b1t_ref, wht_ref, bht_ref, wo_ref, bo_ref, o_ref):
        xt = x_ref[...]                                   # (2, tm)
        w1t = w1t_ref[...]                                # (H, 2)

        # --- First sine layer (K=2: kept off the MXU) -------------------------
        # z.T = W1.T @ x.T  ==  w1t[:,0:1]*x_row0 + w1t[:,1:2]*x_row1
        z = (w1t[:, 0:1] * xt[0:1, :]
             + w1t[:, 1:2] * xt[1:2, :]
             + b1t_ref[...])                              # (H, tm)
        h = jnp.sin(z)                                    # (H, tm) — lane-dense

        # --- Hidden sine layers (H x H on the MXU, transposed) -----------------
        for l in range(hidden_layers):
            z = jnp.dot(wht_ref[l], h, preferred_element_type=jnp.float32)
            h = jnp.sin(z + bht_ref[l])                   # (H, tm)

        # --- Final H -> 1 linear: VPU mul + sublane reduce ---------------------
        # Directly produces the lane-dense (1, tm) output row; no XLU transpose.
        g = h * wo_ref[...]                               # (H, tm) * (H, 1)
        out = jnp.sum(g, axis=0, keepdims=True)           # (1, tm)
        o_ref[...] = out + bo_ref[0, 0]                   # bo scalar from SMEM

    return kernel


def siren_forward(x, kernel_params, *, tm=512):
    """Run the SIREN forward pass with the fused Pallas kernel.

    x: (N, 2) float32 coordinates. kernel_params: omega-folded, transposed
    params from fold_omega_into_params. Returns (N, 1) float32 intensities.
    """
    w1t, b1t, wht, bht, wo_col, bo = kernel_params
    N, in_features = x.shape
    H = w1t.shape[0]
    L = wht.shape[0]

    tm = min(tm, N)
    assert N % tm == 0, "N must be a multiple of the sample tile size tm"
    assert tm % 128 == 0, "tm must be a multiple of 128 (lane width)"

    # Lane-dense input layout: coordinates on sublanes, samples on lanes.
    x_t = jnp.transpose(x)                                # (2, N)

    kernel = make_siren_kernel(L)
    grid = (N // tm,)

    out_row = pl.pallas_call(
        kernel,
        out_shape=jax.ShapeDtypeStruct((1, N), jnp.float32),
        grid_spec=pltpu.PrefetchScalarGridSpec(
            num_scalar_prefetch=0,
            grid=grid,
            in_specs=[
                # x tile: (2, tm), lane-dense, contiguous DMA per grid step
                pl.BlockSpec((in_features, tm), lambda i: (0, i)),
                # weights / biases: full arrays, same block every grid step
                pl.BlockSpec((H, in_features), lambda i: (0, 0)),
                pl.BlockSpec((H, 1), lambda i: (0, 0)),
                pl.BlockSpec((L, H, H), lambda i: (0, 0, 0)),
                pl.BlockSpec((L, H, 1), lambda i: (0, 0, 0)),
                pl.BlockSpec((H, 1), lambda i: (0, 0)),
                # final bias scalar: SMEM, whole (1,1) array
                pl.BlockSpec(memory_space=pltpu.MemorySpace.SMEM),
            ],
            # lane-dense (1, tm) row per step (unmasked vst)
            out_specs=pl.BlockSpec((1, tm), lambda i: (0, i)),
        ),
        compiler_params=pltpu.CompilerParams(
            # On v7x, pltpu.CORE_PARALLEL on this axis forces 2-TC sharding
            # (keep N // tm a multiple of 2); "parallel" is the portable default.
            dimension_semantics=("parallel",),
        ),
    )(x_t, w1t, b1t, wht, bht, wo_col, bo)

    return out_row.reshape(N, 1)


# ----------------------------------------------------------------------------
# Parameter construction (emulates original_siren_initialization + nn.Linear)
# ----------------------------------------------------------------------------
def original_siren_init(key, in_features, out_features, *, is_first, omega):
    """W of shape (in_features, out_features) (transposed vs torch Linear.weight),
    b of shape (1, out_features)."""
    kw, kb = jax.random.split(key)
    if is_first:
        bound_w = 1.0 / in_features
    else:
        bound_w = math.sqrt(6.0 / in_features) / omega
    W = jax.random.uniform(kw, (in_features, out_features),
                           minval=-bound_w, maxval=bound_w, dtype=jnp.float32)
    # torch.nn.Linear default bias init: U(-1/sqrt(in), 1/sqrt(in))
    bound_b = 1.0 / math.sqrt(in_features)
    b = jax.random.uniform(kb, (1, out_features),
                           minval=-bound_b, maxval=bound_b, dtype=jnp.float32)
    return W, b


def build_siren_params(key, hidden_features, hidden_layers,
                       first_omega, hidden_omega):
    in_features, out_features = 2, 1
    keys = jax.random.split(key, hidden_layers + 2)

    w1, b1 = original_siren_init(keys[0], in_features, hidden_features,
                                 is_first=True, omega=first_omega)

    whs, bhs = [], []
    for l in range(hidden_layers):
        w, b = original_siren_init(keys[1 + l], hidden_features, hidden_features,
                                   is_first=False, omega=hidden_omega)
        whs.append(w)
        bhs.append(b)
    wh = jnp.stack(whs, axis=0)                      # (L, H, H)
    bh = jnp.stack(bhs, axis=0)                      # (L, 1, H)

    wo, bo = original_siren_init(keys[-1], hidden_features, out_features,
                                 is_first=False, omega=hidden_omega)
    return (w1, b1, wh, bh, wo, bo)


def fold_omega_into_params(params, *, first_omega, hidden_omega):
    """One-time fold + transpose for the lane-dense (samples-on-lanes) kernel.

    sin(omega*(xW+b)) == sin(x @ (omega*W) + omega*b); transposed, the kernel
    computes z.T = (omega*W).T @ h.T + (omega*b).T.
    """
    w1, b1, wh, bh, wo, bo = params
    w1t = jnp.transpose(first_omega * w1)                # (H, 2)
    b1t = jnp.transpose(first_omega * b1)                # (H, 1)
    wht = jnp.transpose(hidden_omega * wh, (0, 2, 1))    # (L, H, H), each W.T
    bht = jnp.transpose(hidden_omega * bh, (0, 2, 1))    # (L, H, 1)
    wo_col = wo.reshape(-1, 1)                           # (H, 1)
    bo = bo.reshape(1, 1)                                # (1, 1) scalar (SMEM)
    return (w1t, b1t, wht, bht, wo_col, bo)


def siren_reference(x, params, *, first_omega, hidden_omega):
    """Pure-JAX reference matching the original torch module semantics."""
    w1, b1, wh, bh, wo, bo = params
    h = jnp.sin(first_omega * (x @ w1 + b1))
    for l in range(wh.shape[0]):
        h = jnp.sin(hidden_omega * (h @ wh[l] + bh[l]))
    return h @ wo + bo


if __name__ == "__main__":
    # Small config consistent with the module: coords (N, 2) -> intensity (N, 1)
    hidden_features = 32
    hidden_layers = 2
    first_omega = 30.0
    hidden_omega = 30.0
    N = 1024          # n_samples; tm=512 -> 2 grid steps (both TCs on v7x)

    key = jax.random.PRNGKey(0)
    kx, kp = jax.random.split(key)
    x = jax.random.uniform(kx, (N, 2), minval=-1.0, maxval=1.0,
                           dtype=jnp.float32)
    params = build_siren_params(kp, hidden_features, hidden_layers,
                                first_omega, hidden_omega)
    kparams = fold_omega_into_params(params, first_omega=first_omega,
                                     hidden_omega=hidden_omega)

    out = siren_forward(x, kparams, tm=512)
    out = jax.block_until_ready(out)

    ref = siren_reference(x, params,
                          first_omega=first_omega, hidden_omega=hidden_omega)
    assert out.shape == (N, 1)
    assert jnp.allclose(out, ref, atol=1e-4, rtol=1e-4), (
        float(jnp.max(jnp.abs(out - ref))))

    print("KERNEL_OK")
</pallas_src>

<mosaic_0001>
module attributes {stable_mosaic.version = 11 : i64} {
  func.func @kernel(%arg0: i32, %arg1: memref<2x512xf32, #tpu.memory_space<vmem>>, %arg2: memref<32x2xf32, #tpu.memory_space<vmem>>, %arg3: memref<32x1xf32, #tpu.memory_space<vmem>>, %arg4: memref<2x32x32xf32, #tpu.memory_space<vmem>>, %arg5: memref<2x32x1xf32, #tpu.memory_space<vmem>>, %arg6: memref<32x1xf32, #tpu.memory_space<vmem>>, %arg7: memref<1x1xf32, #tpu.memory_space<smem>>, %arg8: memref<1x512xf32, #tpu.memory_space<vmem>>) attributes {dimension_semantics = [#tpu.dimension_semantics<parallel>], iteration_bounds = array<i64: 2>, scalar_prefetch = 0 : i64, scratch_operands = 0 : i64, tpu.core_type = #tpu.core_type<tc>, window_params = [{transform_indices = @transform_0, window_bounds = array<i64: 2, 512>}, {pipeline_mode = #tpu.pipeline_mode<synchronous>, transform_indices = @transform_1, window_bounds = array<i64: 32, 2>}, {pipeline_mode = #tpu.pipeline_mode<synchronous>, transform_indices = @transform_2, window_bounds = array<i64: 32, 1>}, {pipeline_mode = #tpu.pipeline_mode<synchronous>, transform_indices = @transform_3, window_bounds = array<i64: 2, 32, 32>}, {pipeline_mode = #tpu.pipeline_mode<synchronous>, transform_indices = @transform_4, window_bounds = array<i64: 2, 32, 1>}, {pipeline_mode = #tpu.pipeline_mode<synchronous>, transform_indices = @transform_5, window_bounds = array<i64: 32, 1>}, {transform_indices = @transform_6, window_bounds = array<i64: 1, 1>}, {transform_indices = @transform_7, window_bounds = array<i64: 1, 512>}]} {
    %c0 = arith.constant 0 : index
    %c0_0 = arith.constant 0 : index
    %0 = vector.load %arg1[%c0, %c0_0] : memref<2x512xf32, #tpu.memory_space<vmem>>, vector<2x512xf32>
    %c0_1 = arith.constant 0 : index
    %c0_2 = arith.constant 0 : index
    %1 = vector.load %arg2[%c0_1, %c0_2] : memref<32x2xf32, #tpu.memory_space<vmem>>, vector<32x2xf32>
    %2 = vector.extract_strided_slice %1 {offsets = [0, 0], sizes = [32, 1], strides = [1, 1]} : vector<32x2xf32> to vector<32x1xf32>
    %3 = vector.extract_strided_slice %0 {offsets = [0, 0], sizes = [1, 512], strides = [1, 1]} : vector<2x512xf32> to vector<1x512xf32>
    %4 = vector.broadcast %2 : vector<32x1xf32> to vector<32x512xf32>
    %5 = vector.broadcast %3 : vector<1x512xf32> to vector<32x512xf32>
    %6 = arith.mulf %4, %5 : vector<32x512xf32>
    %7 = vector.extract_strided_slice %1 {offsets = [0, 1], sizes = [32, 1], strides = [1, 1]} : vector<32x2xf32> to vector<32x1xf32>
    %8 = vector.extract_strided_slice %0 {offsets = [1, 0], sizes = [1, 512], strides = [1, 1]} : vector<2x512xf32> to vector<1x512xf32>
    %9 = vector.broadcast %7 : vector<32x1xf32> to vector<32x512xf32>
    %10 = vector.broadcast %8 : vector<1x512xf32> to vector<32x512xf32>
    %11 = arith.mulf %9, %10 : vector<32x512xf32>
    %12 = arith.addf %6, %11 : vector<32x512xf32>
    %c0_3 = arith.constant 0 : index
    %c0_4 = arith.constant 0 : index
    %13 = vector.load %arg3[%c0_3, %c0_4] : memref<32x1xf32, #tpu.memory_space<vmem>>, vector<32x1xf32>
    %14 = vector.broadcast %13 : vector<32x1xf32> to vector<32x512xf32>
    %15 = arith.addf %12, %14 : vector<32x512xf32>
    %16 = math.sin %15 : vector<32x512xf32>
    %c0_5 = arith.constant 0 : index
    %c0_6 = arith.constant 0 : index
    %c0_7 = arith.constant 0 : index
    %17 = vector.load %arg4[%c0_5, %c0_6, %c0_7] : memref<2x32x32xf32, #tpu.memory_space<vmem>>, vector<1x32x32xf32>
    %18 = vector.shape_cast %17 : vector<1x32x32xf32> to vector<32x32xf32>
    %cst = arith.constant dense<0.000000e+00> : vector<32x512xf32>
    %19 = tpu.matmul %18, %16, %cst {dimension_numbers = #tpu.dot_dimension_numbers<[1], [0], [0], [1], [0, 0, 1, 1], [], []>} : vector<32x32xf32>, vector<32x512xf32>, vector<32x512xf32> -> vector<32x512xf32>
    %c0_8 = arith.constant 0 : index
    %c0_9 = arith.constant 0 : index
    %c0_10 = arith.constant 0 : index
    %20 = vector.load %arg5[%c0_8, %c0_9, %c0_10] : memref<2x32x1xf32, #tpu.memory_space<vmem>>, vector<1x32x1xf32>
    %21 = vector.shape_cast %20 : vector<1x32x1xf32> to vector<32x1xf32>
    %22 = vector.broadcast %21 : vector<32x1xf32> to vector<32x512xf32>
    %23 = arith.addf %19, %22 : vector<32x512xf32>
    %24 = math.sin %23 : vector<32x512xf32>
    %c1 = arith.constant 1 : index
    %c0_11 = arith.constant 0 : index
    %c0_12 = arith.constant 0 : index
    %25 = vector.load %arg4[%c1, %c0_11, %c0_12] : memref<2x32x32xf32, #tpu.memory_space<vmem>>, vector<1x32x32xf32>
    %26 = vector.shape_cast %25 : vector<1x32x32xf32> to vector<32x32xf32>
    %cst_13 = arith.constant dense<0.000000e+00> : vector<32x512xf32>
    %27 = tpu.matmul %26, %24, %cst_13 {dimension_numbers = #tpu.dot_dimension_numbers<[1], [0], [0], [1], [0, 0, 1, 1], [], []>} : vector<32x32xf32>, vector<32x512xf32>, vector<32x512xf32> -> vector<32x512xf32>
    %c1_14 = arith.constant 1 : index
    %c0_15 = arith.constant 0 : index
    %c0_16 = arith.constant 0 : index
    %28 = vector.load %arg5[%c1_14, %c0_15, %c0_16] : memref<2x32x1xf32, #tpu.memory_space<vmem>>, vector<1x32x1xf32>
    %29 = vector.shape_cast %28 : vector<1x32x1xf32> to vector<32x1xf32>
    %30 = vector.broadcast %29 : vector<32x1xf32> to vector<32x512xf32>
    %31 = arith.addf %27, %30 : vector<32x512xf32>
    %32 = math.sin %31 : vector<32x512xf32>
    %c0_17 = arith.constant 0 : index
    %c0_18 = arith.constant 0 : index
    %33 = vector.load %arg6[%c0_17, %c0_18] : memref<32x1xf32, #tpu.memory_space<vmem>>, vector<32x1xf32>
    %34 = vector.broadcast %33 : vector<32x1xf32> to vector<32x512xf32>
    %35 = arith.mulf %32, %34 : vector<32x512xf32>
    %cst_19 = arith.constant dense<0.000000e+00> : vector<512xf32>
    %36 = vector.multi_reduction <add>, %35, %cst_19 [0] : vector<32x512xf32> to vector<512xf32>
    %37 = vector.shape_cast %36 : vector<512xf32> to vector<1x512xf32>
    %c0_20 = arith.constant 0 : index
    %c0_21 = arith.constant 0 : index
    %38 = memref.load %arg7[%c0_20, %c0_21] : memref<1x1xf32, #tpu.memory_space<smem>>
    %39 = vector.broadcast %38 : f32 to vector<1x512xf32>
    %40 = arith.addf %37, %39 : vector<1x512xf32>
    %c0_22 = arith.constant 0 : index
    %c0_23 = arith.constant 0 : index
    %41 = vector.load %arg8[%c0_22, %c0_23] : memref<1x512xf32, #tpu.memory_space<vmem>>, vector<1x512xf32>
    tpu.vector_store %arg8[%c0_22, %c0_23], %40 {strides = array<i32>} : memref<1x512xf32, #tpu.memory_space<vmem>>, vector<1x512xf32>,
    return
  }
  func.func @transform_0(%arg0: i32) -> (i32, i32) {
    %c0_i32 = arith.constant 0 : i32
    %c0_i32_0 = arith.constant 0 : i32
    return %c0_i32, %arg0 : i32, i32
  }
  func.func @transform_1(%arg0: i32) -> (i32, i32) {
    %c0_i32 = arith.constant 0 : i32
    %c0_i32_0 = arith.constant 0 : i32
    %c0_i32_1 = arith.constant 0 : i32
    return %c0_i32, %c0_i32_0 : i32, i32
  }
  func.func @transform_2(%arg0: i32) -> (i32, i32) {
    %c0_i32 = arith.constant 0 : i32
    %c0_i32_0 = arith.constant 0 : i32
    %c0_i32_1 = arith.constant 0 : i32
    return %c0_i32, %c0_i32_0 : i32, i32
  }
  func.func @transform_3(%arg0: i32) -> (i32, i32, i32) {
    %c0_i32 = arith.constant 0 : i32
    %c0_i32_0 = arith.constant 0 : i32
    %c0_i32_1 = arith.constant 0 : i32
    %c0_i32_2 = arith.constant 0 : i32
    return %c0_i32, %c0_i32_0, %c0_i32_1 : i32, i32, i32
  }
  func.func @transform_4(%arg0: i32) -> (i32, i32, i32) {
    %c0_i32 = arith.constant 0 : i32
    %c0_i32_0 = arith.constant 0 : i32
    %c0_i32_1 = arith.constant 0 : i32
    %c0_i32_2 = arith.constant 0 : i32
    return %c0_i32, %c0_i32_0, %c0_i32_1 : i32, i32, i32
  }
  func.func @transform_5(%arg0: i32) -> (i32, i32) {
    %c0_i32 = arith.constant 0 : i32
    %c0_i32_0 = arith.constant 0 : i32
    %c0_i32_1 = arith.constant 0 : i32
    return %c0_i32, %c0_i32_0 : i32, i32
  }
  func.func @transform_6(%arg0: i32) -> (i32, i32) {
    %c0_i32 = arith.constant 0 : i32
    %c0_i32_0 = arith.constant 0 : i32
    %c0_i32_1 = arith.constant 0 : i32
    return %c0_i32, %c0_i32_0 : i32, i32
  }
  func.func @transform_7(%arg0: i32) -> (i32, i32) {
    %c0_i32 = arith.constant 0 : i32
    %c0_i32_0 = arith.constant 0 : i32
    return %c0_i32, %arg0 : i32, i32
  }
}

</mosaic_0001>

<llo_original>
// kernel: tpu_custom_call.1
$region0: #{tpu_custom_call.1}
  #allocation0 [shape = 'u32[]', space=smem, size = 0x4, offset = 0x4, fixed_abs, tag = 'smem constant byte address 0x4 - core index']
  #allocation1 [shape = 'u32[144,128]{1,0:T(1,128)}', space=vmem, size = 0x12000, scoped, tag = 'internal scratch']
  #allocation2 [shape = 'f32[1,1]{1,0:T(1,128)S(6)}', space=smem, size = 0x200, scoped, tag = 'scoped memory for tpu_custom_call.1']
  %s0 = inlined_call_operand.vmem [shape: f32[2,1024], index: 0, kind: input, shape index: {}]
  %s1 = inlined_call_operand.vmem [shape: f32[32,2], index: 1, kind: input, shape index: {}]
  %s2 = inlined_call_operand.vmem [shape: f32[32,1], index: 2, kind: input, shape index: {}]
  %s3 = inlined_call_operand.vmem [shape: f32[2,32,32], index: 3, kind: input, shape index: {}]
  %s4 = inlined_call_operand.vmem [shape: f32[2,32,1], index: 4, kind: input, shape index: {}]
  %s5 = inlined_call_operand.vmem [shape: f32[32,1], index: 5, kind: input, shape index: {}]
  %s6 = inlined_call_operand.<no memory space> [shape: f32[1,1], index: 6, kind: input, shape index: {}]
  %s7 = inlined_call_operand.hbm [shape: f32[1,1024], index: 7, kind: output, shape index: {}]
  %s8 = sld [smem:[#allocation0]]
  $region61: #{tpu_custom_call.1} parent=0
    _
  %s10 = ssub.s32 1, %s8
  %s11 = scalar_select 0, %s10, %s8
  %12 = sst [smem:[#allocation2]] %s6
  $region1: #{tpu_custom_call.1} parent=0
    #allocation3 [shape = 'u8[4096]{0}', space=vmem, size = 0x1000, scoped, tag = 'output window, operand 0']
    #allocation4 [shape = 's32[2]{0}', space=sflag, size = 0x8, scoped, tag = 'scoped memory for tpu_custom_call.1']
    %13 = vsyncpa [#allocation4], 0
    %s14 = scalar_lea.sflag [#allocation4], 1
    %15 = vsyncpa %s14, 0
    loop: start=0, step=1, limit=4
    $region2: #{tpu_custom_call.1} parent=1 // loop_pre_header
      _
    $region3: #{tpu_custom_call.1} parent=1 // loop_header
      %s17 = sphi 0, %s21
      %p18 = scmp.ge.s32.totalorder %s17, 4
      %s27 = sphi 0, %s29
      %s30 = sphi 0, %s27
      %s31 = sphi 0, %s30
      %s47 = sphi 0, %s31
      %s51 = sphi 0, %s51
      %s53 = sphi 0, %s51
      %s54 = sphi 0, %s53
      %s68 = sphi 0, %s54
      %s72 = sphi 0, %s72
      %s74 = sphi 0, %s72
      %s75 = sphi 0, %s74
      %s89 = sphi 0, %s75
      %s93 = sphi 0, %s93
      %s95 = sphi 0, %s93
      %s96 = sphi 0, %s95
      %s110 = sphi 0, %s96
      %s114 = sphi 0, %s114
      %s116 = sphi 0, %s114
      %s117 = sphi 0, %s116
      %s131 = sphi 0, %s117
      %s135 = sphi 0, %s135
      %s137 = sphi 0, %s135
      %s138 = sphi 0, %s137
      %s152 = sphi 0, %s138
      %s156 = sphi 0, %s156
      %s158 = sphi 0, %s156
      %s159 = sphi 0, %s158
      %s173 = sphi 0, %s159
      %s179 = sphi 0, %s181
      %s182 = sphi 0, %s179
      %s183 = sphi 0, %s182
      %s199 = sphi 0, %s183
    $region4: #{tpu_custom_call.1} parent=1 // loop_header_branch
      %20 = sbr.rel (%p18) target = $region8
    $region5: #{tpu_custom_call.1} parent=1 // loop_body
      %s22 = ssub.s32 %s17, 1
      %s23 = ssub.s32 %s17, 2
      %s24 = sadd.s32 %s17, 1
      %s25 = ssub.s32 %s17, %s24
      %p26 = scmp.eq.s32.totalorder %s25, 0
      %s28 = sadd.s32 %s27, 1
      %s29 = scalar_select %p26, %s27, %s28
      %p32 = pneg %p26
      %p33 = scmp.eq.s32.totalorder %s17, 1
      %p34 = por %p32, %p33
      %p35 = scmp.ne.s32.totalorder %s27, %s30
      %p36 = scmp.eq.s32.totalorder %s17, 0
      %p37 = por %p35, %p36
      %p38 = scmp.ne.s32.totalorder %s27, %s30
      %p39 = scmp.eq.s32.totalorder %s22, 1
      %p40 = por %p38, %p39
      %p41 = scmp.ne.s32.totalorder %s30, %s31
      %p42 = scmp.eq.s32.totalorder %s22, 0
      %p43 = por %p41, %p42
      %p44 = scmp.ne.s32.totalorder %s30, %s31
      %p45 = scmp.eq.s32.totalorder %s23, 1
      %p46 = por %p44, %p45
      %p48 = scmp.ne.s32.totalorder %s31, %s47
      %p49 = scmp.eq.s32.totalorder %s23, 0
      %p50 = por %p48, %p49
      %s52 = sadd.s32 %s51, 1
      %p55 = scmp.eq.s32.totalorder %s17, 1
      %p56 = scmp.ne.s32.totalorder %s51, %s53
      %p57 = scmp.eq.s32.totalorder %s17, 0
      %p58 = por %p56, %p57
      %p59 = scmp.ne.s32.totalorder %s51, %s53
      %p60 = scmp.eq.s32.totalorder %s22, 1
      %p61 = por %p59, %p60
      %p62 = scmp.ne.s32.totalorder %s53, %s54
      %p63 = scmp.eq.s32.totalorder %s22, 0
      %p64 = por %p62, %p63
      %p65 = scmp.ne.s32.totalorder %s53, %s54
      %p66 = scmp.eq.s32.totalorder %s23, 1
      %p67 = por %p65, %p66
      %p69 = scmp.ne.s32.totalorder %s54, %s68
      %p70 = scmp.eq.s32.totalorder %s23, 0
      %p71 = por %p69, %p70
      %s73 = sadd.s32 %s72, 1
      %p76 = scmp.eq.s32.totalorder %s17, 1
      %p77 = scmp.ne.s32.totalorder %s72, %s74
      %p78 = scmp.eq.s32.totalorder %s17, 0
      %p79 = por %p77, %p78
      %p80 = scmp.ne.s32.totalorder %s72, %s74
      %p81 = scmp.eq.s32.totalorder %s22, 1
      %p82 = por %p80, %p81
      %p83 = scmp.ne.s32.totalorder %s74, %s75
      %p84 = scmp.eq.s32.totalorder %s22, 0
      %p85 = por %p83, %p84
      %p86 = scmp.ne.s32.totalorder %s74, %s75
      %p87 = scmp.eq.s32.totalorder %s23, 1
      %p88 = por %p86, %p87
      %p90 = scmp.ne.s32.totalorder %s75, %s89
      %p91 = scmp.eq.s32.totalorder %s23, 0
      %p92 = por %p90, %p91
      %s94 = sadd.s32 %s93, 1
      %p97 = scmp.eq.s32.totalorder %s17, 1
      %p98 = scmp.ne.s32.totalorder %s93, %s95
      %p99 = scmp.eq.s32.totalorder %s17, 0
      %p100 = por %p98, %p99
      %p101 = scmp.ne.s32.totalorder %s93, %s95
      %p102 = scmp.eq.s32.totalorder %s22, 1
      %p103 = por %p101, %p102
      %p104 = scmp.ne.s32.totalorder %s95, %s96
      %p105 = scmp.eq.s32.totalorder %s22, 0
      %p106 = por %p104, %p105
      %p107 = scmp.ne.s32.totalorder %s95, %s96
      %p108 = scmp.eq.s32.totalorder %s23, 1
      %p109 = por %p107, %p108
      %p111 = scmp.ne.s32.totalorder %s96, %s110
      %p112 = scmp.eq.s32.totalorder %s23, 0
      %p113 = por %p111, %p112
      %s115 = sadd.s32 %s114, 1
      %p118 = scmp.eq.s32.totalorder %s17, 1
      %p119 = scmp.ne.s32.totalorder %s114, %s116
      %p120 = scmp.eq.s32.totalorder %s17, 0
      %p121 = por %p119, %p120
      %p122 = scmp.ne.s32.totalorder %s114, %s116
      %p123 = scmp.eq.s32.totalorder %s22, 1
      %p124 = por %p122, %p123
      %p125 = scmp.ne.s32.totalorder %s116, %s117
      %p126 = scmp.eq.s32.totalorder %s22, 0
      %p127 = por %p125, %p126
      %p128 = scmp.ne.s32.totalorder %s116, %s117
      %p129 = scmp.eq.s32.totalorder %s23, 1
      %p130 = por %p128, %p129
      %p132 = scmp.ne.s32.totalorder %s117, %s131
      %p133 = scmp.eq.s32.totalorder %s23, 0
      %p134 = por %p132, %p133
      %s136 = sadd.s32 %s135, 1
      %p139 = scmp.eq.s32.totalorder %s17, 1
      %p140 = scmp.ne.s32.totalorder %s135, %s137
      %p141 = scmp.eq.s32.totalorder %s17, 0
      %p142 = por %p140, %p141
      %p143 = scmp.ne.s32.totalorder %s135, %s137
      %p144 = scmp.eq.s32.totalorder %s22, 1
      %p145 = por %p143, %p144
      %p146 = scmp.ne.s32.totalorder %s137, %s138
      %p147 = scmp.eq.s32.totalorder %s22, 0
      %p148 = por %p146, %p147
      %p149 = scmp.ne.s32.totalorder %s137, %s138
      %p150 = scmp.eq.s32.totalorder %s23, 1
      %p151 = por %p149, %p150
      %p153 = scmp.ne.s32.totalorder %s138, %s152
      %p154 = scmp.eq.s32.totalorder %s23, 0
      %p155 = por %p153, %p154
      %s157 = sadd.s32 %s156, 1
      %p160 = scmp.eq.s32.totalorder %s17, 1
      %p161 = scmp.ne.s32.totalorder %s156, %s158
      %p162 = scmp.eq.s32.totalorder %s17, 0
      %p163 = por %p161, %p162
      %p164 = scmp.ne.s32.totalorder %s156, %s158
      %p165 = scmp.eq.s32.totalorder %s22, 1
      %p166 = por %p164, %p165
      %p167 = scmp.ne.s32.totalorder %s158, %s159
      %p168 = scmp.eq.s32.totalorder %s22, 0
      %p169 = por %p167, %p168
      %p170 = scmp.ne.s32.totalorder %s158, %s159
      %p171 = scmp.eq.s32.totalorder %s23, 1
      %p172 = por %p170, %p171
      %p174 = scmp.ne.s32.totalorder %s159, %s173
      %p175 = scmp.eq.s32.totalorder %s23, 0
      %p176 = por %p174, %p175
      %s177 = ssub.s32 %s17, %s24
      %p178 = scmp.eq.s32.totalorder %s177, 0
      %s180 = sadd.s32 %s179, 1
      %s181 = scalar_select %p178, %s179, %s180
      %p184 = pneg %p178
      %p185 = scmp.eq.s32.totalorder %s17, 1
      %p186 = por %p184, %p185
      %p187 = scmp.ne.s32.totalorder %s179, %s182
      %p188 = scmp.eq.s32.totalorder %s17, 0
      %p189 = por %p187, %p188
      %p190 = scmp.ne.s32.totalorder %s179, %s182
      %p191 = scmp.eq.s32.totalorder %s22, 1
      %p192 = por %p190, %p191
      %p193 = scmp.ne.s32.totalorder %s182, %s183
      %p194 = scmp.eq.s32.totalorder %s22, 0
      %p195 = por %p193, %p194
      %p196 = scmp.ne.s32.totalorder %s182, %s183
      %p197 = scmp.eq.s32.totalorder %s23, 1
      %p198 = por %p196, %p197
      %p200 = scmp.ne.s32.totalorder %s183, %s199
      %p201 = scmp.eq.s32.totalorder %s23, 0
      %p202 = por %p200, %p201
      %p203 = scmp.le.s32.totalorder 1, %s17
      %p204 = scmp.lt.s32.totalorder %s17, 3
      %p205 = pnand %p203, %p204
      %p206 = pneg %p205
      // Predicated region
      $region9: #{tpu_custom_call.1} parent=5 // pred_check
        _
      $region10: #{tpu_custom_call.1} parent=5 // pred_check_branch
        %208 = sbr.rel (%p205) target = $region12
      $region11: #{tpu_custom_call.1} parent=5 // pred_region
        %s209 = ssub.s32 %s17, 1
        // Predicated region
        $region13: #{tpu_custom_call.1} parent=11 // pred_check
          %p210 = pneg %p64
        $region14: #{tpu_custom_call.1} parent=11 // pred_check_branch
          %212 = sbr.rel (%p210) target = $region16
        $region15: #{tpu_custom_call.1} parent=11 // pred_region
          _
        $region16: #{tpu_custom_call.1} parent=11 // pred_fallthru
          _
        // Predicated region
        $region17: #{tpu_custom_call.1} parent=11 // pred_check
          %p213 = pneg %p85
        $region18: #{tpu_custom_call.1} parent=11 // pred_check_branch
          %215 = sbr.rel (%p213) target = $region20
        $region19: #{tpu_custom_call.1} parent=11 // pred_region
          _
        $region20: #{tpu_custom_call.1} parent=11 // pred_fallthru
          _
        // Predicated region
        $region21: #{tpu_custom_call.1} parent=11 // pred_check
          %p216 = pneg %p106
        $region22: #{tpu_custom_call.1} parent=11 // pred_check_branch
          %218 = sbr.rel (%p216) target = $region24
        $region23: #{tpu_custom_call.1} parent=11 // pred_region
          _
        $region24: #{tpu_custom_call.1} parent=11 // pred_fallthru
          _
        // Predicated region
        $region25: #{tpu_custom_call.1} parent=11 // pred_check
          %p219 = pneg %p127
        $region26: #{tpu_custom_call.1} parent=11 // pred_check_branch
          %221 = sbr.rel (%p219) target = $region28
        $region27: #{tpu_custom_call.1} parent=11 // pred_region
          _
        $region28: #{tpu_custom_call.1} parent=11 // pred_fallthru
          _
        // Predicated region
        $region29: #{tpu_custom_call.1} parent=11 // pred_check
          %p222 = pneg %p148
        $region30: #{tpu_custom_call.1} parent=11 // pred_check_branch
          %224 = sbr.rel (%p222) target = $region32
        $region31: #{tpu_custom_call.1} parent=11 // pred_region
          _
        $region32: #{tpu_custom_call.1} parent=11 // pred_fallthru
          _
        // Predicated region
        $region33: #{tpu_custom_call.1} parent=11 // pred_check
          %p225 = pneg %p169
        $region34: #{tpu_custom_call.1} parent=11 // pred_check_branch
          %227 = sbr.rel (%p225) target = $region36
        $region35: #{tpu_custom_call.1} parent=11 // pred_region
          _
        $region36: #{tpu_custom_call.1} parent=11 // pred_fallthru
          _
      $region12: #{tpu_custom_call.1} parent=5 // pred_fallthru
        _
      %p228 = scmp.lt.s32.totalorder %s17, 2
      // Predicated region
      $region37: #{tpu_custom_call.1} parent=5 // pred_check
        %p229 = pneg %p228
      $region38: #{tpu_custom_call.1} parent=5 // pred_check_branch
        %231 = sbr.rel (%p229) target = $region40
      $region39: #{tpu_custom_call.1} parent=5 // pred_region
        // Predicated region
        $region41: #{tpu_custom_call.1} parent=39 // pred_check
          %p232 = pneg %p37
        $region42: #{tpu_custom_call.1} parent=39 // pred_check_branch
          %234 = sbr.rel (%p232) target = $region44
        $region43: #{tpu_custom_call.1} parent=39 // pred_region
          %s235 = smul.u32 4, %s17
          %p236 = scmp.lt.s32.totalorder %s235, 7
          %s237 = scalar_select %p236, %s235, 7
          %s238 = smul.addr %s237, 2
          %s239 = scalar_lea.vmem %s0, %s238
          %s240 = smul.u32 4, %s17
        $region44: #{tpu_custom_call.1} parent=39 // pred_fallthru
          _
      $region40: #{tpu_custom_call.1} parent=5 // pred_fallthru
        _
      %p241 = scmp.le.s32.totalorder 1, %s17
      %p242 = scmp.lt.s32.totalorder %s17, 3
      %p243 = pnand %p241, %p242
      %p244 = pneg %p243
      // Predicated region
      $region45: #{tpu_custom_call.1} parent=5 // pred_check
        _
      $region46: #{tpu_custom_call.1} parent=5 // pred_check_branch
        %246 = sbr.rel (%p243) target = $region48
      $region47: #{tpu_custom_call.1} parent=5 // pred_region
        %s247 = ssub.s32 %s17, 1
        %s248 = smul.u32 4, %s22
        %p249 = scmp.lt.s32.totalorder %s248, 7
        %s250 = scalar_select %p249, %s248, 7
        %s251 = smul.addr %s250, 2
        %s252 = scalar_lea.vmem %s0, %s251
        %p253 = pneg %p43
        %p254 = pneg %p40
        %p255 = pneg %p64
        %p256 = pneg %p61
        %p257 = pneg %p85
        %p258 = pneg %p82
        %p259 = pneg %p106
        %p260 = pneg %p103
        %p261 = pneg %p127
        %p262 = pneg %p124
        %p263 = pneg %p148
        %p264 = pneg %p145
        %p265 = pneg %p169
        %p266 = pneg %p166
        %p267 = pneg %p195
        %p268 = pneg %p192
        %s269 = sand.u32 %s182, 1
        %s270 = scalar_lea.sflag [#allocation4], %s269
        %s271 = sand.u32 %s182, 1
        %s272 = smul.addr %s271, 4
        %s273 = scalar_lea.vmem [#allocation3], %s272
        %s274 = smul.u32 4, %s22
        %p275 = scmp.lt.s32.totalorder %s274, 7
        %s276 = scalar_select %p275, %s274, 7
        %s277 = smul.addr %s276, 2
        %s278 = scalar_lea.vmem %s0, %s277
        %s279 = smul.u32 4, %s22
        %s280 = smul.u32 4, %s22
        %v281 = vld [vmem:[%s278] sm:$0xff]
        %v282 = vld [vmem:[%s1] sm:$0xff]
        %v283 = vld [vmem:[%s1 + $0x8] sm:$0xff]
        %v284 = vld [vmem:[%s1 + $0x10] sm:$0xff]
        %v285 = vld [vmem:[%s1 + $0x18] sm:$0xff]
        %287 = vset.pattern.permute.xlu0 0
        %288 = vperm.xlu0 %287, %v282
        %v289 = vpop.permute.xlu0 %288
        %292 = vset.pattern.permute.xlu0 0
        %293 = vperm.xlu0 %292, %v283
        %v294 = vpop.permute.xlu0 %293
        %297 = vset.pattern.permute.xlu0 0
        %298 = vperm.xlu0 %297, %v284
        %v299 = vpop.permute.xlu0 %298
        %302 = vset.pattern.permute.xlu0 0
        %303 = vperm.xlu0 %302, %v285
        %v304 = vpop.permute.xlu0 %303
        %v307 = vlaneseq
        %v308 = vshrl.u32 %v307, 7
        %v309 = vsub.s32 0, %v308
        %v310 = vrot.slane %v281, %v309
        %v311 = vlaneseq
        %v312 = vshrl.u32 %v311, 7
        %v313 = vsub.s32 2, %v312
        %v314 = vrot.slane %v281, %v313
        %v315 = vlaneseq
        %v316 = vshrl.u32 %v315, 7
        %v317 = vsub.s32 4, %v316
        %v318 = vrot.slane %v281, %v317
        %v319 = vlaneseq
        %v320 = vshrl.u32 %v319, 7
        %v321 = vsub.s32 6, %v320
        %v322 = vrot.slane %v281, %v321
        %v327 = vlaneseq
        %v328 = vshrl.u32 %v327, 7
        %v329 = vsub.s32 0, %v328
        %v330 = vrot.slane %v310, %v329
        %v331 = vlaneseq
        %v332 = vshrl.u32 %v331, 7
        %v333 = vsub.s32 0, %v332
        %v334 = vrot.slane %v314, %v333
        %v335 = vlaneseq
        %v336 = vshrl.u32 %v335, 7
        %v337 = vsub.s32 0, %v336
        %v338 = vrot.slane %v318, %v337
        %v339 = vlaneseq
        %v340 = vshrl.u32 %v339, 7
        %v341 = vsub.s32 0, %v340
        %v342 = vrot.slane %v322, %v341
        %v343 = vmul.f32 %v289, %v330
        %v344 = vmul.f32 %v289, %v334
        %v345 = vmul.f32 %v289, %v338
        %v346 = vmul.f32 %v289, %v342
        %v347 = vmul.f32 %v294, %v330
        %v348 = vmul.f32 %v294, %v334
        %v349 = vmul.f32 %v294, %v338
        %v350 = vmul.f32 %v294, %v342
        %v351 = vmul.f32 %v299, %v330
        %v352 = vmul.f32 %v299, %v334
        %v353 = vmul.f32 %v299, %v338
        %v354 = vmul.f32 %v299, %v342
        %v355 = vmul.f32 %v304, %v330
        %v356 = vmul.f32 %v304, %v334
        %v357 = vmul.f32 %v304, %v338
        %v358 = vmul.f32 %v304, %v342
        %359 = vset.pattern.permute.xlu0 1
        %360 = vperm.xlu0 %359, %v282
        %v361 = vpop.permute.xlu0 %360
        %363 = vset.pattern.permute.xlu0 1
        %364 = vperm.xlu0 %363, %v283
        %v365 = vpop.permute.xlu0 %364
        %367 = vset.pattern.permute.xlu0 1
        %368 = vperm.xlu0 %367, %v284
        %v369 = vpop.permute.xlu0 %368
        %371 = vset.pattern.permute.xlu0 1
        %372 = vperm.xlu0 %371, %v285
        %v373 = vpop.permute.xlu0 %372
        %v375 = vlaneseq
        %v376 = vshrl.u32 %v375, 7
        %v377 = vsub.s32 1, %v376
        %v378 = vrot.slane %v281, %v377
        %v379 = vlaneseq
        %v380 = vshrl.u32 %v379, 7
        %v381 = vsub.s32 3, %v380
        %v382 = vrot.slane %v281, %v381
        %v383 = vlaneseq
        %v384 = vshrl.u32 %v383, 7
        %v385 = vsub.s32 5, %v384
        %v386 = vrot.slane %v281, %v385
        %v387 = vlaneseq
        %v388 = vshrl.u32 %v387, 7
        %v389 = vsub.s32 7, %v388
        %v390 = vrot.slane %v281, %v389
        %v395 = vlaneseq
        %v396 = vshrl.u32 %v395, 7
        %v397 = vsub.s32 1, %v396
        %v398 = vrot.slane %v378, %v397
        %v399 = vlaneseq
        %v400 = vshrl.u32 %v399, 7
        %v401 = vsub.s32 1, %v400
        %v402 = vrot.slane %v382, %v401
        %v403 = vlaneseq
        %v404 = vshrl.u32 %v403, 7
        %v405 = vsub.s32 1, %v404
        %v406 = vrot.slane %v386, %v405
        %v407 = vlaneseq
        %v408 = vshrl.u32 %v407, 7
        %v409 = vsub.s32 1, %v408
        %v410 = vrot.slane %v390, %v409
        %v411 = vmul.f32 %v361, %v398
        %v412 = vmul.f32 %v361, %v402
        %v413 = vmul.f32 %v361, %v406
        %v414 = vmul.f32 %v361, %v410
        %v415 = vmul.f32 %v365, %v398
        %v416 = vmul.f32 %v365, %v402
        %v417 = vmul.f32 %v365, %v406
        %v418 = vmul.f32 %v365, %v410
        %v419 = vmul.f32 %v369, %v398
        %v420 = vmul.f32 %v369, %v402
        %v421 = vmul.f32 %v369, %v406
        %v422 = vmul.f32 %v369, %v410
        %v423 = vmul.f32 %v373, %v398
        %v424 = vmul.f32 %v373, %v402
        %v425 = vmul.f32 %v373, %v406
        %v426 = vmul.f32 %v373, %v410
        %v427 = vadd.f32 %v343, %v411
        %v428 = vadd.f32 %v344, %v412
        %v429 = vadd.f32 %v345, %v413
        %v430 = vadd.f32 %v346, %v414
        %v431 = vadd.f32 %v347, %v415
        %v432 = vadd.f32 %v348, %v416
        %v433 = vadd.f32 %v349, %v417
        %v434 = vadd.f32 %v350, %v418
        %v435 = vadd.f32 %v351, %v419
        %v436 = vadd.f32 %v352, %v420
        %v437 = vadd.f32 %v353, %v421
        %v438 = vadd.f32 %v354, %v422
        %v439 = vadd.f32 %v355, %v423
        %v440 = vadd.f32 %v356, %v424
        %v441 = vadd.f32 %v357, %v425
        %v442 = vadd.f32 %v358, %v426
        %v443 = vld [vmem:[%s2] sm:$0xff]
        %v444 = vld [vmem:[%s2 + $0x8] sm:$0xff]
        %v445 = vld [vmem:[%s2 + $0x10] sm:$0xff]
        %v446 = vld [vmem:[%s2 + $0x18] sm:$0xff]
        %448 = vset.pattern.permute.xlu0 0
        %449 = vperm.xlu0 %448, %v443
        %v450 = vpop.permute.xlu0 %449
        %453 = vset.pattern.permute.xlu0 0
        %454 = vperm.xlu0 %453, %v444
        %v455 = vpop.permute.xlu0 %454
        %458 = vset.pattern.permute.xlu0 0
        %459 = vperm.xlu0 %458, %v445
        %v460 = vpop.permute.xlu0 %459
        %463 = vset.pattern.permute.xlu0 0
        %464 = vperm.xlu0 %463, %v446
        %v465 = vpop.permute.xlu0 %464
        %v467 = vadd.f32 %v427, %v450
        %v468 = vadd.f32 %v428, %v450
        %v469 = vadd.f32 %v429, %v450
        %v470 = vadd.f32 %v430, %v450
        %v471 = vadd.f32 %v431, %v455
        %v472 = vadd.f32 %v432, %v455
        %v473 = vadd.f32 %v433, %v455
        %v474 = vadd.f32 %v434, %v455
        %v475 = vadd.f32 %v435, %v460
        %v476 = vadd.f32 %v436, %v460
        %v477 = vadd.f32 %v437, %v460
        %v478 = vadd.f32 %v438, %v460
        %v479 = vadd.f32 %v439, %v465
        %v480 = vadd.f32 %v440, %v465
        %v481 = vadd.f32 %v441, %v465
        %v482 = vadd.f32 %v442, %v465
        %v483 = vand.u32 2147483647, %v467
        %vm484 = vcmp.le.f32.partialorder %v483, 0.7853982
        %vm485 = vcmp.lt.s32.totalorder %v467, 0
        %v486 = vand.u32 %v467, 2139095040
        %v487 = vshrl.u32 %v486, 23
        %v488 = vsub.s32 %v487, 127
        %v489 = vand.u32 2147483647, %v467
        %v490 = vand.u32 %v489, 8388607
        %v491 = vor.u32 %v490, 8388608
        %v492 = vsub.s32 0, %v491
        %v493 = vadd.s32 %v488, 1
        %vm494 = vcmp.gt.s32.totalorder %v493, 0
        %v495 = vsel %vm494, %v493, 0
        %v496 = vshrl.u32 %v495, 5
        %v497 = vand.u32 %v495, 31
        %v498 = vsub.s32 32, %v497
        %v499 = vshrl.u32 683565275, %v498
        %v500 = vshll.u32 683565275, %v497
        %v501 = vshrl.u32 2475754826, %v498
        %v502 = vor.u32 %v500, %v501
        %v503 = vshll.u32 2475754826, %v497
        %v504 = vshrl.u32 2131351028, %v498
        %v505 = vor.u32 %v503, %v504
        %v506 = vshll.u32 2131351028, %v497
        %v507 = vshrl.u32 2102212464, %v498
        %v508 = vor.u32 %v506, %v507
        %v509 = vshll.u32 2102212464, %v497
        %v510 = vshrl.u32 920167782, %v498
        %v511 = vor.u32 %v509, %v510
        %v512 = vshll.u32 920167782, %v497
        %v513 = vshrl.u32 1326507024, %v498
        %v514 = vor.u32 %v512, %v513
        %vm515 = vcmp.lt.s32.totalorder %v496, 1
        %vm516 = vcmp.lt.s32.totalorder %v496, 2
        %vm517 = vcmp.lt.s32.totalorder %v496, 3
        %vm518 = vcmp.lt.s32.totalorder %v496, 4
        %v519 = vsel %vm515, %v499, %v502
        %v520 = vsel %vm518, %v508, 2102212464
        %v521 = vsel %vm517, %v505, %v520
        %v522 = vsel %vm516, %v519, %v521
        %v523 = vsel %vm515, %v502, %v505
        %v524 = vsel %vm518, %v511, 920167782
        %v525 = vsel %vm517, %v508, %v524
        %v526 = vsel %vm516, %v523, %v525
        %v527 = vsel %vm515, %v505, %v508
        %v528 = vsel %vm518, %v514, 1326507024
        %v529 = vsel %vm517, %v511, %v528
        %v530 = vsel %vm516, %v527, %v529
        %v531 = vshll.u32 %v491, 8
        %v532 = vmul.u32.u64.compose %v531, %v530
        %v533 = vextract.low.u32 %v532
        %v534 = vextract.high.u32 %v532
        %v535 = vmul.u32.u64.compose %v531, %v526
        %v536 = vextract.low.u32 %v535
        %v537 = vextract.high.u32 %v535
        %v538 = vmul.u32 %v531, %v522
        %v539 = vadd.s32 %v534, %v536
        %vm540 = vc.u32 %v534, %v536
        %v541 = vadd.s32 %v537, 1
        %v542 = vsel %vm540, %v541, %v537
        %v543 = vadd.s32 %v538, %v542
        %v544 = vadd.s32 %v543, 536870912
        %v545 = vshrl.u32 %v544, 30
        %v546 = vshll.u32 %v545, 30
        %v547 = vsub.s32 %v543, %v546
        %vm548 = vcmp.lt.s32.totalorder %v547, 0
        %v549 = vsub.s32 0, %v547
        %v550 = vsel %vm548, %v549, %v547
        %v551 = vclz %v550
        %v552 = vsub.s32 %v551, 2
        %vm553 = vcmp.gt.s32.totalorder 0, %v552
        %v554 = vsel %vm553, 0, %v552
        %v555 = vsub.s32 32, %v554
        %v556 = vshll.u32 %v547, %v554
        %v557 = vshrl.u32 %v539, %v555
        %v558 = vor.u32 %v556, %v557
        %v559 = vsub.s32 4294967266, %v554
        %v560 = vadd.s32 %v559, 127
        %v561 = vshll.u32 %v560, 23
        %v562 = vor.u32 4788187, %v561
        %v563 = vand.u32 2147483647, %v562
        %v565 = vcvt.s32.f32 %v558
        %v566 = vmul.f32 %v565, %v563
        %v567 = vxor.u32 %v566, 2147483648
        %v568 = vsel %vm485, %v567, %v566
        %v569 = vsub.s32 4, %v545
        %v570 = vsel %vm485, %v569, %v545
        %v571 = vsel %vm484, %v467, %v568
        %v572 = vsel %vm484, 0, %v570
        %v573 = vcosq.f32.pop %v571
        %v574 = vsinq.f32.pop %v571
        %vm575 = vweird.f32 %v467
        %v576 = vadd.s32 %v572, 3
        %v577 = vand.u32 %v576, 3
        %vm578 = vcmp.lt.s32.totalorder %v577, 2
        %vm579 = vcmp.eq.s32.totalorder %v577, 0
        %v580 = vxor.u32 %v574, 2147483648
        %v581 = vsel %vm579, %v573, %v580
        %vm582 = vcmp.eq.s32.totalorder %v577, 2
        %v583 = vxor.u32 %v573, 2147483648
        %v584 = vsel %vm582, %v583, %v574
        %v585 = vsel %vm578, %v581, %v584
        %v586 = vsel %vm575, nan, %v585
        %v587 = vand.u32 2147483647, %v468
        %vm588 = vcmp.le.f32.partialorder %v587, 0.7853982
        %vm589 = vcmp.lt.s32.totalorder %v468, 0
        %v590 = vand.u32 %v468, 2139095040
        %v591 = vshrl.u32 %v590, 23
        %v592 = vsub.s32 %v591, 127
        %v593 = vand.u32 2147483647, %v468
        %v594 = vand.u32 %v593, 8388607
        %v595 = vor.u32 %v594, 8388608
        %v596 = vsub.s32 0, %v595
        %v597 = vadd.s32 %v592, 1
        %vm598 = vcmp.gt.s32.totalorder %v597, 0
        %v599 = vsel %vm598, %v597, 0
        %v600 = vshrl.u32 %v599, 5
        %v601 = vand.u32 %v599, 31
        %v602 = vsub.s32 32, %v601
        %v603 = vshrl.u32 683565275, %v602
        %v604 = vshll.u32 683565275, %v601
        %v605 = vshrl.u32 2475754826, %v602
        %v606 = vor.u32 %v604, %v605
        %v607 = vshll.u32 2475754826, %v601
        %v608 = vshrl.u32 2131351028, %v602
        %v609 = vor.u32 %v607, %v608
        %v610 = vshll.u32 2131351028, %v601
        %v611 = vshrl.u32 2102212464, %v602
        %v612 = vor.u32 %v610, %v611
        %v613 = vshll.u32 2102212464, %v601
        %v614 = vshrl.u32 920167782, %v602
        %v615 = vor.u32 %v613, %v614
        %v616 = vshll.u32 920167782, %v601
        %v617 = vshrl.u32 1326507024, %v602
        %v618 = vor.u32 %v616, %v617
        %vm619 = vcmp.lt.s32.totalorder %v600, 1
        %vm620 = vcmp.lt.s32.totalorder %v600, 2
        %vm621 = vcmp.lt.s32.totalorder %v600, 3
        %vm622 = vcmp.lt.s32.totalorder %v600, 4
        %v623 = vsel %vm619, %v603, %v606
        %v624 = vsel %vm622, %v612, 2102212464
        %v625 = vsel %vm621, %v609, %v624
        %v626 = vsel %vm620, %v623, %v625
        %v627 = vsel %vm619, %v606, %v609
        %v628 = vsel %vm622, %v615, 920167782
        %v629 = vsel %vm621, %v612, %v628
        %v630 = vsel %vm620, %v627, %v629
        %v631 = vsel %vm619, %v609, %v612
        %v632 = vsel %vm622, %v618, 1326507024
        %v633 = vsel %vm621, %v615, %v632
        %v634 = vsel %vm620, %v631, %v633
        %v635 = vshll.u32 %v595, 8
        %v636 = vmul.u32.u64.compose %v635, %v634
        %v637 = vextract.low.u32 %v636
        %v638 = vextract.high.u32 %v636
        %v639 = vmul.u32.u64.compose %v635, %v630
        %v640 = vextract.low.u32 %v639
        %v641 = vextract.high.u32 %v639
        %v642 = vmul.u32 %v635, %v626
        %v643 = vadd.s32 %v638, %v640
        %vm644 = vc.u32 %v638, %v640
        %v645 = vadd.s32 %v641, 1
        %v646 = vsel %vm644, %v645, %v641
        %v647 = vadd.s32 %v642, %v646
        %v648 = vadd.s32 %v647, 536870912
        %v649 = vshrl.u32 %v648, 30
        %v650 = vshll.u32 %v649, 30
        %v651 = vsub.s32 %v647, %v650
        %vm652 = vcmp.lt.s32.totalorder %v651, 0
        %v653 = vsub.s32 0, %v651
        %v654 = vsel %vm652, %v653, %v651
        %v655 = vclz %v654
        %v656 = vsub.s32 %v655, 2
        %vm657 = vcmp.gt.s32.totalorder 0, %v656
        %v658 = vsel %vm657, 0, %v656
        %v659 = vsub.s32 32, %v658
        %v660 = vshll.u32 %v651, %v658
        %v661 = vshrl.u32 %v643, %v659
        %v662 = vor.u32 %v660, %v661
        %v663 = vsub.s32 4294967266, %v658
        %v664 = vadd.s32 %v663, 127
        %v665 = vshll.u32 %v664, 23
        %v666 = vor.u32 4788187, %v665
        %v667 = vand.u32 2147483647, %v666
        %v669 = vcvt.s32.f32 %v662
        %v670 = vmul.f32 %v669, %v667
        %v671 = vxor.u32 %v670, 2147483648
        %v672 = vsel %vm589, %v671, %v670
        %v673 = vsub.s32 4, %v649
        %v674 = vsel %vm589, %v673, %v649
        %v675 = vsel %vm588, %v468, %v672
        %v676 = vsel %vm588, 0, %v674
        %v677 = vcosq.f32.pop %v675
        %v678 = vsinq.f32.pop %v675
        %vm679 = vweird.f32 %v468
        %v680 = vadd.s32 %v676, 3
        %v681 = vand.u32 %v680, 3
        %vm682 = vcmp.lt.s32.totalorder %v681, 2
        %vm683 = vcmp.eq.s32.totalorder %v681, 0
        %v684 = vxor.u32 %v678, 2147483648
        %v685 = vsel %vm683, %v677, %v684
        %vm686 = vcmp.eq.s32.totalorder %v681, 2
        %v687 = vxor.u32 %v677, 2147483648
        %v688 = vsel %vm686, %v687, %v678
        %v689 = vsel %vm682, %v685, %v688
        %v690 = vsel %vm679, nan, %v689
        %v691 = vand.u32 2147483647, %v469
        %vm692 = vcmp.le.f32.partialorder %v691, 0.7853982
        %vm693 = vcmp.lt.s32.totalorder %v469, 0
        %v694 = vand.u32 %v469, 2139095040
        %v695 = vshrl.u32 %v694, 23
        %v696 = vsub.s32 %v695, 127
        %v697 = vand.u32 2147483647, %v469
        %v698 = vand.u32 %v697, 8388607
        %v699 = vor.u32 %v698, 8388608
        %v700 = vsub.s32 0, %v699
        %v701 = vadd.s32 %v696, 1
        %vm702 = vcmp.gt.s32.totalorder %v701, 0
        %v703 = vsel %vm702, %v701, 0
        %v704 = vshrl.u32 %v703, 5
        %v705 = vand.u32 %v703, 31
        %v706 = vsub.s32 32, %v705
        %v707 = vshrl.u32 683565275, %v706
        %v708 = vshll.u32 683565275, %v705
        %v709 = vshrl.u32 2475754826, %v706
        %v710 = vor.u32 %v708, %v709
        %v711 = vshll.u32 2475754826, %v705
        %v712 = vshrl.u32 2131351028, %v706
        %v713 = vor.u32 %v711, %v712
        %v714 = vshll.u32 2131351028, %v705
        %v715 = vshrl.u32 2102212464, %v706
        %v716 = vor.u32 %v714, %v715
        %v717 = vshll.u32 2102212464, %v705
        %v718 = vshrl.u32 920167782, %v706
        %v719 = vor.u32 %v717, %v718
        %v720 = vshll.u32 920167782, %v705
        %v721 = vshrl.u32 1326507024, %v706
        %v722 = vor.u32 %v720, %v721
        %vm723 = vcmp.lt.s32.totalorder %v704, 1
        %vm724 = vcmp.lt.s32.totalorder %v704, 2
        %vm725 = vcmp.lt.s32.totalorder %v704, 3
        %vm726 = vcmp.lt.s32.totalorder %v704, 4
        %v727 = vsel %vm723, %v707, %v710
        %v728 = vsel %vm726, %v716, 2102212464
        %v729 = vsel %vm725, %v713, %v728
        %v730 = vsel %vm724, %v727, %v729
        %v731 = vsel %vm723, %v710, %v713
        %v732 = vsel %vm726, %v719, 920167782
        %v733 = vsel %vm725, %v716, %v732
        %v734 = vsel %vm724, %v731, %v733
        %v735 = vsel %vm723, %v713, %v716
        %v736 = vsel %vm726, %v722, 1326507024
        %v737 = vsel %vm725, %v719, %v736
        %v738 = vsel %vm724, %v735, %v737
        %v739 = vshll.u32 %v699, 8
        %v740 = vmul.u32.u64.compose %v739, %v738
        %v741 = vextract.low.u32 %v740
        %v742 = vextract.high.u32 %v740
        %v743 = vmul.u32.u64.compose %v739, %v734
        %v744 = vextract.low.u32 %v743
        %v745 = vextract.high.u32 %v743
        %v746 = vmul.u32 %v739, %v730
        %v747 = vadd.s32 %v742, %v744
        %vm748 = vc.u32 %v742, %v744
        %v749 = vadd.s32 %v745, 1
        %v750 = vsel %vm748, %v749, %v745
        %v751 = vadd.s32 %v746, %v750
        %v752 = vadd.s32 %v751, 536870912
        %v753 = vshrl.u32 %v752, 30
        %v754 = vshll.u32 %v753, 30
        %v755 = vsub.s32 %v751, %v754
        %vm756 = vcmp.lt.s32.totalorder %v755, 0
        %v757 = vsub.s32 0, %v755
        %v758 = vsel %vm756, %v757, %v755
        %v759 = vclz %v758
        %v760 = vsub.s32 %v759, 2
        %vm761 = vcmp.gt.s32.totalorder 0, %v760
        %v762 = vsel %vm761, 0, %v760
        %v763 = vsub.s32 32, %v762
        %v764 = vshll.u32 %v755, %v762
        %v765 = vshrl.u32 %v747, %v763
        %v766 = vor.u32 %v764, %v765
        %v767 = vsub.s32 4294967266, %v762
        %v768 = vadd.s32 %v767, 127
        %v769 = vshll.u32 %v768, 23
        %v770 = vor.u32 4788187, %v769
        %v771 = vand.u32 2147483647, %v770
        %v773 = vcvt.s32.f32 %v766
        %v774 = vmul.f32 %v773, %v771
        %v775 = vxor.u32 %v774, 2147483648
        %v776 = vsel %vm693, %v775, %v774
        %v777 = vsub.s32 4, %v753
        %v778 = vsel %vm693, %v777, %v753
        %v779 = vsel %vm692, %v469, %v776
        %v780 = vsel %vm692, 0, %v778
        %v781 = vcosq.f32.pop %v779
        %v782 = vsinq.f32.pop %v779
        %vm783 = vweird.f32 %v469
        %v784 = vadd.s32 %v780, 3
        %v785 = vand.u32 %v784, 3
        %vm786 = vcmp.lt.s32.totalorder %v785, 2
        %vm787 = vcmp.eq.s32.totalorder %v785, 0
        %v788 = vxor.u32 %v782, 2147483648
        %v789 = vsel %vm787, %v781, %v788
        %vm790 = vcmp.eq.s32.totalorder %v785, 2
        %v791 = vxor.u32 %v781, 2147483648
        %v792 = vsel %vm790, %v791, %v782
        %v793 = vsel %vm786, %v789, %v792
        %v794 = vsel %vm783, nan, %v793
        %v795 = vand.u32 2147483647, %v470
        %vm796 = vcmp.le.f32.partialorder %v795, 0.7853982
        %vm797 = vcmp.lt.s32.totalorder %v470, 0
        %v798 = vand.u32 %v470, 2139095040
        %v799 = vshrl.u32 %v798, 23
        %v800 = vsub.s32 %v799, 127
        %v801 = vand.u32 2147483647, %v470
        %v802 = vand.u32 %v801, 8388607
        %v803 = vor.u32 %v802, 8388608
        %v804 = vsub.s32 0, %v803
        %v805 = vadd.s32 %v800, 1
        %vm806 = vcmp.gt.s32.totalorder %v805, 0
        %v807 = vsel %vm806, %v805, 0
        %v808 = vshrl.u32 %v807, 5
        %v809 = vand.u32 %v807, 31
        %v810 = vsub.s32 32, %v809
        %v811 = vshrl.u32 683565275, %v810
        %v812 = vshll.u32 683565275, %v809
        %v813 = vshrl.u32 2475754826, %v810
        %v814 = vor.u32 %v812, %v813
        %v815 = vshll.u32 2475754826, %v809
        %v816 = vshrl.u32 2131351028, %v810
        %v817 = vor.u32 %v815, %v816
        %v818 = vshll.u32 2131351028, %v809
        %v819 = vshrl.u32 2102212464, %v810
        %v820 = vor.u32 %v818, %v819
        %v821 = vshll.u32 2102212464, %v809
        %v822 = vshrl.u32 920167782, %v810
        %v823 = vor.u32 %v821, %v822
        %v824 = vshll.u32 920167782, %v809
        %v825 = vshrl.u32 1326507024, %v810
        %v826 = vor.u32 %v824, %v825
        %vm827 = vcmp.lt.s32.totalorder %v808, 1
        %vm828 = vcmp.lt.s32.totalorder %v808, 2
        %vm829 = vcmp.lt.s32.totalorder %v808, 3
        %vm830 = vcmp.lt.s32.totalorder %v808, 4
        %v831 = vsel %vm827, %v811, %v814
        %v832 = vsel %vm830, %v820, 2102212464
        %v833 = vsel %vm829, %v817, %v832
        %v834 = vsel %vm828, %v831, %v833
        %v835 = vsel %vm827, %v814, %v817
        %v836 = vsel %vm830, %v823, 920167782
        %v837 = vsel %vm829, %v820, %v836
        %v838 = vsel %vm828, %v835, %v837
        %v839 = vsel %vm827, %v817, %v820
        %v840 = vsel %vm830, %v826, 1326507024
        %v841 = vsel %vm829, %v823, %v840
        %v842 = vsel %vm828, %v839, %v841
        %v843 = vshll.u32 %v803, 8
        %v844 = vmul.u32.u64.compose %v843, %v842
        %v845 = vextract.low.u32 %v844
        %v846 = vextract.high.u32 %v844
        %v847 = vmul.u32.u64.compose %v843, %v838
        %v848 = vextract.low.u32 %v847
        %v849 = vextract.high.u32 %v847
        %v850 = vmul.u32 %v843, %v834
        %v851 = vadd.s32 %v846, %v848
        %vm852 = vc.u32 %v846, %v848
        %v853 = vadd.s32 %v849, 1
        %v854 = vsel %vm852, %v853, %v849
        %v855 = vadd.s32 %v850, %v854
        %v856 = vadd.s32 %v855, 536870912
        %v857 = vshrl.u32 %v856, 30
        %v858 = vshll.u32 %v857, 30
        %v859 = vsub.s32 %v855, %v858
        %vm860 = vcmp.lt.s32.totalorder %v859, 0
        %v861 = vsub.s32 0, %v859
        %v862 = vsel %vm860, %v861, %v859
        %v863 = vclz %v862
        %v864 = vsub.s32 %v863, 2
        %vm865 = vcmp.gt.s32.totalorder 0, %v864
        %v866 = vsel %vm865, 0, %v864
        %v867 = vsub.s32 32, %v866
        %v868 = vshll.u32 %v859, %v866
        %v869 = vshrl.u32 %v851, %v867
        %v870 = vor.u32 %v868, %v869
        %v871 = vsub.s32 4294967266, %v866
        %v872 = vadd.s32 %v871, 127
        %v873 = vshll.u32 %v872, 23
        %v874 = vor.u32 4788187, %v873
        %v875 = vand.u32 2147483647, %v874
        %v877 = vcvt.s32.f32 %v870
        %v878 = vmul.f32 %v877, %v875
        %v879 = vxor.u32 %v878, 2147483648
        %v880 = vsel %vm797, %v879, %v878
        %v881 = vsub.s32 4, %v857
        %v882 = vsel %vm797, %v881, %v857
        %v883 = vsel %vm796, %v470, %v880
        %v884 = vsel %vm796, 0, %v882
        %v885 = vcosq.f32.pop %v883
        %v886 = vsinq.f32.pop %v883
        %vm887 = vweird.f32 %v470
        %v888 = vadd.s32 %v884, 3
        %v889 = vand.u32 %v888, 3
        %vm890 = vcmp.lt.s32.totalorder %v889, 2
        %vm891 = vcmp.eq.s32.totalorder %v889, 0
        %v892 = vxor.u32 %v886, 2147483648
        %v893 = vsel %vm891, %v885, %v892
        %vm894 = vcmp.eq.s32.totalorder %v889, 2
        %v895 = vxor.u32 %v885, 2147483648
        %v896 = vsel %vm894, %v895, %v886
        %v897 = vsel %vm890, %v893, %v896
        %v898 = vsel %vm887, nan, %v897
        %v899 = vand.u32 2147483647, %v471
        %vm900 = vcmp.le.f32.partialorder %v899, 0.7853982
        %vm901 = vcmp.lt.s32.totalorder %v471, 0
        %v902 = vand.u32 %v471, 2139095040
        %v903 = vshrl.u32 %v902, 23
        %v904 = vsub.s32 %v903, 127
        %v905 = vand.u32 2147483647, %v471
        %v906 = vand.u32 %v905, 8388607
        %v907 = vor.u32 %v906, 8388608
        %v908 = vsub.s32 0, %v907
        %v909 = vadd.s32 %v904, 1
        %vm910 = vcmp.gt.s32.totalorder %v909, 0
        %v911 = vsel %vm910, %v909, 0
        %v912 = vshrl.u32 %v911, 5
        %v913 = vand.u32 %v911, 31
        %v914 = vsub.s32 32, %v913
        %v915 = vshrl.u32 683565275, %v914
        %v916 = vshll.u32 683565275, %v913
        %v917 = vshrl.u32 2475754826, %v914
        %v918 = vor.u32 %v916, %v917
        %v919 = vshll.u32 2475754826, %v913
        %v920 = vshrl.u32 2131351028, %v914
        %v921 = vor.u32 %v919, %v920
        %v922 = vshll.u32 2131351028, %v913
        %v923 = vshrl.u32 2102212464, %v914
        %v924 = vor.u32 %v922, %v923
        %v925 = vshll.u32 2102212464, %v913
        %v926 = vshrl.u32 920167782, %v914
        %v927 = vor.u32 %v925, %v926
        %v928 = vshll.u32 920167782, %v913
        %v929 = vshrl.u32 1326507024, %v914
        %v930 = vor.u32 %v928, %v929
        %vm931 = vcmp.lt.s32.totalorder %v912, 1
        %vm932 = vcmp.lt.s32.totalorder %v912, 2
        %vm933 = vcmp.lt.s32.totalorder %v912, 3
        %vm934 = vcmp.lt.s32.totalorder %v912, 4
        %v935 = vsel %vm931, %v915, %v918
        %v936 = vsel %vm934, %v924, 2102212464
        %v937 = vsel %vm933, %v921, %v936
        %v938 = vsel %vm932, %v935, %v937
        %v939 = vsel %vm931, %v918, %v921
        %v940 = vsel %vm934, %v927, 920167782
        %v941 = vsel %vm933, %v924, %v940
        %v942 = vsel %vm932, %v939, %v941
        %v943 = vsel %vm931, %v921, %v924
        %v944 = vsel %vm934, %v930, 1326507024
        %v945 = vsel %vm933, %v927, %v944
        %v946 = vsel %vm932, %v943, %v945
        %v947 = vshll.u32 %v907, 8
        %v948 = vmul.u32.u64.compose %v947, %v946
        %v949 = vextract.low.u32 %v948
        %v950 = vextract.high.u32 %v948
        %v951 = vmul.u32.u64.compose %v947, %v942
        %v952 = vextract.low.u32 %v951
        %v953 = vextract.high.u32 %v951
        %v954 = vmul.u32 %v947, %v938
        %v955 = vadd.s32 %v950, %v952
        %vm956 = vc.u32 %v950, %v952
        %v957 = vadd.s32 %v953, 1
        %v958 = vsel %vm956, %v957, %v953
        %v959 = vadd.s32 %v954, %v958
        %v960 = vadd.s32 %v959, 536870912
        %v961 = vshrl.u32 %v960, 30
        %v962 = vshll.u32 %v961, 30
        %v963 = vsub.s32 %v959, %v962
        %vm964 = vcmp.lt.s32.totalorder %v963, 0
        %v965 = vsub.s32 0, %v963
        %v966 = vsel %vm964, %v965, %v963
        %v967 = vclz %v966
        %v968 = vsub.s32 %v967, 2
        %vm969 = vcmp.gt.s32.totalorder 0, %v968
        %v970 = vsel %vm969, 0, %v968
        %v971 = vsub.s32 32, %v970
        %v972 = vshll.u32 %v963, %v970
        %v973 = vshrl.u32 %v955, %v971
        %v974 = vor.u32 %v972, %v973
        %v975 = vsub.s32 4294967266, %v970
        %v976 = vadd.s32 %v975, 127
        %v977 = vshll.u32 %v976, 23
        %v978 = vor.u32 4788187, %v977
        %v979 = vand.u32 2147483647, %v978
        %v981 = vcvt.s32.f32 %v974
        %v982 = vmul.f32 %v981, %v979
        %v983 = vxor.u32 %v982, 2147483648
        %v984 = vsel %vm901, %v983, %v982
        %v985 = vsub.s32 4, %v961
        %v986 = vsel %vm901, %v985, %v961
        %v987 = vsel %vm900, %v471, %v984
        %v988 = vsel %vm900, 0, %v986
        %v989 = vcosq.f32.pop %v987
        %v990 = vsinq.f32.pop %v987
        %vm991 = vweird.f32 %v471
        %v992 = vadd.s32 %v988, 3
        %v993 = vand.u32 %v992, 3
        %vm994 = vcmp.lt.s32.totalorder %v993, 2
        %vm995 = vcmp.eq.s32.totalorder %v993, 0
        %v996 = vxor.u32 %v990, 2147483648
        %v997 = vsel %vm995, %v989, %v996
        %vm998 = vcmp.eq.s32.totalorder %v993, 2
        %v999 = vxor.u32 %v989, 2147483648
        %v1000 = vsel %vm998, %v999, %v990
        %v1001 = vsel %vm994, %v997, %v1000
        %v1002 = vsel %vm991, nan, %v1001
        %v1003 = vand.u32 2147483647, %v472
        %vm1004 = vcmp.le.f32.partialorder %v1003, 0.7853982
        %vm1005 = vcmp.lt.s32.totalorder %v472, 0
        %v1006 = vand.u32 %v472, 2139095040
        %v1007 = vshrl.u32 %v1006, 23
        %v1008 = vsub.s32 %v1007, 127
        %v1009 = vand.u32 2147483647, %v472
        %v1010 = vand.u32 %v1009, 8388607
        %v1011 = vor.u32 %v1010, 8388608
        %v1012 = vsub.s32 0, %v1011
        %v1013 = vadd.s32 %v1008, 1
        %vm1014 = vcmp.gt.s32.totalorder %v1013, 0
        %v1015 = vsel %vm1014, %v1013, 0
        %v1016 = vshrl.u32 %v1015, 5
        %v1017 = vand.u32 %v1015, 31
        %v1018 = vsub.s32 32, %v1017
        %v1019 = vshrl.u32 683565275, %v1018
        %v1020 = vshll.u32 683565275, %v1017
        %v1021 = vshrl.u32 2475754826, %v1018
        %v1022 = vor.u32 %v1020, %v1021
        %v1023 = vshll.u32 2475754826, %v1017
        %v1024 = vshrl.u32 2131351028, %v1018
        %v1025 = vor.u32 %v1023, %v1024
        %v1026 = vshll.u32 2131351028, %v1017
        %v1027 = vshrl.u32 2102212464, %v1018
        %v1028 = vor.u32 %v1026, %v1027
        %v1029 = vshll.u32 2102212464, %v1017
        %v1030 = vshrl.u32 920167782, %v1018
        %v1031 = vor.u32 %v1029, %v1030
        %v1032 = vshll.u32 920167782, %v1017
        %v1033 = vshrl.u32 1326507024, %v1018
        %v1034 = vor.u32 %v1032, %v1033
        %vm1035 = vcmp.lt.s32.totalorder %v1016, 1
        %vm1036 = vcmp.lt.s32.totalorder %v1016, 2
        %vm1037 = vcmp.lt.s32.totalorder %v1016, 3
        %vm1038 = vcmp.lt.s32.totalorder %v1016, 4
        %v1039 = vsel %vm1035, %v1019, %v1022
        %v1040 = vsel %vm1038, %v1028, 2102212464
        %v1041 = vsel %vm1037, %v1025, %v1040
        %v1042 = vsel %vm1036, %v1039, %v1041
        %v1043 = vsel %vm1035, %v1022, %v1025
        %v1044 = vsel %vm1038, %v1031, 920167782
        %v1045 = vsel %vm1037, %v1028, %v1044
        %v1046 = vsel %vm1036, %v1043, %v1045
        %v1047 = vsel %vm1035, %v1025, %v1028
        %v1048 = vsel %vm1038, %v1034, 1326507024
        %v1049 = vsel %vm1037, %v1031, %v1048
        %v1050 = vsel %vm1036, %v1047, %v1049
        %v1051 = vshll.u32 %v1011, 8
        %v1052 = vmul.u32.u64.compose %v1051, %v1050
        %v1053 = vextract.low.u32 %v1052
        %v1054 = vextract.high.u32 %v1052
        %v1055 = vmul.u32.u64.compose %v1051, %v1046
        %v1056 = vextract.low.u32 %v1055
        %v1057 = vextract.high.u32 %v1055
        %v1058 = vmul.u32 %v1051, %v1042
        %v1059 = vadd.s32 %v1054, %v1056
        %vm1060 = vc.u32 %v1054, %v1056
        %v1061 = vadd.s32 %v1057, 1
        %v1062 = vsel %vm1060, %v1061, %v1057
        %v1063 = vadd.s32 %v1058, %v1062
        %v1064 = vadd.s32 %v1063, 536870912
        %v1065 = vshrl.u32 %v1064, 30
        %v1066 = vshll.u32 %v1065, 30
        %v1067 = vsub.s32 %v1063, %v1066
        %vm1068 = vcmp.lt.s32.totalorder %v1067, 0
        %v1069 = vsub.s32 0, %v1067
        %v1070 = vsel %vm1068, %v1069, %v1067
        %v1071 = vclz %v1070
        %v1072 = vsub.s32 %v1071, 2
        %vm1073 = vcmp.gt.s32.totalorder 0, %v1072
        %v1074 = vsel %vm1073, 0, %v1072
        %v1075 = vsub.s32 32, %v1074
        %v1076 = vshll.u32 %v1067, %v1074
        %v1077 = vshrl.u32 %v1059, %v1075
        %v1078 = vor.u32 %v1076, %v1077
        %v1079 = vsub.s32 4294967266, %v1074
        %v1080 = vadd.s32 %v1079, 127
        %v1081 = vshll.u32 %v1080, 23
        %v1082 = vor.u32 4788187, %v1081
        %v1083 = vand.u32 2147483647, %v1082
        %v1085 = vcvt.s32.f32 %v1078
        %v1086 = vmul.f32 %v1085, %v1083
        %v1087 = vxor.u32 %v1086, 2147483648
        %v1088 = vsel %vm1005, %v1087, %v1086
        %v1089 = vsub.s32 4, %v1065
        %v1090 = vsel %vm1005, %v1089, %v1065
        %v1091 = vsel %vm1004, %v472, %v1088
        %v1092 = vsel %vm1004, 0, %v1090
        %v1093 = vcosq.f32.pop %v1091
        %v1094 = vsinq.f32.pop %v1091
        %vm1095 = vweird.f32 %v472
        %v1096 = vadd.s32 %v1092, 3
        %v1097 = vand.u32 %v1096, 3
        %vm1098 = vcmp.lt.s32.totalorder %v1097, 2
        %vm1099 = vcmp.eq.s32.totalorder %v1097, 0
        %v1100 = vxor.u32 %v1094, 2147483648
        %v1101 = vsel %vm1099, %v1093, %v1100
        %vm1102 = vcmp.eq.s32.totalorder %v1097, 2
        %v1103 = vxor.u32 %v1093, 2147483648
        %v1104 = vsel %vm1102, %v1103, %v1094
        %v1105 = vsel %vm1098, %v1101, %v1104
        %v1106 = vsel %vm1095, nan, %v1105
        %v1107 = vand.u32 2147483647, %v473
        %vm1108 = vcmp.le.f32.partialorder %v1107, 0.7853982
        %vm1109 = vcmp.lt.s32.totalorder %v473, 0
        %v1110 = vand.u32 %v473, 2139095040
        %v1111 = vshrl.u32 %v1110, 23
        %v1112 = vsub.s32 %v1111, 127
        %v1113 = vand.u32 2147483647, %v473
        %v1114 = vand.u32 %v1113, 8388607
        %v1115 = vor.u32 %v1114, 8388608
        %v1116 = vsub.s32 0, %v1115
        %v1117 = vadd.s32 %v1112, 1
        %vm1118 = vcmp.gt.s32.totalorder %v1117, 0
        %v1119 = vsel %vm1118, %v1117, 0
        %v1120 = vshrl.u32 %v1119, 5
        %v1121 = vand.u32 %v1119, 31
        %v1122 = vsub.s32 32, %v1121
        %v1123 = vshrl.u32 683565275, %v1122
        %v1124 = vshll.u32 683565275, %v1121
        %v1125 = vshrl.u32 2475754826, %v1122
        %v1126 = vor.u32 %v1124, %v1125
        %v1127 = vshll.u32 2475754826, %v1121
        %v1128 = vshrl.u32 2131351028, %v1122
        %v1129 = vor.u32 %v1127, %v1128
        %v1130 = vshll.u32 2131351028, %v1121
        %v1131 = vshrl.u32 2102212464, %v1122
        %v1132 = vor.u32 %v1130, %v1131
        %v1133 = vshll.u32 2102212464, %v1121
        %v1134 = vshrl.u32 920167782, %v1122
        %v1135 = vor.u32 %v1133, %v1134
        %v1136 = vshll.u32 920167782, %v1121
        %v1137 = vshrl.u32 1326507024, %v1122
        %v1138 = vor.u32 %v1136, %v1137
        %vm1139 = vcmp.lt.s32.totalorder %v1120, 1
        %vm1140 = vcmp.lt.s32.totalorder %v1120, 2
        %vm1141 = vcmp.lt.s32.totalorder %v1120, 3
        %vm1142 = vcmp.lt.s32.totalorder %v1120, 4
        %v1143 = vsel %vm1139, %v1123, %v1126
        %v1144 = vsel %vm1142, %v1132, 2102212464
        %v1145 = vsel %vm1141, %v1129, %v1144
        %v1146 = vsel %vm1140, %v1143, %v1145
        %v1147 = vsel %vm1139, %v1126, %v1129
        %v1148 = vsel %vm1142, %v1135, 920167782
        %v1149 = vsel %vm1141, %v1132, %v1148
        %v1150 = vsel %vm1140, %v1147, %v1149
        %v1151 = vsel %vm1139, %v1129, %v1132
        %v1152 = vsel %vm1142, %v1138, 1326507024
        %v1153 = vsel %vm1141, %v1135, %v1152
        %v1154 = vsel %vm1140, %v1151, %v1153
        %v1155 = vshll.u32 %v1115, 8
        %v1156 = vmul.u32.u64.compose %v1155, %v1154
        %v1157 = vextract.low.u32 %v1156
        %v1158 = vextract.high.u32 %v1156
        %v1159 = vmul.u32.u64.compose %v1155, %v1150
        %v1160 = vextract.low.u32 %v1159
        %v1161 = vextract.high.u32 %v1159
        %v1162 = vmul.u32 %v1155, %v1146
        %v1163 = vadd.s32 %v1158, %v1160
        %vm1164 = vc.u32 %v1158, %v1160
        %v1165 = vadd.s32 %v1161, 1
        %v1166 = vsel %vm1164, %v1165, %v1161
        %v1167 = vadd.s32 %v1162, %v1166
        %v1168 = vadd.s32 %v1167, 536870912
        %v1169 = vshrl.u32 %v1168, 30
        %v1170 = vshll.u32 %v1169, 30
        %v1171 = vsub.s32 %v1167, %v1170
        %vm1172 = vcmp.lt.s32.totalorder %v1171, 0
        %v1173 = vsub.s32 0, %v1171
        %v1174 = vsel %vm1172, %v1173, %v1171
        %v1175 = vclz %v1174
        %v1176 = vsub.s32 %v1175, 2
        %vm1177 = vcmp.gt.s32.totalorder 0, %v1176
        %v1178 = vsel %vm1177, 0, %v1176
        %v1179 = vsub.s32 32, %v1178
        %v1180 = vshll.u32 %v1171, %v1178
        %v1181 = vshrl.u32 %v1163, %v1179
        %v1182 = vor.u32 %v1180, %v1181
        %v1183 = vsub.s32 4294967266, %v1178
        %v1184 = vadd.s32 %v1183, 127
        %v1185 = vshll.u32 %v1184, 23
        %v1186 = vor.u32 4788187, %v1185
        %v1187 = vand.u32 2147483647, %v1186
        %v1189 = vcvt.s32.f32 %v1182
        %v1190 = vmul.f32 %v1189, %v1187
        %v1191 = vxor.u32 %v1190, 2147483648
        %v1192 = vsel %vm1109, %v1191, %v1190
        %v1193 = vsub.s32 4, %v1169
        %v1194 = vsel %vm1109, %v1193, %v1169
        %v1195 = vsel %vm1108, %v473, %v1192
        %v1196 = vsel %vm1108, 0, %v1194
        %v1197 = vcosq.f32.pop %v1195
        %v1198 = vsinq.f32.pop %v1195
        %vm1199 = vweird.f32 %v473
        %v1200 = vadd.s32 %v1196, 3
        %v1201 = vand.u32 %v1200, 3
        %vm1202 = vcmp.lt.s32.totalorder %v1201, 2
        %vm1203 = vcmp.eq.s32.totalorder %v1201, 0
        %v1204 = vxor.u32 %v1198, 2147483648
        %v1205 = vsel %vm1203, %v1197, %v1204
        %vm1206 = vcmp.eq.s32.totalorder %v1201, 2
        %v1207 = vxor.u32 %v1197, 2147483648
        %v1208 = vsel %vm1206, %v1207, %v1198
        %v1209 = vsel %vm1202, %v1205, %v1208
        %v1210 = vsel %vm1199, nan, %v1209
        %v1211 = vand.u32 2147483647, %v474
        %vm1212 = vcmp.le.f32.partialorder %v1211, 0.7853982
        %vm1213 = vcmp.lt.s32.totalorder %v474, 0
        %v1214 = vand.u32 %v474, 2139095040
        %v1215 = vshrl.u32 %v1214, 23
        %v1216 = vsub.s32 %v1215, 127
        %v1217 = vand.u32 2147483647, %v474
        %v1218 = vand.u32 %v1217, 8388607
        %v1219 = vor.u32 %v1218, 8388608
        %v1220 = vsub.s32 0, %v1219
        %v1221 = vadd.s32 %v1216, 1
        %vm1222 = vcmp.gt.s32.totalorder %v1221, 0
        %v1223 = vsel %vm1222, %v1221, 0
        %v1224 = vshrl.u32 %v1223, 5
        %v1225 = vand.u32 %v1223, 31
        %v1226 = vsub.s32 32, %v1225
        %v1227 = vshrl.u32 683565275, %v1226
        %v1228 = vshll.u32 683565275, %v1225
        %v1229 = vshrl.u32 2475754826, %v1226
        %v1230 = vor.u32 %v1228, %v1229
        %v1231 = vshll.u32 2475754826, %v1225
        %v1232 = vshrl.u32 2131351028, %v1226
        %v1233 = vor.u32 %v1231, %v1232
        %v1234 = vshll.u32 2131351028, %v1225
        %v1235 = vshrl.u32 2102212464, %v1226
        %v1236 = vor.u32 %v1234, %v1235
        %v1237 = vshll.u32 2102212464, %v1225
        %v1238 = vshrl.u32 920167782, %v1226
        %v1239 = vor.u32 %v1237, %v1238
        %v1240 = vshll.u32 920167782, %v1225
        %v1241 = vshrl.u32 1326507024, %v1226
        %v1242 = vor.u32 %v1240, %v1241
        %vm1243 = vcmp.lt.s32.totalorder %v1224, 1
        %vm1244 = vcmp.lt.s32.totalorder %v1224, 2
        %vm1245 = vcmp.lt.s32.totalorder %v1224, 3
        %vm1246 = vcmp.lt.s32.totalorder %v1224, 4
        %v1247 = vsel %vm1243, %v1227, %v1230
        %v1248 = vsel %vm1246, %v1236, 2102212464
        %v1249 = vsel %vm1245, %v1233, %v1248
        %v1250 = vsel %vm1244, %v1247, %v1249
        %v1251 = vsel %vm1243, %v1230, %v1233
        %v1252 = vsel %vm1246, %v1239, 920167782
        %v1253 = vsel %vm1245, %v1236, %v1252
        %v1254 = vsel %vm1244, %v1251, %v1253
        %v1255 = vsel %vm1243, %v1233, %v1236
        %v1256 = vsel %vm1246, %v1242, 1326507024
        %v1257 = vsel %vm1245, %v1239, %v1256
        %v1258 = vsel %vm1244, %v1255, %v1257
        %v1259 = vshll.u32 %v1219, 8
        %v1260 = vmul.u32.u64.compose %v1259, %v1258
        %v1261 = vextract.low.u32 %v1260
        %v1262 = vextract.high.u32 %v1260
        %v1263 = vmul.u32.u64.compose %v1259, %v1254
        %v1264 = vextract.low.u32 %v1263
        %v1265 = vextract.high.u32 %v1263
        %v1266 = vmul.u32 %v1259, %v1250
        %v1267 = vadd.s32 %v1262, %v1264
        %vm1268 = vc.u32 %v1262, %v1264
        %v1269 = vadd.s32 %v1265, 1
        %v1270 = vsel %vm1268, %v1269, %v1265
        %v1271 = vadd.s32 %v1266, %v1270
        %v1272 = vadd.s32 %v1271, 536870912
        %v1273 = vshrl.u32 %v1272, 30
        %v1274 = vshll.u32 %v1273, 30
        %v1275 = vsub.s32 %v1271, %v1274
        %vm1276 = vcmp.lt.s32.totalorder %v1275, 0
        %v1277 = vsub.s32 0, %v1275
        %v1278 = vsel %vm1276, %v1277, %v1275
        %v1279 = vclz %v1278
        %v1280 = vsub.s32 %v1279, 2
        %vm1281 = vcmp.gt.s32.totalorder 0, %v1280
        %v1282 = vsel %vm1281, 0, %v1280
        %v1283 = vsub.s32 32, %v1282
        %v1284 = vshll.u32 %v1275, %v1282
        %v1285 = vshrl.u32 %v1267, %v1283
        %v1286 = vor.u32 %v1284, %v1285
        %v1287 = vsub.s32 4294967266, %v1282
        %v1288 = vadd.s32 %v1287, 127
        %v1289 = vshll.u32 %v1288, 23
        %v1290 = vor.u32 4788187, %v1289
        %v1291 = vand.u32 2147483647, %v1290
        %v1293 = vcvt.s32.f32 %v1286
        %v1294 = vmul.f32 %v1293, %v1291
        %v1295 = vxor.u32 %v1294, 2147483648
        %v1296 = vsel %vm1213, %v1295, %v1294
        %v1297 = vsub.s32 4, %v1273
        %v1298 = vsel %vm1213, %v1297, %v1273
        %v1299 = vsel %vm1212, %v474, %v1296
        %v1300 = vsel %vm1212, 0, %v1298
        %v1301 = vcosq.f32.pop %v1299
        %v1302 = vsinq.f32.pop %v1299
        %vm1303 = vweird.f32 %v474
        %v1304 = vadd.s32 %v1300, 3
        %v1305 = vand.u32 %v1304, 3
        %vm1306 = vcmp.lt.s32.totalorder %v1305, 2
        %vm1307 = vcmp.eq.s32.totalorder %v1305, 0
        %v1308 = vxor.u32 %v1302, 2147483648
        %v1309 = vsel %vm1307, %v1301, %v1308
        %vm1310 = vcmp.eq.s32.totalorder %v1305, 2
        %v1311 = vxor.u32 %v1301, 2147483648
        %v1312 = vsel %vm1310, %v1311, %v1302
        %v1313 = vsel %vm1306, %v1309, %v1312
        %v1314 = vsel %vm1303, nan, %v1313
        %v1315 = vand.u32 2147483647, %v475
        %vm1316 = vcmp.le.f32.partialorder %v1315, 0.7853982
        %vm1317 = vcmp.lt.s32.totalorder %v475, 0
        %v1318 = vand.u32 %v475, 2139095040
        %v1319 = vshrl.u32 %v1318, 23
        %v1320 = vsub.s32 %v1319, 127
        %v1321 = vand.u32 2147483647, %v475
        %v1322 = vand.u32 %v1321, 8388607
        %v1323 = vor.u32 %v1322, 8388608
        %v1324 = vsub.s32 0, %v1323
        %v1325 = vadd.s32 %v1320, 1
        %vm1326 = vcmp.gt.s32.totalorder %v1325, 0
        %v1327 = vsel %vm1326, %v1325, 0
        %v1328 = vshrl.u32 %v1327, 5
        %v1329 = vand.u32 %v1327, 31
        %v1330 = vsub.s32 32, %v1329
        %v1331 = vshrl.u32 683565275, %v1330
        %v1332 = vshll.u32 683565275, %v1329
        %v1333 = vshrl.u32 2475754826, %v1330
        %v1334 = vor.u32 %v1332, %v1333
        %v1335 = vshll.u32 2475754826, %v1329
        %v1336 = vshrl.u32 2131351028, %v1330
        %v1337 = vor.u32 %v1335, %v1336
        %v1338 = vshll.u32 2131351028, %v1329
        %v1339 = vshrl.u32 2102212464, %v1330
        %v1340 = vor.u32 %v1338, %v1339
        %v1341 = vshll.u32 2102212464, %v1329
        %v1342 = vshrl.u32 920167782, %v1330
        %v1343 = vor.u32 %v1341, %v1342
        %v1344 = vshll.u32 920167782, %v1329
        %v1345 = vshrl.u32 1326507024, %v1330
        %v1346 = vor.u32 %v1344, %v1345
        %vm1347 = vcmp.lt.s32.totalorder %v1328, 1
        %vm1348 = vcmp.lt.s32.totalorder %v1328, 2
        %vm1349 = vcmp.lt.s32.totalorder %v1328, 3
        %vm1350 = vcmp.lt.s32.totalorder %v1328, 4
        %v1351 = vsel %vm1347, %v1331, %v1334
        %v1352 = vsel %vm1350, %v1340, 2102212464
        %v1353 = vsel %vm1349, %v1337, %v1352
        %v1354 = vsel %vm1348, %v1351, %v1353
        %v1355 = vsel %vm1347, %v1334, %v1337
        %v1356 = vsel %vm1350, %v1343, 920167782
        %v1357 = vsel %vm1349, %v1340, %v1356
        %v1358 = vsel %vm1348, %v1355, %v1357
        %v1359 = vsel %vm1347, %v1337, %v1340
        %v1360 = vsel %vm1350, %v1346, 1326507024
        %v1361 = vsel %vm1349, %v1343, %v1360
        %v1362 = vsel %vm1348, %v1359, %v1361
        %v1363 = vshll.u32 %v1323, 8
        %v1364 = vmul.u32.u64.compose %v1363, %v1362
        %v1365 = vextract.low.u32 %v1364
        %v1366 = vextract.high.u32 %v1364
        %v1367 = vmul.u32.u64.compose %v1363, %v1358
        %v1368 = vextract.low.u32 %v1367
        %v1369 = vextract.high.u32 %v1367
        %v1370 = vmul.u32 %v1363, %v1354
        %v1371 = vadd.s32 %v1366, %v1368
        %vm1372 = vc.u32 %v1366, %v1368
        %v1373 = vadd.s32 %v1369, 1
        %v1374 = vsel %vm1372, %v1373, %v1369
        %v1375 = vadd.s32 %v1370, %v1374
        %v1376 = vadd.s32 %v1375, 536870912
        %v1377 = vshrl.u32 %v1376, 30
        %v1378 = vshll.u32 %v1377, 30
        %v1379 = vsub.s32 %v1375, %v1378
        %vm1380 = vcmp.lt.s32.totalorder %v1379, 0
        %v1381 = vsub.s32 0, %v1379
        %v1382 = vsel %vm1380, %v1381, %v1379
        %v1383 = vclz %v1382
        %v1384 = vsub.s32 %v1383, 2
        %vm1385 = vcmp.gt.s32.totalorder 0, %v1384
        %v1386 = vsel %vm1385, 0, %v1384
        %v1387 = vsub.s32 32, %v1386
        %v1388 = vshll.u32 %v1379, %v1386
        %v1389 = vshrl.u32 %v1371, %v1387
        %v1390 = vor.u32 %v1388, %v1389
        %v1391 = vsub.s32 4294967266, %v1386
        %v1392 = vadd.s32 %v1391, 127
        %v1393 = vshll.u32 %v1392, 23
        %v1394 = vor.u32 4788187, %v1393
        %v1395 = vand.u32 2147483647, %v1394
        %v1397 = vcvt.s32.f32 %v1390
        %v1398 = vmul.f32 %v1397, %v1395
        %v1399 = vxor.u32 %v1398, 2147483648
        %v1400 = vsel %vm1317, %v1399, %v1398
        %v1401 = vsub.s32 4, %v1377
        %v1402 = vsel %vm1317, %v1401, %v1377
        %v1403 = vsel %vm1316, %v475, %v1400
        %v1404 = vsel %vm1316, 0, %v1402
        %v1405 = vcosq.f32.pop %v1403
        %v1406 = vsinq.f32.pop %v1403
        %vm1407 = vweird.f32 %v475
        %v1408 = vadd.s32 %v1404, 3
        %v1409 = vand.u32 %v1408, 3
        %vm1410 = vcmp.lt.s32.totalorder %v1409, 2
        %vm1411 = vcmp.eq.s32.totalorder %v1409, 0
        %v1412 = vxor.u32 %v1406, 2147483648
        %v1413 = vsel %vm1411, %v1405, %v1412
        %vm1414 = vcmp.eq.s32.totalorder %v1409, 2
        %v1415 = vxor.u32 %v1405, 2147483648
        %v1416 = vsel %vm1414, %v1415, %v1406
        %v1417 = vsel %vm1410, %v1413, %v1416
        %v1418 = vsel %vm1407, nan, %v1417
        %v1419 = vand.u32 2147483647, %v476
        %vm1420 = vcmp.le.f32.partialorder %v1419, 0.7853982
        %vm1421 = vcmp.lt.s32.totalorder %v476, 0
        %v1422 = vand.u32 %v476, 2139095040
        %v1423 = vshrl.u32 %v1422, 23
        %v1424 = vsub.s32 %v1423, 127
        %v1425 = vand.u32 2147483647, %v476
        %v1426 = vand.u32 %v1425, 8388607
        %v1427 = vor.u32 %v1426, 8388608
        %v1428 = vsub.s32 0, %v1427
        %v1429 = vadd.s32 %v1424, 1
        %vm1430 = vcmp.gt.s32.totalorder %v1429, 0
        %v1431 = vsel %vm1430, %v1429, 0
        %v1432 = vshrl.u32 %v1431, 5
        %v1433 = vand.u32 %v1431, 31
        %v1434 = vsub.s32 32, %v1433
        %v1435 = vshrl.u32 683565275, %v1434
        %v1436 = vshll.u32 683565275, %v1433
        %v1437 = vshrl.u32 2475754826, %v1434
        %v1438 = vor.u32 %v1436, %v1437
        %v1439 = vshll.u32 2475754826, %v1433
        %v1440 = vshrl.u32 2131351028, %v1434
        %v1441 = vor.u32 %v1439, %v1440
        %v1442 = vshll.u32 2131351028, %v1433
        %v1443 = vshrl.u32 2102212464, %v1434
        %v1444 = vor.u32 %v1442, %v1443
        %v1445 = vshll.u32 2102212464, %v1433
        %v1446 = vshrl.u32 920167782, %v1434
        %v1447 = vor.u32 %v1445, %v1446
        %v1448 = vshll.u32 920167782, %v1433
        %v1449 = vshrl.u32 1326507024, %v1434
        %v1450 = vor.u32 %v1448, %v1449
        %vm1451 = vcmp.lt.s32.totalorder %v1432, 1
        %vm1452 = vcmp.lt.s32.totalorder %v1432, 2
        %vm1453 = vcmp.lt.s32.totalorder %v1432, 3
        %vm1454 = vcmp.lt.s32.totalorder %v1432, 4
        %v1455 = vsel %vm1451, %v1435, %v1438
        %v1456 = vsel %vm1454, %v1444, 2102212464
        %v1457 = vsel %vm1453, %v1441, %v1456
        %v1458 = vsel %vm1452, %v1455, %v1457
        %v1459 = vsel %vm1451, %v1438, %v1441
        %v1460 = vsel %vm1454, %v1447, 920167782
        %v1461 = vsel %vm1453, %v1444, %v1460
        %v1462 = vsel %vm1452, %v1459, %v1461
        %v1463 = vsel %vm1451, %v1441, %v1444
        %v1464 = vsel %vm1454, %v1450, 1326507024
        %v1465 = vsel %vm1453, %v1447, %v1464
        %v1466 = vsel %vm1452, %v1463, %v1465
        %v1467 = vshll.u32 %v1427, 8
        %v1468 = vmul.u32.u64.compose %v1467, %v1466
        %v1469 = vextract.low.u32 %v1468
        %v1470 = vextract.high.u32 %v1468
        %v1471 = vmul.u32.u64.compose %v1467, %v1462
        %v1472 = vextract.low.u32 %v1471
        %v1473 = vextract.high.u32 %v1471
        %v1474 = vmul.u32 %v1467, %v1458
        %v1475 = vadd.s32 %v1470, %v1472
        %vm1476 = vc.u32 %v1470, %v1472
        %v1477 = vadd.s32 %v1473, 1
        %v1478 = vsel %vm1476, %v1477, %v1473
        %v1479 = vadd.s32 %v1474, %v1478
        %v1480 = vadd.s32 %v1479, 536870912
        %v1481 = vshrl.u32 %v1480, 30
        %v1482 = vshll.u32 %v1481, 30
        %v1483 = vsub.s32 %v1479, %v1482
        %vm1484 = vcmp.lt.s32.totalorder %v1483, 0
        %v1485 = vsub.s32 0, %v1483
        %v1486 = vsel %vm1484, %v1485, %v1483
        %v1487 = vclz %v1486
        %v1488 = vsub.s32 %v1487, 2
        %vm1489 = vcmp.gt.s32.totalorder 0, %v1488
        %v1490 = vsel %vm1489, 0, %v1488
        %v1491 = vsub.s32 32, %v1490
        %v1492 = vshll.u32 %v1483, %v1490
        %v1493 = vshrl.u32 %v1475, %v1491
        %v1494 = vor.u32 %v1492, %v1493
        %v1495 = vsub.s32 4294967266, %v1490
        %v1496 = vadd.s32 %v1495, 127
        %v1497 = vshll.u32 %v1496, 23
        %v1498 = vor.u32 4788187, %v1497
        %v1499 = vand.u32 2147483647, %v1498
        %v1501 = vcvt.s32.f32 %v1494
        %v1502 = vmul.f32 %v1501, %v1499
        %v1503 = vxor.u32 %v1502, 2147483648
        %v1504 = vsel %vm1421, %v1503, %v1502
        %v1505 = vsub.s32 4, %v1481
        %v1506 = vsel %vm1421, %v1505, %v1481
        %v1507 = vsel %vm1420, %v476, %v1504
        %v1508 = vsel %vm1420, 0, %v1506
        %v1509 = vcosq.f32.pop %v1507
        %v1510 = vsinq.f32.pop %v1507
        %vm1511 = vweird.f32 %v476
        %v1512 = vadd.s32 %v1508, 3
        %v1513 = vand.u32 %v1512, 3
        %vm1514 = vcmp.lt.s32.totalorder %v1513, 2
        %vm1515 = vcmp.eq.s32.totalorder %v1513, 0
        %v1516 = vxor.u32 %v1510, 2147483648
        %v1517 = vsel %vm1515, %v1509, %v1516
        %vm1518 = vcmp.eq.s32.totalorder %v1513, 2
        %v1519 = vxor.u32 %v1509, 2147483648
        %v1520 = vsel %vm1518, %v1519, %v1510
        %v1521 = vsel %vm1514, %v1517, %v1520
        %v1522 = vsel %vm1511, nan, %v1521
        %v1523 = vand.u32 2147483647, %v477
        %vm1524 = vcmp.le.f32.partialorder %v1523, 0.7853982
        %vm1525 = vcmp.lt.s32.totalorder %v477, 0
        %v1526 = vand.u32 %v477, 2139095040
        %v1527 = vshrl.u32 %v1526, 23
        %v1528 = vsub.s32 %v1527, 127
        %v1529 = vand.u32 2147483647, %v477
        %v1530 = vand.u32 %v1529, 8388607
        %v1531 = vor.u32 %v1530, 8388608
        %v1532 = vsub.s32 0, %v1531
        %v1533 = vadd.s32 %v1528, 1
        %vm1534 = vcmp.gt.s32.totalorder %v1533, 0
        %v1535 = vsel %vm1534, %v1533, 0
        %v1536 = vshrl.u32 %v1535, 5
        %v1537 = vand.u32 %v1535, 31
        %v1538 = vsub.s32 32, %v1537
        %v1539 = vshrl.u32 683565275, %v1538
        %v1540 = vshll.u32 683565275, %v1537
        %v1541 = vshrl.u32 2475754826, %v1538
        %v1542 = vor.u32 %v1540, %v1541
        %v1543 = vshll.u32 2475754826, %v1537
        %v1544 = vshrl.u32 2131351028, %v1538
        %v1545 = vor.u32 %v1543, %v1544
        %v1546 = vshll.u32 2131351028, %v1537
        %v1547 = vshrl.u32 2102212464, %v1538
        %v1548 = vor.u32 %v1546, %v1547
        %v1549 = vshll.u32 2102212464, %v1537
        %v1550 = vshrl.u32 920167782, %v1538
        %v1551 = vor.u32 %v1549, %v1550
        %v1552 = vshll.u32 920167782, %v1537
        %v1553 = vshrl.u32 1326507024, %v1538
        %v1554 = vor.u32 %v1552, %v1553
        %vm1555 = vcmp.lt.s32.totalorder %v1536, 1
        %vm1556 = vcmp.lt.s32.totalorder %v1536, 2
        %vm1557 = vcmp.lt.s32.totalorder %v1536, 3
        %vm1558 = vcmp.lt.s32.totalorder %v1536, 4
        %v1559 = vsel %vm1555, %v1539, %v1542
        %v1560 = vsel %vm1558, %v1548, 2102212464
        %v1561 = vsel %vm1557, %v1545, %v1560
        %v1562 = vsel %vm1556, %v1559, %v1561
        %v1563 = vsel %vm1555, %v1542, %v1545
        %v1564 = vsel %vm1558, %v1551, 920167782
        %v1565 = vsel %vm1557, %v1548, %v1564
        %v1566 = vsel %vm1556, %v1563, %v1565
        %v1567 = vsel %vm1555, %v1545, %v1548
        %v1568 = vsel %vm1558, %v1554, 1326507024
        %v1569 = vsel %vm1557, %v1551, %v1568
        %v1570 = vsel %vm1556, %v1567, %v1569
        %v1571 = vshll.u32 %v1531, 8
        %v1572 = vmul.u32.u64.compose %v1571, %v1570
        %v1573 = vextract.low.u32 %v1572
        %v1574 = vextract.high.u32 %v1572
        %v1575 = vmul.u32.u64.compose %v1571, %v1566
        %v1576 = vextract.low.u32 %v1575
        %v1577 = vextract.high.u32 %v1575
        %v1578 = vmul.u32 %v1571, %v1562
        %v1579 = vadd.s32 %v1574, %v1576
        %vm1580 = vc.u32 %v1574, %v1576
        %v1581 = vadd.s32 %v1577, 1
        %v1582 = vsel %vm1580, %v1581, %v1577
        %v1583 = vadd.s32 %v1578, %v1582
        %v1584 = vadd.s32 %v1583, 536870912
        %v1585 = vshrl.u32 %v1584, 30
        %v1586 = vshll.u32 %v1585, 30
        %v1587 = vsub.s32 %v1583, %v1586
        %vm1588 = vcmp.lt.s32.totalorder %v1587, 0
        %v1589 = vsub.s32 0, %v1587
        %v1590 = vsel %vm1588, %v1589, %v1587
        %v1591 = vclz %v1590
        %v1592 = vsub.s32 %v1591, 2
        %vm1593 = vcmp.gt.s32.totalorder 0, %v1592
        %v1594 = vsel %vm1593, 0, %v1592
        %v1595 = vsub.s32 32, %v1594
        %v1596 = vshll.u32 %v1587, %v1594
        %v1597 = vshrl.u32 %v1579, %v1595
        %v1598 = vor.u32 %v1596, %v1597
        %v1599 = vsub.s32 4294967266, %v1594
        %v1600 = vadd.s32 %v1599, 127
        %v1601 = vshll.u32 %v1600, 23
        %v1602 = vor.u32 4788187, %v1601
        %v1603 = vand.u32 2147483647, %v1602
        %v1605 = vcvt.s32.f32 %v1598
        %v1606 = vmul.f32 %v1605, %v1603
        %v1607 = vxor.u32 %v1606, 2147483648
        %v1608 = vsel %vm1525, %v1607, %v1606
        %v1609 = vsub.s32 4, %v1585
        %v1610 = vsel %vm1525, %v1609, %v1585
        %v1611 = vsel %vm1524, %v477, %v1608
        %v1612 = vsel %vm1524, 0, %v1610
        %v1613 = vcosq.f32.pop %v1611
        %v1614 = vsinq.f32.pop %v1611
        %vm1615 = vweird.f32 %v477
        %v1616 = vadd.s32 %v1612, 3
        %v1617 = vand.u32 %v1616, 3
        %vm1618 = vcmp.lt.s32.totalorder %v1617, 2
        %vm1619 = vcmp.eq.s32.totalorder %v1617, 0
        %v1620 = vxor.u32 %v1614, 2147483648
        %v1621 = vsel %vm1619, %v1613, %v1620
        %vm1622 = vcmp.eq.s32.totalorder %v1617, 2
        %v1623 = vxor.u32 %v1613, 2147483648
        %v1624 = vsel %vm1622, %v1623, %v1614
        %v1625 = vsel %vm1618, %v1621, %v1624
        %v1626 = vsel %vm1615, nan, %v1625
        %v1627 = vand.u32 2147483647, %v478
        %vm1628 = vcmp.le.f32.partialorder %v1627, 0.7853982
        %vm1629 = vcmp.lt.s32.totalorder %v478, 0
        %v1630 = vand.u32 %v478, 2139095040
        %v1631 = vshrl.u32 %v1630, 23
        %v1632 = vsub.s32 %v1631, 127
        %v1633 = vand.u32 2147483647, %v478
        %v1634 = vand.u32 %v1633, 8388607
        %v1635 = vor.u32 %v1634, 8388608
        %v1636 = vsub.s32 0, %v1635
        %v1637 = vadd.s32 %v1632, 1
        %vm1638 = vcmp.gt.s32.totalorder %v1637, 0
        %v1639 = vsel %vm1638, %v1637, 0
        %v1640 = vshrl.u32 %v1639, 5
        %v1641 = vand.u32 %v1639, 31
        %v1642 = vsub.s32 32, %v1641
        %v1643 = vshrl.u32 683565275, %v1642
        %v1644 = vshll.u32 683565275, %v1641
        %v1645 = vshrl.u32 2475754826, %v1642
        %v1646 = vor.u32 %v1644, %v1645
        %v1647 = vshll.u32 2475754826, %v1641
        %v1648 = vshrl.u32 2131351028, %v1642
        %v1649 = vor.u32 %v1647, %v1648
        %v1650 = vshll.u32 2131351028, %v1641
        %v1651 = vshrl.u32 2102212464, %v1642
        %v1652 = vor.u32 %v1650, %v1651
        %v1653 = vshll.u32 2102212464, %v1641
        %v1654 = vshrl.u32 920167782, %v1642
        %v1655 = vor.u32 %v1653, %v1654
        %v1656 = vshll.u32 920167782, %v1641
        %v1657 = vshrl.u32 1326507024, %v1642
        %v1658 = vor.u32 %v1656, %v1657
        %vm1659 = vcmp.lt.s32.totalorder %v1640, 1
        %vm1660 = vcmp.lt.s32.totalorder %v1640, 2
        %vm1661 = vcmp.lt.s32.totalorder %v1640, 3
        %vm1662 = vcmp.lt.s32.totalorder %v1640, 4
        %v1663 = vsel %vm1659, %v1643, %v1646
        %v1664 = vsel %vm1662, %v1652, 2102212464
        %v1665 = vsel %vm1661, %v1649, %v1664
        %v1666 = vsel %vm1660, %v1663, %v1665
        %v1667 = vsel %vm1659, %v1646, %v1649
        %v1668 = vsel %vm1662, %v1655, 920167782
        %v1669 = vsel %vm1661, %v1652, %v1668
        %v1670 = vsel %vm1660, %v1667, %v1669
        %v1671 = vsel %vm1659, %v1649, %v1652
        %v1672 = vsel %vm1662, %v1658, 1326507024
        %v1673 = vsel %vm1661, %v1655, %v1672
        %v1674 = vsel %vm1660, %v1671, %v1673
        %v1675 = vshll.u32 %v1635, 8
        %v1676 = vmul.u32.u64.compose %v1675, %v1674
        %v1677 = vextract.low.u32 %v1676
        %v1678 = vextract.high.u32 %v1676
        %v1679 = vmul.u32.u64.compose %v1675, %v1670
        %v1680 = vextract.low.u32 %v1679
        %v1681 = vextract.high.u32 %v1679
        %v1682 = vmul.u32 %v1675, %v1666
        %v1683 = vadd.s32 %v1678, %v1680
        %vm1684 = vc.u32 %v1678, %v1680
        %v1685 = vadd.s32 %v1681, 1
        %v1686 = vsel %vm1684, %v1685, %v1681
        %v1687 = vadd.s32 %v1682, %v1686
        %v1688 = vadd.s32 %v1687, 536870912
        %v1689 = vshrl.u32 %v1688, 30
        %v1690 = vshll.u32 %v1689, 30
        %v1691 = vsub.s32 %v1687, %v1690
        %vm1692 = vcmp.lt.s32.totalorder %v1691, 0
        %v1693 = vsub.s32 0, %v1691
        %v1694 = vsel %vm1692, %v1693, %v1691
        %v1695 = vclz %v1694
        %v1696 = vsub.s32 %v1695, 2
        %vm1697 = vcmp.gt.s32.totalorder 0, %v1696
        %v1698 = vsel %vm1697, 0, %v1696
        %v1699 = vsub.s32 32, %v1698
        %v1700 = vshll.u32 %v1691, %v1698
        %v1701 = vshrl.u32 %v1683, %v1699
        %v1702 = vor.u32 %v1700, %v1701
        %v1703 = vsub.s32 4294967266, %v1698
        %v1704 = vadd.s32 %v1703, 127
        %v1705 = vshll.u32 %v1704, 23
        %v1706 = vor.u32 4788187, %v1705
        %v1707 = vand.u32 2147483647, %v1706
        %v1709 = vcvt.s32.f32 %v1702
        %v1710 = vmul.f32 %v1709, %v1707
        %v1711 = vxor.u32 %v1710, 2147483648
        %v1712 = vsel %vm1629, %v1711, %v1710
        %v1713 = vsub.s32 4, %v1689
        %v1714 = vsel %vm1629, %v1713, %v1689
        %v1715 = vsel %vm1628, %v478, %v1712
        %v1716 = vsel %vm1628, 0, %v1714
        %v1717 = vcosq.f32.pop %v1715
        %v1718 = vsinq.f32.pop %v1715
        %vm1719 = vweird.f32 %v478
        %v1720 = vadd.s32 %v1716, 3
        %v1721 = vand.u32 %v1720, 3
        %vm1722 = vcmp.lt.s32.totalorder %v1721, 2
        %vm1723 = vcmp.eq.s32.totalorder %v1721, 0
        %v1724 = vxor.u32 %v1718, 2147483648
        %v1725 = vsel %vm1723, %v1717, %v1724
        %vm1726 = vcmp.eq.s32.totalorder %v1721, 2
        %v1727 = vxor.u32 %v1717, 2147483648
        %v1728 = vsel %vm1726, %v1727, %v1718
        %v1729 = vsel %vm1722, %v1725, %v1728
        %v1730 = vsel %vm1719, nan, %v1729
        %v1731 = vand.u32 2147483647, %v479
        %vm1732 = vcmp.le.f32.partialorder %v1731, 0.7853982
        %vm1733 = vcmp.lt.s32.totalorder %v479, 0
        %v1734 = vand.u32 %v479, 2139095040
        %v1735 = vshrl.u32 %v1734, 23
        %v1736 = vsub.s32 %v1735, 127
        %v1737 = vand.u32 2147483647, %v479
        %v1738 = vand.u32 %v1737, 8388607
        %v1739 = vor.u32 %v1738, 8388608
        %v1740 = vsub.s32 0, %v1739
        %v1741 = vadd.s32 %v1736, 1
        %vm1742 = vcmp.gt.s32.totalorder %v1741, 0
        %v1743 = vsel %vm1742, %v1741, 0
        %v1744 = vshrl.u32 %v1743, 5
        %v1745 = vand.u32 %v1743, 31
        %v1746 = vsub.s32 32, %v1745
        %v1747 = vshrl.u32 683565275, %v1746
        %v1748 = vshll.u32 683565275, %v1745
        %v1749 = vshrl.u32 2475754826, %v1746
        %v1750 = vor.u32 %v1748, %v1749
        %v1751 = vshll.u32 2475754826, %v1745
        %v1752 = vshrl.u32 2131351028, %v1746
        %v1753 = vor.u32 %v1751, %v1752
        %v1754 = vshll.u32 2131351028, %v1745
        %v1755 = vshrl.u32 2102212464, %v1746
        %v1756 = vor.u32 %v1754, %v1755
        %v1757 = vshll.u32 2102212464, %v1745
        %v1758 = vshrl.u32 920167782, %v1746
        %v1759 = vor.u32 %v1757, %v1758
        %v1760 = vshll.u32 920167782, %v1745
        %v1761 = vshrl.u32 1326507024, %v1746
        %v1762 = vor.u32 %v1760, %v1761
        %vm1763 = vcmp.lt.s32.totalorder %v1744, 1
        %vm1764 = vcmp.lt.s32.totalorder %v1744, 2
        %vm1765 = vcmp.lt.s32.totalorder %v1744, 3
        %vm1766 = vcmp.lt.s32.totalorder %v1744, 4
        %v1767 = vsel %vm1763, %v1747, %v1750
        %v1768 = vsel %vm1766, %v1756, 2102212464
        %v1769 = vsel %vm1765, %v1753, %v1768
        %v1770 = vsel %vm1764, %v1767, %v1769
        %v1771 = vsel %vm1763, %v1750, %v1753
        %v1772 = vsel %vm1766, %v1759, 920167782
        %v1773 = vsel %vm1765, %v1756, %v1772
        %v1774 = vsel %vm1764, %v1771, %v1773
        %v1775 = vsel %vm1763, %v1753, %v1756
        %v1776 = vsel %vm1766, %v1762, 1326507024
        %v1777 = vsel %vm1765, %v1759, %v1776
        %v1778 = vsel %vm1764, %v1775, %v1777
        %v1779 = vshll.u32 %v1739, 8
        %v1780 = vmul.u32.u64.compose %v1779, %v1778
        %v1781 = vextract.low.u32 %v1780
        %v1782 = vextract.high.u32 %v1780
        %v1783 = vmul.u32.u64.compose %v1779, %v1774
        %v1784 = vextract.low.u32 %v1783
        %v1785 = vextract.high.u32 %v1783
        %v1786 = vmul.u32 %v1779, %v1770
        %v1787 = vadd.s32 %v1782, %v1784
        %vm1788 = vc.u32 %v1782, %v1784
        %v1789 = vadd.s32 %v1785, 1
        %v1790 = vsel %vm1788, %v1789, %v1785
        %v1791 = vadd.s32 %v1786, %v1790
        %v1792 = vadd.s32 %v1791, 536870912
        %v1793 = vshrl.u32 %v1792, 30
        %v1794 = vshll.u32 %v1793, 30
        %v1795 = vsub.s32 %v1791, %v1794
        %vm1796 = vcmp.lt.s32.totalorder %v1795, 0
        %v1797 = vsub.s32 0, %v1795
        %v1798 = vsel %vm1796, %v1797, %v1795
        %v1799 = vclz %v1798
        %v1800 = vsub.s32 %v1799, 2
        %vm1801 = vcmp.gt.s32.totalorder 0, %v1800
        %v1802 = vsel %vm1801, 0, %v1800
        %v1803 = vsub.s32 32, %v1802
        %v1804 = vshll.u32 %v1795, %v1802
        %v1805 = vshrl.u32 %v1787, %v1803
        %v1806 = vor.u32 %v1804, %v1805
        %v1807 = vsub.s32 4294967266, %v1802
        %v1808 = vadd.s32 %v1807, 127
        %v1809 = vshll.u32 %v1808, 23
        %v1810 = vor.u32 4788187, %v1809
        %v1811 = vand.u32 2147483647, %v1810
        %v1813 = vcvt.s32.f32 %v1806
        %v1814 = vmul.f32 %v1813, %v1811
        %v1815 = vxor.u32 %v1814, 2147483648
        %v1816 = vsel %vm1733, %v1815, %v1814
        %v1817 = vsub.s32 4, %v1793
        %v1818 = vsel %vm1733, %v1817, %v1793
        %v1819 = vsel %vm1732, %v479, %v1816
        %v1820 = vsel %vm1732, 0, %v1818
        %v1821 = vcosq.f32.pop %v1819
        %v1822 = vsinq.f32.pop %v1819
        %vm1823 = vweird.f32 %v479
        %v1824 = vadd.s32 %v1820, 3
        %v1825 = vand.u32 %v1824, 3
        %vm1826 = vcmp.lt.s32.totalorder %v1825, 2
        %vm1827 = vcmp.eq.s32.totalorder %v1825, 0
        %v1828 = vxor.u32 %v1822, 2147483648
        %v1829 = vsel %vm1827, %v1821, %v1828
        %vm1830 = vcmp.eq.s32.totalorder %v1825, 2
        %v1831 = vxor.u32 %v1821, 2147483648
        %v1832 = vsel %vm1830, %v1831, %v1822
        %v1833 = vsel %vm1826, %v1829, %v1832
        %v1834 = vsel %vm1823, nan, %v1833
        %v1835 = vand.u32 2147483647, %v480
        %vm1836 = vcmp.le.f32.partialorder %v1835, 0.7853982
        %vm1837 = vcmp.lt.s32.totalorder %v480, 0
        %v1838 = vand.u32 %v480, 2139095040
        %v1839 = vshrl.u32 %v1838, 23
        %v1840 = vsub.s32 %v1839, 127
        %v1841 = vand.u32 2147483647, %v480
        %v1842 = vand.u32 %v1841, 8388607
        %v1843 = vor.u32 %v1842, 8388608
        %v1844 = vsub.s32 0, %v1843
        %v1845 = vadd.s32 %v1840, 1
        %vm1846 = vcmp.gt.s32.totalorder %v1845, 0
        %v1847 = vsel %vm1846, %v1845, 0
        %v1848 = vshrl.u32 %v1847, 5
        %v1849 = vand.u32 %v1847, 31
        %v1850 = vsub.s32 32, %v1849
        %v1851 = vshrl.u32 683565275, %v1850
        %v1852 = vshll.u32 683565275, %v1849
        %v1853 = vshrl.u32 2475754826, %v1850
        %v1854 = vor.u32 %v1852, %v1853
        %v1855 = vshll.u32 2475754826, %v1849
        %v1856 = vshrl.u32 2131351028, %v1850
        %v1857 = vor.u32 %v1855, %v1856
        %v1858 = vshll.u32 2131351028, %v1849
        %v1859 = vshrl.u32 2102212464, %v1850
        %v1860 = vor.u32 %v1858, %v1859
        %v1861 = vshll.u32 2102212464, %v1849
        %v1862 = vshrl.u32 920167782, %v1850
        %v1863 = vor.u32 %v1861, %v1862
        %v1864 = vshll.u32 920167782, %v1849
        %v1865 = vshrl.u32 1326507024, %v1850
        %v1866 = vor.u32 %v1864, %v1865
        %vm1867 = vcmp.lt.s32.totalorder %v1848, 1
        %vm1868 = vcmp.lt.s32.totalorder %v1848, 2
        %vm1869 = vcmp.lt.s32.totalorder %v1848, 3
        %vm1870 = vcmp.lt.s32.totalorder %v1848, 4
        %v1871 = vsel %vm1867, %v1851, %v1854
        %v1872 = vsel %vm1870, %v1860, 2102212464
        %v1873 = vsel %vm1869, %v1857, %v1872
        %v1874 = vsel %vm1868, %v1871, %v1873
        %v1875 = vsel %vm1867, %v1854, %v1857
        %v1876 = vsel %vm1870, %v1863, 920167782
        %v1877 = vsel %vm1869, %v1860, %v1876
        %v1878 = vsel %vm1868, %v1875, %v1877
        %v1879 = vsel %vm1867, %v1857, %v1860
        %v1880 = vsel %vm1870, %v1866, 1326507024
        %v1881 = vsel %vm1869, %v1863, %v1880
        %v1882 = vsel %vm1868, %v1879, %v1881
        %v1883 = vshll.u32 %v1843, 8
        %v1884 = vmul.u32.u64.compose %v1883, %v1882
        %v1885 = vextract.low.u32 %v1884
        %v1886 = vextract.high.u32 %v1884
        %v1887 = vmul.u32.u64.compose %v1883, %v1878
        %v1888 = vextract.low.u32 %v1887
        %v1889 = vextract.high.u32 %v1887
        %v1890 = vmul.u32 %v1883, %v1874
        %v1891 = vadd.s32 %v1886, %v1888
        %vm1892 = vc.u32 %v1886, %v1888
        %v1893 = vadd.s32 %v1889, 1
        %v1894 = vsel %vm1892, %v1893, %v1889
        %v1895 = vadd.s32 %v1890, %v1894
        %v1896 = vadd.s32 %v1895, 536870912
        %v1897 = vshrl.u32 %v1896, 30
        %v1898 = vshll.u32 %v1897, 30
        %v1899 = vsub.s32 %v1895, %v1898
        %vm1900 = vcmp.lt.s32.totalorder %v1899, 0
        %v1901 = vsub.s32 0, %v1899
        %v1902 = vsel %vm1900, %v1901, %v1899
        %v1903 = vclz %v1902
        %v1904 = vsub.s32 %v1903, 2
        %vm1905 = vcmp.gt.s32.totalorder 0, %v1904
        %v1906 = vsel %vm1905, 0, %v1904
        %v1907 = vsub.s32 32, %v1906
        %v1908 = vshll.u32 %v1899, %v1906
        %v1909 = vshrl.u32 %v1891, %v1907
        %v1910 = vor.u32 %v1908, %v1909
        %v1911 = vsub.s32 4294967266, %v1906
        %v1912 = vadd.s32 %v1911, 127
        %v1913 = vshll.u32 %v1912, 23
        %v1914 = vor.u32 4788187, %v1913
        %v1915 = vand.u32 2147483647, %v1914
        %v1917 = vcvt.s32.f32 %v1910
        %v1918 = vmul.f32 %v1917, %v1915
        %v1919 = vxor.u32 %v1918, 2147483648
        %v1920 = vsel %vm1837, %v1919, %v1918
        %v1921 = vsub.s32 4, %v1897
        %v1922 = vsel %vm1837, %v1921, %v1897
        %v1923 = vsel %vm1836, %v480, %v1920
        %v1924 = vsel %vm1836, 0, %v1922
        %v1925 = vcosq.f32.pop %v1923
        %v1926 = vsinq.f32.pop %v1923
        %vm1927 = vweird.f32 %v480
        %v1928 = vadd.s32 %v1924, 3
        %v1929 = vand.u32 %v1928, 3
        %vm1930 = vcmp.lt.s32.totalorder %v1929, 2
        %vm1931 = vcmp.eq.s32.totalorder %v1929, 0
        %v1932 = vxor.u32 %v1926, 2147483648
        %v1933 = vsel %vm1931, %v1925, %v1932
        %vm1934 = vcmp.eq.s32.totalorder %v1929, 2
        %v1935 = vxor.u32 %v1925, 2147483648
        %v1936 = vsel %vm1934, %v1935, %v1926
        %v1937 = vsel %vm1930, %v1933, %v1936
        %v1938 = vsel %vm1927, nan, %v1937
        %v1939 = vand.u32 2147483647, %v481
        %vm1940 = vcmp.le.f32.partialorder %v1939, 0.7853982
        %vm1941 = vcmp.lt.s32.totalorder %v481, 0
        %v1942 = vand.u32 %v481, 2139095040
        %v1943 = vshrl.u32 %v1942, 23
        %v1944 = vsub.s32 %v1943, 127
        %v1945 = vand.u32 2147483647, %v481
        %v1946 = vand.u32 %v1945, 8388607
        %v1947 = vor.u32 %v1946, 8388608
        %v1948 = vsub.s32 0, %v1947
        %v1949 = vadd.s32 %v1944, 1
        %vm1950 = vcmp.gt.s32.totalorder %v1949, 0
        %v1951 = vsel %vm1950, %v1949, 0
        %v1952 = vshrl.u32 %v1951, 5
        %v1953 = vand.u32 %v1951, 31
        %v1954 = vsub.s32 32, %v1953
        %v1955 = vshrl.u32 683565275, %v1954
        %v1956 = vshll.u32 683565275, %v1953
        %v1957 = vshrl.u32 2475754826, %v1954
        %v1958 = vor.u32 %v1956, %v1957
        %v1959 = vshll.u32 2475754826, %v1953
        %v1960 = vshrl.u32 2131351028, %v1954
        %v1961 = vor.u32 %v1959, %v1960
        %v1962 = vshll.u32 2131351028, %v1953
        %v1963 = vshrl.u32 2102212464, %v1954
        %v1964 = vor.u32 %v1962, %v1963
        %v1965 = vshll.u32 2102212464, %v1953
        %v1966 = vshrl.u32 920167782, %v1954
        %v1967 = vor.u32 %v1965, %v1966
        %v1968 = vshll.u32 920167782, %v1953
        %v1969 = vshrl.u32 1326507024, %v1954
        %v1970 = vor.u32 %v1968, %v1969
        %vm1971 = vcmp.lt.s32.totalorder %v1952, 1
        %vm1972 = vcmp.lt.s32.totalorder %v1952, 2
        %vm1973 = vcmp.lt.s32.totalorder %v1952, 3
        %vm1974 = vcmp.lt.s32.totalorder %v1952, 4
        %v1975 = vsel %vm1971, %v1955, %v1958
        %v1976 = vsel %vm1974, %v1964, 2102212464
        %v1977 = vsel %vm1973, %v1961, %v1976
        %v1978 = vsel %vm1972, %v1975, %v1977
        %v1979 = vsel %vm1971, %v1958, %v1961
        %v1980 = vsel %vm1974, %v1967, 920167782
        %v1981 = vsel %vm1973, %v1964, %v1980
        %v1982 = vsel %vm1972, %v1979, %v1981
        %v1983 = vsel %vm1971, %v1961, %v1964
        %v1984 = vsel %vm1974, %v1970, 1326507024
        %v1985 = vsel %vm1973, %v1967, %v1984
        %v1986 = vsel %vm1972, %v1983, %v1985
        %v1987 = vshll.u32 %v1947, 8
        %v1988 = vmul.u32.u64.compose %v1987, %v1986
        %v1989 = vextract.low.u32 %v1988
        %v1990 = vextract.high.u32 %v1988
        %v1991 = vmul.u32.u64.compose %v1987, %v1982
        %v1992 = vextract.low.u32 %v1991
        %v1993 = vextract.high.u32 %v1991
        %v1994 = vmul.u32 %v1987, %v1978
        %v1995 = vadd.s32 %v1990, %v1992
        %vm1996 = vc.u32 %v1990, %v1992
        %v1997 = vadd.s32 %v1993, 1
        %v1998 = vsel %vm1996, %v1997, %v1993
        %v1999 = vadd.s32 %v1994, %v1998
        %v2000 = vadd.s32 %v1999, 536870912
        %v2001 = vshrl.u32 %v2000, 30
        %v2002 = vshll.u32 %v2001, 30
        %v2003 = vsub.s32 %v1999, %v2002
        %vm2004 = vcmp.lt.s32.totalorder %v2003, 0
        %v2005 = vsub.s32 0, %v2003
        %v2006 = vsel %vm2004, %v2005, %v2003
        %v2007 = vclz %v2006
        %v2008 = vsub.s32 %v2007, 2
        %vm2009 = vcmp.gt.s32.totalorder 0, %v2008
        %v2010 = vsel %vm2009, 0, %v2008
        %v2011 = vsub.s32 32, %v2010
        %v2012 = vshll.u32 %v2003, %v2010
        %v2013 = vshrl.u32 %v1995, %v2011
        %v2014 = vor.u32 %v2012, %v2013
        %v2015 = vsub.s32 4294967266, %v2010
        %v2016 = vadd.s32 %v2015, 127
        %v2017 = vshll.u32 %v2016, 23
        %v2018 = vor.u32 4788187, %v2017
        %v2019 = vand.u32 2147483647, %v2018
        %v2021 = vcvt.s32.f32 %v2014
        %v2022 = vmul.f32 %v2021, %v2019
        %v2023 = vxor.u32 %v2022, 2147483648
        %v2024 = vsel %vm1941, %v2023, %v2022
        %v2025 = vsub.s32 4, %v2001
        %v2026 = vsel %vm1941, %v2025, %v2001
        %v2027 = vsel %vm1940, %v481, %v2024
        %v2028 = vsel %vm1940, 0, %v2026
        %v2029 = vcosq.f32.pop %v2027
        %v2030 = vsinq.f32.pop %v2027
        %vm2031 = vweird.f32 %v481
        %v2032 = vadd.s32 %v2028, 3
        %v2033 = vand.u32 %v2032, 3
        %vm2034 = vcmp.lt.s32.totalorder %v2033, 2
        %vm2035 = vcmp.eq.s32.totalorder %v2033, 0
        %v2036 = vxor.u32 %v2030, 2147483648
        %v2037 = vsel %vm2035, %v2029, %v2036
        %vm2038 = vcmp.eq.s32.totalorder %v2033, 2
        %v2039 = vxor.u32 %v2029, 2147483648
        %v2040 = vsel %vm2038, %v2039, %v2030
        %v2041 = vsel %vm2034, %v2037, %v2040
        %v2042 = vsel %vm2031, nan, %v2041
        %v2043 = vand.u32 2147483647, %v482
        %vm2044 = vcmp.le.f32.partialorder %v2043, 0.7853982
        %vm2045 = vcmp.lt.s32.totalorder %v482, 0
        %v2046 = vand.u32 %v482, 2139095040
        %v2047 = vshrl.u32 %v2046, 23
        %v2048 = vsub.s32 %v2047, 127
        %v2049 = vand.u32 2147483647, %v482
        %v2050 = vand.u32 %v2049, 8388607
        %v2051 = vor.u32 %v2050, 8388608
        %v2052 = vsub.s32 0, %v2051
        %v2053 = vadd.s32 %v2048, 1
        %vm2054 = vcmp.gt.s32.totalorder %v2053, 0
        %v2055 = vsel %vm2054, %v2053, 0
        %v2056 = vshrl.u32 %v2055, 5
        %v2057 = vand.u32 %v2055, 31
        %v2058 = vsub.s32 32, %v2057
        %v2059 = vshrl.u32 683565275, %v2058
        %v2060 = vshll.u32 683565275, %v2057
        %v2061 = vshrl.u32 2475754826, %v2058
        %v2062 = vor.u32 %v2060, %v2061
        %v2063 = vshll.u32 2475754826, %v2057
        %v2064 = vshrl.u32 2131351028, %v2058
        %v2065 = vor.u32 %v2063, %v2064
        %v2066 = vshll.u32 2131351028, %v2057
        %v2067 = vshrl.u32 2102212464, %v2058
        %v2068 = vor.u32 %v2066, %v2067
        %v2069 = vshll.u32 2102212464, %v2057
        %v2070 = vshrl.u32 920167782, %v2058
        %v2071 = vor.u32 %v2069, %v2070
        %v2072 = vshll.u32 920167782, %v2057
        %v2073 = vshrl.u32 1326507024, %v2058
        %v2074 = vor.u32 %v2072, %v2073
        %vm2075 = vcmp.lt.s32.totalorder %v2056, 1
        %vm2076 = vcmp.lt.s32.totalorder %v2056, 2
        %vm2077 = vcmp.lt.s32.totalorder %v2056, 3
        %vm2078 = vcmp.lt.s32.totalorder %v2056, 4
        %v2079 = vsel %vm2075, %v2059, %v2062
        %v2080 = vsel %vm2078, %v2068, 2102212464
        %v2081 = vsel %vm2077, %v2065, %v2080
        %v2082 = vsel %vm2076, %v2079, %v2081
        %v2083 = vsel %vm2075, %v2062, %v2065
        %v2084 = vsel %vm2078, %v2071, 920167782
        %v2085 = vsel %vm2077, %v2068, %v2084
        %v2086 = vsel %vm2076, %v2083, %v2085
        %v2087 = vsel %vm2075, %v2065, %v2068
        %v2088 = vsel %vm2078, %v2074, 1326507024
        %v2089 = vsel %vm2077, %v2071, %v2088
        %v2090 = vsel %vm2076, %v2087, %v2089
        %v2091 = vshll.u32 %v2051, 8
        %v2092 = vmul.u32.u64.compose %v2091, %v2090
        %v2093 = vextract.low.u32 %v2092
        %v2094 = vextract.high.u32 %v2092
        %v2095 = vmul.u32.u64.compose %v2091, %v2086
        %v2096 = vextract.low.u32 %v2095
        %v2097 = vextract.high.u32 %v2095
        %v2098 = vmul.u32 %v2091, %v2082
        %v2099 = vadd.s32 %v2094, %v2096
        %vm2100 = vc.u32 %v2094, %v2096
        %v2101 = vadd.s32 %v2097, 1
        %v2102 = vsel %vm2100, %v2101, %v2097
        %v2103 = vadd.s32 %v2098, %v2102
        %v2104 = vadd.s32 %v2103, 536870912
        %v2105 = vshrl.u32 %v2104, 30
        %v2106 = vshll.u32 %v2105, 30
        %v2107 = vsub.s32 %v2103, %v2106
        %vm2108 = vcmp.lt.s32.totalorder %v2107, 0
        %v2109 = vsub.s32 0, %v2107
        %v2110 = vsel %vm2108, %v2109, %v2107
        %v2111 = vclz %v2110
        %v2112 = vsub.s32 %v2111, 2
        %vm2113 = vcmp.gt.s32.totalorder 0, %v2112
        %v2114 = vsel %vm2113, 0, %v2112
        %v2115 = vsub.s32 32, %v2114
        %v2116 = vshll.u32 %v2107, %v2114
        %v2117 = vshrl.u32 %v2099, %v2115
        %v2118 = vor.u32 %v2116, %v2117
        %v2119 = vsub.s32 4294967266, %v2114
        %v2120 = vadd.s32 %v2119, 127
        %v2121 = vshll.u32 %v2120, 23
        %v2122 = vor.u32 4788187, %v2121
        %v2123 = vand.u32 2147483647, %v2122
        %v2125 = vcvt.s32.f32 %v2118
        %v2126 = vmul.f32 %v2125, %v2123
        %v2127 = vxor.u32 %v2126, 2147483648
        %v2128 = vsel %vm2045, %v2127, %v2126
        %v2129 = vsub.s32 4, %v2105
        %v2130 = vsel %vm2045, %v2129, %v2105
        %v2131 = vsel %vm2044, %v482, %v2128
        %v2132 = vsel %vm2044, 0, %v2130
        %v2133 = vcosq.f32.pop %v2131
        %v2134 = vsinq.f32.pop %v2131
        %vm2135 = vweird.f32 %v482
        %v2136 = vadd.s32 %v2132, 3
        %v2137 = vand.u32 %v2136, 3
        %vm2138 = vcmp.lt.s32.totalorder %v2137, 2
        %vm2139 = vcmp.eq.s32.totalorder %v2137, 0
        %v2140 = vxor.u32 %v2134, 2147483648
        %v2141 = vsel %vm2139, %v2133, %v2140
        %vm2142 = vcmp.eq.s32.totalorder %v2137, 2
        %v2143 = vxor.u32 %v2133, 2147483648
        %v2144 = vsel %vm2142, %v2143, %v2134
        %v2145 = vsel %vm2138, %v2141, %v2144
        %v2146 = vsel %vm2135, nan, %v2145
        %v2147 = vld [vmem:[%s3] sm:$0xff]
        %v2148 = vld [vmem:[%s3 + $0x8] sm:$0xff]
        %v2149 = vld [vmem:[%s3 + $0x10] sm:$0xff]
        %v2150 = vld [vmem:[%s3 + $0x18] sm:$0xff]
        %v2151 = vld [vmem:[%s4] sm:$0xff]
        %v2152 = vld [vmem:[%s4 + $0x8] sm:$0xff]
        %v2153 = vld [vmem:[%s4 + $0x10] sm:$0xff]
        %v2154 = vld [vmem:[%s4 + $0x18] sm:$0xff]
        %2156 = vset.pattern.permute.xlu0 0
        %2157 = vperm.xlu0 %2156, %v2151
        %v2158 = vpop.permute.xlu0 %2157
        %2161 = vset.pattern.permute.xlu0 0
        %2162 = vperm.xlu0 %2161, %v2152
        %v2163 = vpop.permute.xlu0 %2162
        %2166 = vset.pattern.permute.xlu0 0
        %2167 = vperm.xlu0 %2166, %v2153
        %v2168 = vpop.permute.xlu0 %2167
        %2171 = vset.pattern.permute.xlu0 0
        %2172 = vperm.xlu0 %2171, %v2154
        %v2173 = vpop.permute.xlu0 %2172
        %vm2175 = vcmask 261120
        %v2177 = vsel %vm2175, %v2147, 0
        %v2180 = vsel %vm2175, %v2148, 0
        %v2183 = vsel %vm2175, %v2149, 0
        %v2186 = vsel %vm2175, %v2150, 0
        %2188 = vmatprep.subr.mxu0 %v690
        %2189 = vmatpush1.msra.mxu0 %v586
        %2190 = vmatprep.subr.mxu0 %v1106
        %2191 = vmatpush1.msra.mxu0 %v1002
        %2192 = vmatprep.subr.mxu0 %v1522
        %2193 = vmatpush1.msra.mxu0 %v1418
        %2194 = vmatprep.subr.mxu0 %v1938
        %2195 = vmatpush1.msra.mxu0 %v1834
        %2196 = vmatprep.subr.mxu0 0.0
        %2197 = vmatpush1.msra.mxu0 0.0
        %2198 = vmatprep.subr.mxu0 0.0
        %2199 = vmatpush1.msra.mxu0 0.0
        %2200 = vmatprep.subr.mxu0 0.0
        %2201 = vmatpush1.msra.mxu0 0.0
        %2202 = vmatprep.subr.mxu0 0.0
        %2203 = vmatpush1.msra.mxu0 0.0
        %2204 = vmatprep.subr.mxu0 0.0
        %2205 = vmatpush1.msra.mxu0 0.0
        %2206 = vmatprep.subr.mxu0 0.0
        %2207 = vmatpush1.msra.mxu0 0.0
        %2208 = vmatprep.subr.mxu0 0.0
        %2209 = vmatpush1.msra.mxu0 0.0
        %2210 = vmatprep.subr.mxu0 0.0
        %2211 = vmatpush1.msra.mxu0 0.0
        %2212 = vmatprep.subr.mxu0 0.0
        %2213 = vmatpush1.msra.mxu0 0.0
        %2214 = vmatprep.subr.mxu0 0.0
        %2215 = vmatpush1.msra.mxu0 0.0
        %2216 = vmatprep.subr.mxu0 0.0
        %2217 = vmatpush1.msra.mxu0 0.0
        %2218 = vmatprep.subr.mxu0 0.0
        %2219 = vmatpush1.msra.mxu0 0.0
        %2220 = vmatprep.subr.mxu0 0.0
        %2221 = vmatpush1.msra.mxu0 0.0
        %2222 = vmatprep.subr.mxu0 0.0
        %2223 = vmatpush1.msra.mxu0 0.0
        %2224 = vmatprep.subr.mxu0 0.0
        %2225 = vmatpush1.msra.mxu0 0.0
        %2226 = vmatprep.subr.mxu0 0.0
        %2227 = vmatpush1.msra.mxu0 0.0
        %2228 = vmatprep.subr.mxu0 0.0
        %2229 = vmatpush1.msra.mxu0 0.0
        %2230 = vmatprep.subr.mxu0 0.0
        %2231 = vmatpush1.msra.mxu0 0.0
        %2232 = vmatprep.subr.mxu0 0.0
        %2233 = vmatpush1.msra.mxu0 0.0
        %2234 = vmatprep.subr.mxu0 0.0
        %2235 = vmatpush1.msra.mxu0 0.0
        %2236 = vmatprep.subr.mxu0 0.0
        %2237 = vmatpush1.msra.mxu0 0.0
        %2238 = vmatprep.subr.mxu0 0.0
        %2239 = vmatpush1.msra.mxu0 0.0
        %2240 = vmatprep.subr.mxu0 0.0
        %2241 = vmatpush1.msra.mxu0 0.0
        %2242 = vmatprep.subr.mxu0 0.0
        %2243 = vmatpush1.msra.mxu0 0.0
        %2244 = vmatprep.subr.mxu0 0.0
        %2245 = vmatpush1.msra.mxu0 0.0
        %2246 = vmatprep.subr.mxu0 0.0
        %2247 = vmatpush1.msra.mxu0 0.0
        %2248 = vmatprep.subr.mxu0 0.0
        %2249 = vmatpush1.msra.mxu0 0.0
        %2250 = vmatprep.subr.mxu0 0.0
        %2251 = vmatpush1.msra.mxu0 0.0
        %2252 = vmatprep.mubr.f32.mxu0 0.0
        %2253 = vmatmul.mubr.f32.gmra.mrb[0].mxu0 %v2177
        %v2254 = vpop.f32.mrb[0].mxu0
        %v2255 = vadd.f32 %v2158, %v2254
        %v2256 = vpop.f32.mrb[0].mxu0
        %v2257 = vadd.f32 %v2158, %v2256
        %2258 = vmatprep.mubr.f32.mxu0 0.0
        %2259 = vmatmul.mubr.f32.gmra.mrb[0].mxu0 %v2180
        %v2260 = vpop.f32.mrb[0].mxu0
        %v2261 = vadd.f32 %v2163, %v2260
        %v2262 = vpop.f32.mrb[0].mxu0
        %v2263 = vadd.f32 %v2163, %v2262
        %2264 = vmatprep.mubr.f32.mxu0 0.0
        %2265 = vmatmul.mubr.f32.gmra.mrb[0].mxu0 %v2183
        %v2266 = vpop.f32.mrb[0].mxu0
        %v2267 = vadd.f32 %v2168, %v2266
        %v2268 = vpop.f32.mrb[0].mxu0
        %v2269 = vadd.f32 %v2168, %v2268
        %2270 = vmatprep.mubr.f32.mxu0 0.0
        %2271 = vmatmul.mubr.f32.gmra.mrb[0].mxu0 %v2186
        %v2272 = vpop.f32.mrb[0].mxu0
        %v2273 = vadd.f32 %v2173, %v2272
        %v2274 = vpop.f32.mrb[0].mxu0
        %v2275 = vadd.f32 %v2173, %v2274
        %2276 = vdwg.mxu0
        %2277 = vmatprep.subr.mxu0 %v898
        %2278 = vmatpush1.msra.mxu0 %v794
        %2279 = vmatprep.subr.mxu0 %v1314
        %2280 = vmatpush1.msra.mxu0 %v1210
        %2281 = vmatprep.subr.mxu0 %v1730
        %2282 = vmatpush1.msra.mxu0 %v1626
        %2283 = vmatprep.subr.mxu0 %v2146
        %2284 = vmatpush1.msra.mxu0 %v2042
        %2285 = vmatprep.subr.mxu0 0.0
        %2286 = vmatpush1.msra.mxu0 0.0
        %2287 = vmatprep.subr.mxu0 0.0
        %2288 = vmatpush1.msra.mxu0 0.0
        %2289 = vmatprep.subr.mxu0 0.0
        %2290 = vmatpush1.msra.mxu0 0.0
        %2291 = vmatprep.subr.mxu0 0.0
        %2292 = vmatpush1.msra.mxu0 0.0
        %2293 = vmatprep.subr.mxu0 0.0
        %2294 = vmatpush1.msra.mxu0 0.0
        %2295 = vmatprep.subr.mxu0 0.0
        %2296 = vmatpush1.msra.mxu0 0.0
        %2297 = vmatprep.subr.mxu0 0.0
        %2298 = vmatpush1.msra.mxu0 0.0
        %2299 = vmatprep.subr.mxu0 0.0
        %2300 = vmatpush1.msra.mxu0 0.0
        %2301 = vmatprep.subr.mxu0 0.0
        %2302 = vmatpush1.msra.mxu0 0.0
        %2303 = vmatprep.subr.mxu0 0.0
        %2304 = vmatpush1.msra.mxu0 0.0
        %2305 = vmatprep.subr.mxu0 0.0
        %2306 = vmatpush1.msra.mxu0 0.0
        %2307 = vmatprep.subr.mxu0 0.0
        %2308 = vmatpush1.msra.mxu0 0.0
        %2309 = vmatprep.subr.mxu0 0.0
        %2310 = vmatpush1.msra.mxu0 0.0
        %2311 = vmatprep.subr.mxu0 0.0
        %2312 = vmatpush1.msra.mxu0 0.0
        %2313 = vmatprep.subr.mxu0 0.0
        %2314 = vmatpush1.msra.mxu0 0.0
        %2315 = vmatprep.subr.mxu0 0.0
        %2316 = vmatpush1.msra.mxu0 0.0
        %2317 = vmatprep.subr.mxu0 0.0
        %2318 = vmatpush1.msra.mxu0 0.0
        %2319 = vmatprep.subr.mxu0 0.0
        %2320 = vmatpush1.msra.mxu0 0.0
        %2321 = vmatprep.subr.mxu0 0.0
        %2322 = vmatpush1.msra.mxu0 0.0
        %2323 = vmatprep.subr.mxu0 0.0
        %2324 = vmatpush1.msra.mxu0 0.0
        %2325 = vmatprep.subr.mxu0 0.0
        %2326 = vmatpush1.msra.mxu0 0.0
        %2327 = vmatprep.subr.mxu0 0.0
        %2328 = vmatpush1.msra.mxu0 0.0
        %2329 = vmatprep.subr.mxu0 0.0
        %2330 = vmatpush1.msra.mxu0 0.0
        %2331 = vmatprep.subr.mxu0 0.0
        %2332 = vmatpush1.msra.mxu0 0.0
        %2333 = vmatprep.subr.mxu0 0.0
        %2334 = vmatpush1.msra.mxu0 0.0
        %2335 = vmatprep.subr.mxu0 0.0
        %2336 = vmatpush1.msra.mxu0 0.0
        %2337 = vmatprep.subr.mxu0 0.0
        %2338 = vmatpush1.msra.mxu0 0.0
        %2339 = vmatprep.subr.mxu0 0.0
        %2340 = vmatpush1.msra.mxu0 0.0
        %2341 = vmatprep.mubr.f32.mxu0 0.0
        %2342 = vmatmul.mubr.f32.gmra.mrb[0].mxu0 %v2177
        %v2343 = vpop.f32.mrb[0].mxu0
        %v2344 = vadd.f32 %v2158, %v2343
        %v2345 = vpop.f32.mrb[0].mxu0
        %v2346 = vadd.f32 %v2158, %v2345
        %2347 = vmatprep.mubr.f32.mxu0 0.0
        %2348 = vmatmul.mubr.f32.gmra.mrb[0].mxu0 %v2180
        %v2349 = vpop.f32.mrb[0].mxu0
        %v2350 = vadd.f32 %v2163, %v2349
        %v2351 = vpop.f32.mrb[0].mxu0
        %v2352 = vadd.f32 %v2163, %v2351
        %2353 = vmatprep.mubr.f32.mxu0 0.0
        %2354 = vmatmul.mubr.f32.gmra.mrb[0].mxu0 %v2183
        %v2355 = vpop.f32.mrb[0].mxu0
        %v2356 = vadd.f32 %v2168, %v2355
        %v2357 = vpop.f32.mrb[0].mxu0
        %v2358 = vadd.f32 %v2168, %v2357
        %2359 = vmatprep.mubr.f32.mxu0 0.0
        %2360 = vmatmul.mubr.f32.gmra.mrb[0].mxu0 %v2186
        %v2361 = vpop.f32.mrb[0].mxu0
        %v2362 = vadd.f32 %v2173, %v2361
        %v2363 = vpop.f32.mrb[0].mxu0
        %v2364 = vadd.f32 %v2173, %v2363
        %2365 = vdwg.mxu0
        %v2366 = vand.u32 2147483647, %v2255
        %vm2367 = vcmp.le.f32.partialorder %v2366, 0.7853982
        %vm2368 = vcmp.lt.s32.totalorder %v2255, 0
        %v2369 = vand.u32 %v2255, 2139095040
        %v2370 = vshrl.u32 %v2369, 23
        %v2371 = vsub.s32 %v2370, 127
        %v2372 = vand.u32 2147483647, %v2255
        %v2373 = vand.u32 %v2372, 8388607
        %v2374 = vor.u32 %v2373, 8388608
        %v2375 = vsub.s32 0, %v2374
        %v2376 = vadd.s32 %v2371, 1
        %vm2377 = vcmp.gt.s32.totalorder %v2376, 0
        %v2378 = vsel %vm2377, %v2376, 0
        %v2379 = vshrl.u32 %v2378, 5
        %v2380 = vand.u32 %v2378, 31
        %v2381 = vsub.s32 32, %v2380
        %v2382 = vshrl.u32 683565275, %v2381
        %v2383 = vshll.u32 683565275, %v2380
        %v2384 = vshrl.u32 2475754826, %v2381
        %v2385 = vor.u32 %v2383, %v2384
        %v2386 = vshll.u32 2475754826, %v2380
        %v2387 = vshrl.u32 2131351028, %v2381
        %v2388 = vor.u32 %v2386, %v2387
        %v2389 = vshll.u32 2131351028, %v2380
        %v2390 = vshrl.u32 2102212464, %v2381
        %v2391 = vor.u32 %v2389, %v2390
        %v2392 = vshll.u32 2102212464, %v2380
        %v2393 = vshrl.u32 920167782, %v2381
        %v2394 = vor.u32 %v2392, %v2393
        %v2395 = vshll.u32 920167782, %v2380
        %v2396 = vshrl.u32 1326507024, %v2381
        %v2397 = vor.u32 %v2395, %v2396
        %vm2398 = vcmp.lt.s32.totalorder %v2379, 1
        %vm2399 = vcmp.lt.s32.totalorder %v2379, 2
        %vm2400 = vcmp.lt.s32.totalorder %v2379, 3
        %vm2401 = vcmp.lt.s32.totalorder %v2379, 4
        %v2402 = vsel %vm2398, %v2382, %v2385
        %v2403 = vsel %vm2401, %v2391, 2102212464
        %v2404 = vsel %vm2400, %v2388, %v2403
        %v2405 = vsel %vm2399, %v2402, %v2404
        %v2406 = vsel %vm2398, %v2385, %v2388
        %v2407 = vsel %vm2401, %v2394, 920167782
        %v2408 = vsel %vm2400, %v2391, %v2407
        %v2409 = vsel %vm2399, %v2406, %v2408
        %v2410 = vsel %vm2398, %v2388, %v2391
        %v2411 = vsel %vm2401, %v2397, 1326507024
        %v2412 = vsel %vm2400, %v2394, %v2411
        %v2413 = vsel %vm2399, %v2410, %v2412
        %v2414 = vshll.u32 %v2374, 8
        %v2415 = vmul.u32.u64.compose %v2414, %v2413
        %v2416 = vextract.low.u32 %v2415
        %v2417 = vextract.high.u32 %v2415
        %v2418 = vmul.u32.u64.compose %v2414, %v2409
        %v2419 = vextract.low.u32 %v2418
        %v2420 = vextract.high.u32 %v2418
        %v2421 = vmul.u32 %v2414, %v2405
        %v2422 = vadd.s32 %v2417, %v2419
        %vm2423 = vc.u32 %v2417, %v2419
        %v2424 = vadd.s32 %v2420, 1
        %v2425 = vsel %vm2423, %v2424, %v2420
        %v2426 = vadd.s32 %v2421, %v2425
        %v2427 = vadd.s32 %v2426, 536870912
        %v2428 = vshrl.u32 %v2427, 30
        %v2429 = vshll.u32 %v2428, 30
        %v2430 = vsub.s32 %v2426, %v2429
        %vm2431 = vcmp.lt.s32.totalorder %v2430, 0
        %v2432 = vsub.s32 0, %v2430
        %v2433 = vsel %vm2431, %v2432, %v2430
        %v2434 = vclz %v2433
        %v2435 = vsub.s32 %v2434, 2
        %vm2436 = vcmp.gt.s32.totalorder 0, %v2435
        %v2437 = vsel %vm2436, 0, %v2435
        %v2438 = vsub.s32 32, %v2437
        %v2439 = vshll.u32 %v2430, %v2437
        %v2440 = vshrl.u32 %v2422, %v2438
        %v2441 = vor.u32 %v2439, %v2440
        %v2442 = vsub.s32 4294967266, %v2437
        %v2443 = vadd.s32 %v2442, 127
        %v2444 = vshll.u32 %v2443, 23
        %v2445 = vor.u32 4788187, %v2444
        %v2446 = vand.u32 2147483647, %v2445
        %v2448 = vcvt.s32.f32 %v2441
        %v2449 = vmul.f32 %v2448, %v2446
        %v2450 = vxor.u32 %v2449, 2147483648
        %v2451 = vsel %vm2368, %v2450, %v2449
        %v2452 = vsub.s32 4, %v2428
        %v2453 = vsel %vm2368, %v2452, %v2428
        %v2454 = vsel %vm2367, %v2255, %v2451
        %v2455 = vsel %vm2367, 0, %v2453
        %v2456 = vcosq.f32.pop %v2454
        %v2457 = vsinq.f32.pop %v2454
        %vm2458 = vweird.f32 %v2255
        %v2459 = vadd.s32 %v2455, 3
        %v2460 = vand.u32 %v2459, 3
        %vm2461 = vcmp.lt.s32.totalorder %v2460, 2
        %vm2462 = vcmp.eq.s32.totalorder %v2460, 0
        %v2463 = vxor.u32 %v2457, 2147483648
        %v2464 = vsel %vm2462, %v2456, %v2463
        %vm2465 = vcmp.eq.s32.totalorder %v2460, 2
        %v2466 = vxor.u32 %v2456, 2147483648
        %v2467 = vsel %vm2465, %v2466, %v2457
        %v2468 = vsel %vm2461, %v2464, %v2467
        %v2469 = vsel %vm2458, nan, %v2468
        %v2470 = vand.u32 2147483647, %v2257
        %vm2471 = vcmp.le.f32.partialorder %v2470, 0.7853982
        %vm2472 = vcmp.lt.s32.totalorder %v2257, 0
        %v2473 = vand.u32 %v2257, 2139095040
        %v2474 = vshrl.u32 %v2473, 23
        %v2475 = vsub.s32 %v2474, 127
        %v2476 = vand.u32 2147483647, %v2257
        %v2477 = vand.u32 %v2476, 8388607
        %v2478 = vor.u32 %v2477, 8388608
        %v2479 = vsub.s32 0, %v2478
        %v2480 = vadd.s32 %v2475, 1
        %vm2481 = vcmp.gt.s32.totalorder %v2480, 0
        %v2482 = vsel %vm2481, %v2480, 0
        %v2483 = vshrl.u32 %v2482, 5
        %v2484 = vand.u32 %v2482, 31
        %v2485 = vsub.s32 32, %v2484
        %v2486 = vshrl.u32 683565275, %v2485
        %v2487 = vshll.u32 683565275, %v2484
        %v2488 = vshrl.u32 2475754826, %v2485
        %v2489 = vor.u32 %v2487, %v2488
        %v2490 = vshll.u32 2475754826, %v2484
        %v2491 = vshrl.u32 2131351028, %v2485
        %v2492 = vor.u32 %v2490, %v2491
        %v2493 = vshll.u32 2131351028, %v2484
        %v2494 = vshrl.u32 2102212464, %v2485
        %v2495 = vor.u32 %v2493, %v2494
        %v2496 = vshll.u32 2102212464, %v2484
        %v2497 = vshrl.u32 920167782, %v2485
        %v2498 = vor.u32 %v2496, %v2497
        %v2499 = vshll.u32 920167782, %v2484
        %v2500 = vshrl.u32 1326507024, %v2485
        %v2501 = vor.u32 %v2499, %v2500
        %vm2502 = vcmp.lt.s32.totalorder %v2483, 1
        %vm2503 = vcmp.lt.s32.totalorder %v2483, 2
        %vm2504 = vcmp.lt.s32.totalorder %v2483, 3
        %vm2505 = vcmp.lt.s32.totalorder %v2483, 4
        %v2506 = vsel %vm2502, %v2486, %v2489
        %v2507 = vsel %vm2505, %v2495, 2102212464
        %v2508 = vsel %vm2504, %v2492, %v2507
        %v2509 = vsel %vm2503, %v2506, %v2508
        %v2510 = vsel %vm2502, %v2489, %v2492
        %v2511 = vsel %vm2505, %v2498, 920167782
        %v2512 = vsel %vm2504, %v2495, %v2511
        %v2513 = vsel %vm2503, %v2510, %v2512
        %v2514 = vsel %vm2502, %v2492, %v2495
        %v2515 = vsel %vm2505, %v2501, 1326507024
        %v2516 = vsel %vm2504, %v2498, %v2515
        %v2517 = vsel %vm2503, %v2514, %v2516
        %v2518 = vshll.u32 %v2478, 8
        %v2519 = vmul.u32.u64.compose %v2518, %v2517
        %v2520 = vextract.low.u32 %v2519
        %v2521 = vextract.high.u32 %v2519
        %v2522 = vmul.u32.u64.compose %v2518, %v2513
        %v2523 = vextract.low.u32 %v2522
        %v2524 = vextract.high.u32 %v2522
        %v2525 = vmul.u32 %v2518, %v2509
        %v2526 = vadd.s32 %v2521, %v2523
        %vm2527 = vc.u32 %v2521, %v2523
        %v2528 = vadd.s32 %v2524, 1
        %v2529 = vsel %vm2527, %v2528, %v2524
        %v2530 = vadd.s32 %v2525, %v2529
        %v2531 = vadd.s32 %v2530, 536870912
        %v2532 = vshrl.u32 %v2531, 30
        %v2533 = vshll.u32 %v2532, 30
        %v2534 = vsub.s32 %v2530, %v2533
        %vm2535 = vcmp.lt.s32.totalorder %v2534, 0
        %v2536 = vsub.s32 0, %v2534
        %v2537 = vsel %vm2535, %v2536, %v2534
        %v2538 = vclz %v2537
        %v2539 = vsub.s32 %v2538, 2
        %vm2540 = vcmp.gt.s32.totalorder 0, %v2539
        %v2541 = vsel %vm2540, 0, %v2539
        %v2542 = vsub.s32 32, %v2541
        %v2543 = vshll.u32 %v2534, %v2541
        %v2544 = vshrl.u32 %v2526, %v2542
        %v2545 = vor.u32 %v2543, %v2544
        %v2546 = vsub.s32 4294967266, %v2541
        %v2547 = vadd.s32 %v2546, 127
        %v2548 = vshll.u32 %v2547, 23
        %v2549 = vor.u32 4788187, %v2548
        %v2550 = vand.u32 2147483647, %v2549
        %v2552 = vcvt.s32.f32 %v2545
        %v2553 = vmul.f32 %v2552, %v2550
        %v2554 = vxor.u32 %v2553, 2147483648
        %v2555 = vsel %vm2472, %v2554, %v2553
        %v2556 = vsub.s32 4, %v2532
        %v2557 = vsel %vm2472, %v2556, %v2532
        %v2558 = vsel %vm2471, %v2257, %v2555
        %v2559 = vsel %vm2471, 0, %v2557
        %v2560 = vcosq.f32.pop %v2558
        %v2561 = vsinq.f32.pop %v2558
        %vm2562 = vweird.f32 %v2257
        %v2563 = vadd.s32 %v2559, 3
        %v2564 = vand.u32 %v2563, 3
        %vm2565 = vcmp.lt.s32.totalorder %v2564, 2
        %vm2566 = vcmp.eq.s32.totalorder %v2564, 0
        %v2567 = vxor.u32 %v2561, 2147483648
        %v2568 = vsel %vm2566, %v2560, %v2567
        %vm2569 = vcmp.eq.s32.totalorder %v2564, 2
        %v2570 = vxor.u32 %v2560, 2147483648
        %v2571 = vsel %vm2569, %v2570, %v2561
        %v2572 = vsel %vm2565, %v2568, %v2571
        %v2573 = vsel %vm2562, nan, %v2572
        %v2574 = vand.u32 2147483647, %v2344
        %vm2575 = vcmp.le.f32.partialorder %v2574, 0.7853982
        %vm2576 = vcmp.lt.s32.totalorder %v2344, 0
        %v2577 = vand.u32 %v2344, 2139095040
        %v2578 = vshrl.u32 %v2577, 23
        %v2579 = vsub.s32 %v2578, 127
        %v2580 = vand.u32 2147483647, %v2344
        %v2581 = vand.u32 %v2580, 8388607
        %v2582 = vor.u32 %v2581, 8388608
        %v2583 = vsub.s32 0, %v2582
        %v2584 = vadd.s32 %v2579, 1
        %vm2585 = vcmp.gt.s32.totalorder %v2584, 0
        %v2586 = vsel %vm2585, %v2584, 0
        %v2587 = vshrl.u32 %v2586, 5
        %v2588 = vand.u32 %v2586, 31
        %v2589 = vsub.s32 32, %v2588
        %v2590 = vshrl.u32 683565275, %v2589
        %v2591 = vshll.u32 683565275, %v2588
        %v2592 = vshrl.u32 2475754826, %v2589
        %v2593 = vor.u32 %v2591, %v2592
        %v2594 = vshll.u32 2475754826, %v2588
        %v2595 = vshrl.u32 2131351028, %v2589
        %v2596 = vor.u32 %v2594, %v2595
        %v2597 = vshll.u32 2131351028, %v2588
        %v2598 = vshrl.u32 2102212464, %v2589
        %v2599 = vor.u32 %v2597, %v2598
        %v2600 = vshll.u32 2102212464, %v2588
        %v2601 = vshrl.u32 920167782, %v2589
        %v2602 = vor.u32 %v2600, %v2601
        %v2603 = vshll.u32 920167782, %v2588
        %v2604 = vshrl.u32 1326507024, %v2589
        %v2605 = vor.u32 %v2603, %v2604
        %vm2606 = vcmp.lt.s32.totalorder %v2587, 1
        %vm2607 = vcmp.lt.s32.totalorder %v2587, 2
        %vm2608 = vcmp.lt.s32.totalorder %v2587, 3
        %vm2609 = vcmp.lt.s32.totalorder %v2587, 4
        %v2610 = vsel %vm2606, %v2590, %v2593
        %v2611 = vsel %vm2609, %v2599, 2102212464
        %v2612 = vsel %vm2608, %v2596, %v2611
        %v2613 = vsel %vm2607, %v2610, %v2612
        %v2614 = vsel %vm2606, %v2593, %v2596
        %v2615 = vsel %vm2609, %v2602, 920167782
        %v2616 = vsel %vm2608, %v2599, %v2615
        %v2617 = vsel %vm2607, %v2614, %v2616
        %v2618 = vsel %vm2606, %v2596, %v2599
        %v2619 = vsel %vm2609, %v2605, 1326507024
        %v2620 = vsel %vm2608, %v2602, %v2619
        %v2621 = vsel %vm2607, %v2618, %v2620
        %v2622 = vshll.u32 %v2582, 8
        %v2623 = vmul.u32.u64.compose %v2622, %v2621
        %v2624 = vextract.low.u32 %v2623
        %v2625 = vextract.high.u32 %v2623
        %v2626 = vmul.u32.u64.compose %v2622, %v2617
        %v2627 = vextract.low.u32 %v2626
        %v2628 = vextract.high.u32 %v2626
        %v2629 = vmul.u32 %v2622, %v2613
        %v2630 = vadd.s32 %v2625, %v2627
        %vm2631 = vc.u32 %v2625, %v2627
        %v2632 = vadd.s32 %v2628, 1
        %v2633 = vsel %vm2631, %v2632, %v2628
        %v2634 = vadd.s32 %v2629, %v2633
        %v2635 = vadd.s32 %v2634, 536870912
        %v2636 = vshrl.u32 %v2635, 30
        %v2637 = vshll.u32 %v2636, 30
        %v2638 = vsub.s32 %v2634, %v2637
        %vm2639 = vcmp.lt.s32.totalorder %v2638, 0
        %v2640 = vsub.s32 0, %v2638
        %v2641 = vsel %vm2639, %v2640, %v2638
        %v2642 = vclz %v2641
        %v2643 = vsub.s32 %v2642, 2
        %vm2644 = vcmp.gt.s32.totalorder 0, %v2643
        %v2645 = vsel %vm2644, 0, %v2643
        %v2646 = vsub.s32 32, %v2645
        %v2647 = vshll.u32 %v2638, %v2645
        %v2648 = vshrl.u32 %v2630, %v2646
        %v2649 = vor.u32 %v2647, %v2648
        %v2650 = vsub.s32 4294967266, %v2645
        %v2651 = vadd.s32 %v2650, 127
        %v2652 = vshll.u32 %v2651, 23
        %v2653 = vor.u32 4788187, %v2652
        %v2654 = vand.u32 2147483647, %v2653
        %v2656 = vcvt.s32.f32 %v2649
        %v2657 = vmul.f32 %v2656, %v2654
        %v2658 = vxor.u32 %v2657, 2147483648
        %v2659 = vsel %vm2576, %v2658, %v2657
        %v2660 = vsub.s32 4, %v2636
        %v2661 = vsel %vm2576, %v2660, %v2636
        %v2662 = vsel %vm2575, %v2344, %v2659
        %v2663 = vsel %vm2575, 0, %v2661
        %v2664 = vcosq.f32.pop %v2662
        %v2665 = vsinq.f32.pop %v2662
        %vm2666 = vweird.f32 %v2344
        %v2667 = vadd.s32 %v2663, 3
        %v2668 = vand.u32 %v2667, 3
        %vm2669 = vcmp.lt.s32.totalorder %v2668, 2
        %vm2670 = vcmp.eq.s32.totalorder %v2668, 0
        %v2671 = vxor.u32 %v2665, 2147483648
        %v2672 = vsel %vm2670, %v2664, %v2671
        %vm2673 = vcmp.eq.s32.totalorder %v2668, 2
        %v2674 = vxor.u32 %v2664, 2147483648
        %v2675 = vsel %vm2673, %v2674, %v2665
        %v2676 = vsel %vm2669, %v2672, %v2675
        %v2677 = vsel %vm2666, nan, %v2676
        %v2678 = vand.u32 2147483647, %v2346
        %vm2679 = vcmp.le.f32.partialorder %v2678, 0.7853982
        %vm2680 = vcmp.lt.s32.totalorder %v2346, 0
        %v2681 = vand.u32 %v2346, 2139095040
        %v2682 = vshrl.u32 %v2681, 23
        %v2683 = vsub.s32 %v2682, 127
        %v2684 = vand.u32 2147483647, %v2346
        %v2685 = vand.u32 %v2684, 8388607
        %v2686 = vor.u32 %v2685, 8388608
        %v2687 = vsub.s32 0, %v2686
        %v2688 = vadd.s32 %v2683, 1
        %vm2689 = vcmp.gt.s32.totalorder %v2688, 0
        %v2690 = vsel %vm2689, %v2688, 0
        %v2691 = vshrl.u32 %v2690, 5
        %v2692 = vand.u32 %v2690, 31
        %v2693 = vsub.s32 32, %v2692
        %v2694 = vshrl.u32 683565275, %v2693
        %v2695 = vshll.u32 683565275, %v2692
        %v2696 = vshrl.u32 2475754826, %v2693
        %v2697 = vor.u32 %v2695, %v2696
        %v2698 = vshll.u32 2475754826, %v2692
        %v2699 = vshrl.u32 2131351028, %v2693
        %v2700 = vor.u32 %v2698, %v2699
        %v2701 = vshll.u32 2131351028, %v2692
        %v2702 = vshrl.u32 2102212464, %v2693
        %v2703 = vor.u32 %v2701, %v2702
        %v2704 = vshll.u32 2102212464, %v2692
        %v2705 = vshrl.u32 920167782, %v2693
        %v2706 = vor.u32 %v2704, %v2705
        %v2707 = vshll.u32 920167782, %v2692
        %v2708 = vshrl.u32 1326507024, %v2693
        %v2709 = vor.u32 %v2707, %v2708
        %vm2710 = vcmp.lt.s32.totalorder %v2691, 1
        %vm2711 = vcmp.lt.s32.totalorder %v2691, 2
        %vm2712 = vcmp.lt.s32.totalorder %v2691, 3
        %vm2713 = vcmp.lt.s32.totalorder %v2691, 4
        %v2714 = vsel %vm2710, %v2694, %v2697
        %v2715 = vsel %vm2713, %v2703, 2102212464
        %v2716 = vsel %vm2712, %v2700, %v2715
        %v2717 = vsel %vm2711, %v2714, %v2716
        %v2718 = vsel %vm2710, %v2697, %v2700
        %v2719 = vsel %vm2713, %v2706, 920167782
        %v2720 = vsel %vm2712, %v2703, %v2719
        %v2721 = vsel %vm2711, %v2718, %v2720
        %v2722 = vsel %vm2710, %v2700, %v2703
        %v2723 = vsel %vm2713, %v2709, 1326507024
        %v2724 = vsel %vm2712, %v2706, %v2723
        %v2725 = vsel %vm2711, %v2722, %v2724
        %v2726 = vshll.u32 %v2686, 8
        %v2727 = vmul.u32.u64.compose %v2726, %v2725
        %v2728 = vextract.low.u32 %v2727
        %v2729 = vextract.high.u32 %v2727
        %v2730 = vmul.u32.u64.compose %v2726, %v2721
        %v2731 = vextract.low.u32 %v2730
        %v2732 = vextract.high.u32 %v2730
        %v2733 = vmul.u32 %v2726, %v2717
        %v2734 = vadd.s32 %v2729, %v2731
        %vm2735 = vc.u32 %v2729, %v2731
        %v2736 = vadd.s32 %v2732, 1
        %v2737 = vsel %vm2735, %v2736, %v2732
        %v2738 = vadd.s32 %v2733, %v2737
        %v2739 = vadd.s32 %v2738, 536870912
        %v2740 = vshrl.u32 %v2739, 30
        %v2741 = vshll.u32 %v2740, 30
        %v2742 = vsub.s32 %v2738, %v2741
        %vm2743 = vcmp.lt.s32.totalorder %v2742, 0
        %v2744 = vsub.s32 0, %v2742
        %v2745 = vsel %vm2743, %v2744, %v2742
        %v2746 = vclz %v2745
        %v2747 = vsub.s32 %v2746, 2
        %vm2748 = vcmp.gt.s32.totalorder 0, %v2747
        %v2749 = vsel %vm2748, 0, %v2747
        %v2750 = vsub.s32 32, %v2749
        %v2751 = vshll.u32 %v2742, %v2749
        %v2752 = vshrl.u32 %v2734, %v2750
        %v2753 = vor.u32 %v2751, %v2752
        %v2754 = vsub.s32 4294967266, %v2749
        %v2755 = vadd.s32 %v2754, 127
        %v2756 = vshll.u32 %v2755, 23
        %v2757 = vor.u32 4788187, %v2756
        %v2758 = vand.u32 2147483647, %v2757
        %v2760 = vcvt.s32.f32 %v2753
        %v2761 = vmul.f32 %v2760, %v2758
        %v2762 = vxor.u32 %v2761, 2147483648
        %v2763 = vsel %vm2680, %v2762, %v2761
        %v2764 = vsub.s32 4, %v2740
        %v2765 = vsel %vm2680, %v2764, %v2740
        %v2766 = vsel %vm2679, %v2346, %v2763
        %v2767 = vsel %vm2679, 0, %v2765
        %v2768 = vcosq.f32.pop %v2766
        %v2769 = vsinq.f32.pop %v2766
        %vm2770 = vweird.f32 %v2346
        %v2771 = vadd.s32 %v2767, 3
        %v2772 = vand.u32 %v2771, 3
        %vm2773 = vcmp.lt.s32.totalorder %v2772, 2
        %vm2774 = vcmp.eq.s32.totalorder %v2772, 0
        %v2775 = vxor.u32 %v2769, 2147483648
        %v2776 = vsel %vm2774, %v2768, %v2775
        %vm2777 = vcmp.eq.s32.totalorder %v2772, 2
        %v2778 = vxor.u32 %v2768, 2147483648
        %v2779 = vsel %vm2777, %v2778, %v2769
        %v2780 = vsel %vm2773, %v2776, %v2779
        %v2781 = vsel %vm2770, nan, %v2780
        %v2782 = vand.u32 2147483647, %v2261
        %vm2783 = vcmp.le.f32.partialorder %v2782, 0.7853982
        %vm2784 = vcmp.lt.s32.totalorder %v2261, 0
        %v2785 = vand.u32 %v2261, 2139095040
        %v2786 = vshrl.u32 %v2785, 23
        %v2787 = vsub.s32 %v2786, 127
        %v2788 = vand.u32 2147483647, %v2261
        %v2789 = vand.u32 %v2788, 8388607
        %v2790 = vor.u32 %v2789, 8388608
        %v2791 = vsub.s32 0, %v2790
        %v2792 = vadd.s32 %v2787, 1
        %vm2793 = vcmp.gt.s32.totalorder %v2792, 0
        %v2794 = vsel %vm2793, %v2792, 0
        %v2795 = vshrl.u32 %v2794, 5
        %v2796 = vand.u32 %v2794, 31
        %v2797 = vsub.s32 32, %v2796
        %v2798 = vshrl.u32 683565275, %v2797
        %v2799 = vshll.u32 683565275, %v2796
        %v2800 = vshrl.u32 2475754826, %v2797
        %v2801 = vor.u32 %v2799, %v2800
        %v2802 = vshll.u32 2475754826, %v2796
        %v2803 = vshrl.u32 2131351028, %v2797
        %v2804 = vor.u32 %v2802, %v2803
        %v2805 = vshll.u32 2131351028, %v2796
        %v2806 = vshrl.u32 2102212464, %v2797
        %v2807 = vor.u32 %v2805, %v2806
        %v2808 = vshll.u32 2102212464, %v2796
        %v2809 = vshrl.u32 920167782, %v2797
        %v2810 = vor.u32 %v2808, %v2809
        %v2811 = vshll.u32 920167782, %v2796
        %v2812 = vshrl.u32 1326507024, %v2797
        %v2813 = vor.u32 %v2811, %v2812
        %vm2814 = vcmp.lt.s32.totalorder %v2795, 1
        %vm2815 = vcmp.lt.s32.totalorder %v2795, 2
        %vm2816 = vcmp.lt.s32.totalorder %v2795, 3
        %vm2817 = vcmp.lt.s32.totalorder %v2795, 4
        %v2818 = vsel %vm2814, %v2798, %v2801
        %v2819 = vsel %vm2817, %v2807, 2102212464
        %v2820 = vsel %vm2816, %v2804, %v2819
        %v2821 = vsel %vm2815, %v2818, %v2820
        %v2822 = vsel %vm2814, %v2801, %v2804
        %v2823 = vsel %vm2817, %v2810, 920167782
        %v2824 = vsel %vm2816, %v2807, %v2823
        %v2825 = vsel %vm2815, %v2822, %v2824
        %v2826 = vsel %vm2814, %v2804, %v2807
        %v2827 = vsel %vm2817, %v2813, 1326507024
        %v2828 = vsel %vm2816, %v2810, %v2827
        %v2829 = vsel %vm2815, %v2826, %v2828
        %v2830 = vshll.u32 %v2790, 8
        %v2831 = vmul.u32.u64.compose %v2830, %v2829
        %v2832 = vextract.low.u32 %v2831
        %v2833 = vextract.high.u32 %v2831
        %v2834 = vmul.u32.u64.compose %v2830, %v2825
        %v2835 = vextract.low.u32 %v2834
        %v2836 = vextract.high.u32 %v2834
        %v2837 = vmul.u32 %v2830, %v2821
        %v2838 = vadd.s32 %v2833, %v2835
        %vm2839 = vc.u32 %v2833, %v2835
        %v2840 = vadd.s32 %v2836, 1
        %v2841 = vsel %vm2839, %v2840, %v2836
        %v2842 = vadd.s32 %v2837, %v2841
        %v2843 = vadd.s32 %v2842, 536870912
        %v2844 = vshrl.u32 %v2843, 30
        %v2845 = vshll.u32 %v2844, 30
        %v2846 = vsub.s32 %v2842, %v2845
        %vm2847 = vcmp.lt.s32.totalorder %v2846, 0
        %v2848 = vsub.s32 0, %v2846
        %v2849 = vsel %vm2847, %v2848, %v2846
        %v2850 = vclz %v2849
        %v2851 = vsub.s32 %v2850, 2
        %vm2852 = vcmp.gt.s32.totalorder 0, %v2851
        %v2853 = vsel %vm2852, 0, %v2851
        %v2854 = vsub.s32 32, %v2853
        %v2855 = vshll.u32 %v2846, %v2853
        %v2856 = vshrl.u32 %v2838, %v2854
        %v2857 = vor.u32 %v2855, %v2856
        %v2858 = vsub.s32 4294967266, %v2853
        %v2859 = vadd.s32 %v2858, 127
        %v2860 = vshll.u32 %v2859, 23
        %v2861 = vor.u32 4788187, %v2860
        %v2862 = vand.u32 2147483647, %v2861
        %v2864 = vcvt.s32.f32 %v2857
        %v2865 = vmul.f32 %v2864, %v2862
        %v2866 = vxor.u32 %v2865, 2147483648
        %v2867 = vsel %vm2784, %v2866, %v2865
        %v2868 = vsub.s32 4, %v2844
        %v2869 = vsel %vm2784, %v2868, %v2844
        %v2870 = vsel %vm2783, %v2261, %v2867
        %v2871 = vsel %vm2783, 0, %v2869
        %v2872 = vcosq.f32.pop %v2870
        %v2873 = vsinq.f32.pop %v2870
        %vm2874 = vweird.f32 %v2261
        %v2875 = vadd.s32 %v2871, 3
        %v2876 = vand.u32 %v2875, 3
        %vm2877 = vcmp.lt.s32.totalorder %v2876, 2
        %vm2878 = vcmp.eq.s32.totalorder %v2876, 0
        %v2879 = vxor.u32 %v2873, 2147483648
        %v2880 = vsel %vm2878, %v2872, %v2879
        %vm2881 = vcmp.eq.s32.totalorder %v2876, 2
        %v2882 = vxor.u32 %v2872, 2147483648
        %v2883 = vsel %vm2881, %v2882, %v2873
        %v2884 = vsel %vm2877, %v2880, %v2883
        %v2885 = vsel %vm2874, nan, %v2884
        %v2886 = vand.u32 2147483647, %v2263
        %vm2887 = vcmp.le.f32.partialorder %v2886, 0.7853982
        %vm2888 = vcmp.lt.s32.totalorder %v2263, 0
        %v2889 = vand.u32 %v2263, 2139095040
        %v2890 = vshrl.u32 %v2889, 23
        %v2891 = vsub.s32 %v2890, 127
        %v2892 = vand.u32 2147483647, %v2263
        %v2893 = vand.u32 %v2892, 8388607
        %v2894 = vor.u32 %v2893, 8388608
        %v2895 = vsub.s32 0, %v2894
        %v2896 = vadd.s32 %v2891, 1
        %vm2897 = vcmp.gt.s32.totalorder %v2896, 0
        %v2898 = vsel %vm2897, %v2896, 0
        %v2899 = vshrl.u32 %v2898, 5
        %v2900 = vand.u32 %v2898, 31
        %v2901 = vsub.s32 32, %v2900
        %v2902 = vshrl.u32 683565275, %v2901
        %v2903 = vshll.u32 683565275, %v2900
        %v2904 = vshrl.u32 2475754826, %v2901
        %v2905 = vor.u32 %v2903, %v2904
        %v2906 = vshll.u32 2475754826, %v2900
        %v2907 = vshrl.u32 2131351028, %v2901
        %v2908 = vor.u32 %v2906, %v2907
        %v2909 = vshll.u32 2131351028, %v2900
        %v2910 = vshrl.u32 2102212464, %v2901
        %v2911 = vor.u32 %v2909, %v2910
        %v2912 = vshll.u32 2102212464, %v2900
        %v2913 = vshrl.u32 920167782, %v2901
        %v2914 = vor.u32 %v2912, %v2913
        %v2915 = vshll.u32 920167782, %v2900
        %v2916 = vshrl.u32 1326507024, %v2901
        %v2917 = vor.u32 %v2915, %v2916
        %vm2918 = vcmp.lt.s32.totalorder %v2899, 1
        %vm2919 = vcmp.lt.s32.totalorder %v2899, 2
        %vm2920 = vcmp.lt.s32.totalorder %v2899, 3
        %vm2921 = vcmp.lt.s32.totalorder %v2899, 4
        %v2922 = vsel %vm2918, %v2902, %v2905
        %v2923 = vsel %vm2921, %v2911, 2102212464
        %v2924 = vsel %vm2920, %v2908, %v2923
        %v2925 = vsel %vm2919, %v2922, %v2924
        %v2926 = vsel %vm2918, %v2905, %v2908
        %v2927 = vsel %vm2921, %v2914, 920167782
        %v2928 = vsel %vm2920, %v2911, %v2927
        %v2929 = vsel %vm2919, %v2926, %v2928
        %v2930 = vsel %vm2918, %v2908, %v2911
        %v2931 = vsel %vm2921, %v2917, 1326507024
        %v2932 = vsel %vm2920, %v2914, %v2931
        %v2933 = vsel %vm2919, %v2930, %v2932
        %v2934 = vshll.u32 %v2894, 8
        %v2935 = vmul.u32.u64.compose %v2934, %v2933
        %v2936 = vextract.low.u32 %v2935
        %v2937 = vextract.high.u32 %v2935
        %v2938 = vmul.u32.u64.compose %v2934, %v2929
        %v2939 = vextract.low.u32 %v2938
        %v2940 = vextract.high.u32 %v2938
        %v2941 = vmul.u32 %v2934, %v2925
        %v2942 = vadd.s32 %v2937, %v2939
        %vm2943 = vc.u32 %v2937, %v2939
        %v2944 = vadd.s32 %v2940, 1
        %v2945 = vsel %vm2943, %v2944, %v2940
        %v2946 = vadd.s32 %v2941, %v2945
        %v2947 = vadd.s32 %v2946, 536870912
        %v2948 = vshrl.u32 %v2947, 30
        %v2949 = vshll.u32 %v2948, 30
        %v2950 = vsub.s32 %v2946, %v2949
        %vm2951 = vcmp.lt.s32.totalorder %v2950, 0
        %v2952 = vsub.s32 0, %v2950
        %v2953 = vsel %vm2951, %v2952, %v2950
        %v2954 = vclz %v2953
        %v2955 = vsub.s32 %v2954, 2
        %vm2956 = vcmp.gt.s32.totalorder 0, %v2955
        %v2957 = vsel %vm2956, 0, %v2955
        %v2958 = vsub.s32 32, %v2957
        %v2959 = vshll.u32 %v2950, %v2957
        %v2960 = vshrl.u32 %v2942, %v2958
        %v2961 = vor.u32 %v2959, %v2960
        %v2962 = vsub.s32 4294967266, %v2957
        %v2963 = vadd.s32 %v2962, 127
        %v2964 = vshll.u32 %v2963, 23
        %v2965 = vor.u32 4788187, %v2964
        %v2966 = vand.u32 2147483647, %v2965
        %v2968 = vcvt.s32.f32 %v2961
        %v2969 = vmul.f32 %v2968, %v2966
        %v2970 = vxor.u32 %v2969, 2147483648
        %v2971 = vsel %vm2888, %v2970, %v2969
        %v2972 = vsub.s32 4, %v2948
        %v2973 = vsel %vm2888, %v2972, %v2948
        %v2974 = vsel %vm2887, %v2263, %v2971
        %v2975 = vsel %vm2887, 0, %v2973
        %v2976 = vcosq.f32.pop %v2974
        %v2977 = vsinq.f32.pop %v2974
        %vm2978 = vweird.f32 %v2263
        %v2979 = vadd.s32 %v2975, 3
        %v2980 = vand.u32 %v2979, 3
        %vm2981 = vcmp.lt.s32.totalorder %v2980, 2
        %vm2982 = vcmp.eq.s32.totalorder %v2980, 0
        %v2983 = vxor.u32 %v2977, 2147483648
        %v2984 = vsel %vm2982, %v2976, %v2983
        %vm2985 = vcmp.eq.s32.totalorder %v2980, 2
        %v2986 = vxor.u32 %v2976, 2147483648
        %v2987 = vsel %vm2985, %v2986, %v2977
        %v2988 = vsel %vm2981, %v2984, %v2987
        %v2989 = vsel %vm2978, nan, %v2988
        %v2990 = vand.u32 2147483647, %v2350
        %vm2991 = vcmp.le.f32.partialorder %v2990, 0.7853982
        %vm2992 = vcmp.lt.s32.totalorder %v2350, 0
        %v2993 = vand.u32 %v2350, 2139095040
        %v2994 = vshrl.u32 %v2993, 23
        %v2995 = vsub.s32 %v2994, 127
        %v2996 = vand.u32 2147483647, %v2350
        %v2997 = vand.u32 %v2996, 8388607
        %v2998 = vor.u32 %v2997, 8388608
        %v2999 = vsub.s32 0, %v2998
        %v3000 = vadd.s32 %v2995, 1
        %vm3001 = vcmp.gt.s32.totalorder %v3000, 0
        %v3002 = vsel %vm3001, %v3000, 0
        %v3003 = vshrl.u32 %v3002, 5
        %v3004 = vand.u32 %v3002, 31
        %v3005 = vsub.s32 32, %v3004
        %v3006 = vshrl.u32 683565275, %v3005
        %v3007 = vshll.u32 683565275, %v3004
        %v3008 = vshrl.u32 2475754826, %v3005
        %v3009 = vor.u32 %v3007, %v3008
        %v3010 = vshll.u32 2475754826, %v3004
        %v3011 = vshrl.u32 2131351028, %v3005
        %v3012 = vor.u32 %v3010, %v3011
        %v3013 = vshll.u32 2131351028, %v3004
        %v3014 = vshrl.u32 2102212464, %v3005
        %v3015 = vor.u32 %v3013, %v3014
        %v3016 = vshll.u32 2102212464, %v3004
        %v3017 = vshrl.u32 920167782, %v3005
        %v3018 = vor.u32 %v3016, %v3017
        %v3019 = vshll.u32 920167782, %v3004
        %v3020 = vshrl.u32 1326507024, %v3005
        %v3021 = vor.u32 %v3019, %v3020
        %vm3022 = vcmp.lt.s32.totalorder %v3003, 1
        %vm3023 = vcmp.lt.s32.totalorder %v3003, 2
        %vm3024 = vcmp.lt.s32.totalorder %v3003, 3
        %vm3025 = vcmp.lt.s32.totalorder %v3003, 4
        %v3026 = vsel %vm3022, %v3006, %v3009
        %v3027 = vsel %vm3025, %v3015, 2102212464
        %v3028 = vsel %vm3024, %v3012, %v3027
        %v3029 = vsel %vm3023, %v3026, %v3028
        %v3030 = vsel %vm3022, %v3009, %v3012
        %v3031 = vsel %vm3025, %v3018, 920167782
        %v3032 = vsel %vm3024, %v3015, %v3031
        %v3033 = vsel %vm3023, %v3030, %v3032
        %v3034 = vsel %vm3022, %v3012, %v3015
        %v3035 = vsel %vm3025, %v3021, 1326507024
        %v3036 = vsel %vm3024, %v3018, %v3035
        %v3037 = vsel %vm3023, %v3034, %v3036
        %v3038 = vshll.u32 %v2998, 8
        %v3039 = vmul.u32.u64.compose %v3038, %v3037
        %v3040 = vextract.low.u32 %v3039
        %v3041 = vextract.high.u32 %v3039
        %v3042 = vmul.u32.u64.compose %v3038, %v3033
        %v3043 = vextract.low.u32 %v3042
        %v3044 = vextract.high.u32 %v3042
        %v3045 = vmul.u32 %v3038, %v3029
        %v3046 = vadd.s32 %v3041, %v3043
        %vm3047 = vc.u32 %v3041, %v3043
        %v3048 = vadd.s32 %v3044, 1
        %v3049 = vsel %vm3047, %v3048, %v3044
        %v3050 = vadd.s32 %v3045, %v3049
        %v3051 = vadd.s32 %v3050, 536870912
        %v3052 = vshrl.u32 %v3051, 30
        %v3053 = vshll.u32 %v3052, 30
        %v3054 = vsub.s32 %v3050, %v3053
        %vm3055 = vcmp.lt.s32.totalorder %v3054, 0
        %v3056 = vsub.s32 0, %v3054
        %v3057 = vsel %vm3055, %v3056, %v3054
        %v3058 = vclz %v3057
        %v3059 = vsub.s32 %v3058, 2
        %vm3060 = vcmp.gt.s32.totalorder 0, %v3059
        %v3061 = vsel %vm3060, 0, %v3059
        %v3062 = vsub.s32 32, %v3061
        %v3063 = vshll.u32 %v3054, %v3061
        %v3064 = vshrl.u32 %v3046, %v3062
        %v3065 = vor.u32 %v3063, %v3064
        %v3066 = vsub.s32 4294967266, %v3061
        %v3067 = vadd.s32 %v3066, 127
        %v3068 = vshll.u32 %v3067, 23
        %v3069 = vor.u32 4788187, %v3068
        %v3070 = vand.u32 2147483647, %v3069
        %v3072 = vcvt.s32.f32 %v3065
        %v3073 = vmul.f32 %v3072, %v3070
        %v3074 = vxor.u32 %v3073, 2147483648
        %v3075 = vsel %vm2992, %v3074, %v3073
        %v3076 = vsub.s32 4, %v3052
        %v3077 = vsel %vm2992, %v3076, %v3052
        %v3078 = vsel %vm2991, %v2350, %v3075
        %v3079 = vsel %vm2991, 0, %v3077
        %v3080 = vcosq.f32.pop %v3078
        %v3081 = vsinq.f32.pop %v3078
        %vm3082 = vweird.f32 %v2350
        %v3083 = vadd.s32 %v3079, 3
        %v3084 = vand.u32 %v3083, 3
        %vm3085 = vcmp.lt.s32.totalorder %v3084, 2
        %vm3086 = vcmp.eq.s32.totalorder %v3084, 0
        %v3087 = vxor.u32 %v3081, 2147483648
        %v3088 = vsel %vm3086, %v3080, %v3087
        %vm3089 = vcmp.eq.s32.totalorder %v3084, 2
        %v3090 = vxor.u32 %v3080, 2147483648
        %v3091 = vsel %vm3089, %v3090, %v3081
        %v3092 = vsel %vm3085, %v3088, %v3091
        %v3093 = vsel %vm3082, nan, %v3092
        %v3094 = vand.u32 2147483647, %v2352
        %vm3095 = vcmp.le.f32.partialorder %v3094, 0.7853982
        %vm3096 = vcmp.lt.s32.totalorder %v2352, 0
        %v3097 = vand.u32 %v2352, 2139095040
        %v3098 = vshrl.u32 %v3097, 23
        %v3099 = vsub.s32 %v3098, 127
        %v3100 = vand.u32 2147483647, %v2352
        %v3101 = vand.u32 %v3100, 8388607
        %v3102 = vor.u32 %v3101, 8388608
        %v3103 = vsub.s32 0, %v3102
        %v3104 = vadd.s32 %v3099, 1
        %vm3105 = vcmp.gt.s32.totalorder %v3104, 0
        %v3106 = vsel %vm3105, %v3104, 0
        %v3107 = vshrl.u32 %v3106, 5
        %v3108 = vand.u32 %v3106, 31
        %v3109 = vsub.s32 32, %v3108
        %v3110 = vshrl.u32 683565275, %v3109
        %v3111 = vshll.u32 683565275, %v3108
        %v3112 = vshrl.u32 2475754826, %v3109
        %v3113 = vor.u32 %v3111, %v3112
        %v3114 = vshll.u32 2475754826, %v3108
        %v3115 = vshrl.u32 2131351028, %v3109
        %v3116 = vor.u32 %v3114, %v3115
        %v3117 = vshll.u32 2131351028, %v3108
        %v3118 = vshrl.u32 2102212464, %v3109
        %v3119 = vor.u32 %v3117, %v3118
        %v3120 = vshll.u32 2102212464, %v3108
        %v3121 = vshrl.u32 920167782, %v3109
        %v3122 = vor.u32 %v3120, %v3121
        %v3123 = vshll.u32 920167782, %v3108
        %v3124 = vshrl.u32 1326507024, %v3109
        %v3125 = vor.u32 %v3123, %v3124
        %vm3126 = vcmp.lt.s32.totalorder %v3107, 1
        %vm3127 = vcmp.lt.s32.totalorder %v3107, 2
        %vm3128 = vcmp.lt.s32.totalorder %v3107, 3
        %vm3129 = vcmp.lt.s32.totalorder %v3107, 4
        %v3130 = vsel %vm3126, %v3110, %v3113
        %v3131 = vsel %vm3129, %v3119, 2102212464
        %v3132 = vsel %vm3128, %v3116, %v3131
        %v3133 = vsel %vm3127, %v3130, %v3132
        %v3134 = vsel %vm3126, %v3113, %v3116
        %v3135 = vsel %vm3129, %v3122, 920167782
        %v3136 = vsel %vm3128, %v3119, %v3135
        %v3137 = vsel %vm3127, %v3134, %v3136
        %v3138 = vsel %vm3126, %v3116, %v3119
        %v3139 = vsel %vm3129, %v3125, 1326507024
        %v3140 = vsel %vm3128, %v3122, %v3139
        %v3141 = vsel %vm3127, %v3138, %v3140
        %v3142 = vshll.u32 %v3102, 8
        %v3143 = vmul.u32.u64.compose %v3142, %v3141
        %v3144 = vextract.low.u32 %v3143
        %v3145 = vextract.high.u32 %v3143
        %v3146 = vmul.u32.u64.compose %v3142, %v3137
        %v3147 = vextract.low.u32 %v3146
        %v3148 = vextract.high.u32 %v3146
        %v3149 = vmul.u32 %v3142, %v3133
        %v3150 = vadd.s32 %v3145, %v3147
        %vm3151 = vc.u32 %v3145, %v3147
        %v3152 = vadd.s32 %v3148, 1
        %v3153 = vsel %vm3151, %v3152, %v3148
        %v3154 = vadd.s32 %v3149, %v3153
        %v3155 = vadd.s32 %v3154, 536870912
        %v3156 = vshrl.u32 %v3155, 30
        %v3157 = vshll.u32 %v3156, 30
        %v3158 = vsub.s32 %v3154, %v3157
        %vm3159 = vcmp.lt.s32.totalorder %v3158, 0
        %v3160 = vsub.s32 0, %v3158
        %v3161 = vsel %vm3159, %v3160, %v3158
        %v3162 = vclz %v3161
        %v3163 = vsub.s32 %v3162, 2
        %vm3164 = vcmp.gt.s32.totalorder 0, %v3163
        %v3165 = vsel %vm3164, 0, %v3163
        %v3166 = vsub.s32 32, %v3165
        %v3167 = vshll.u32 %v3158, %v3165
        %v3168 = vshrl.u32 %v3150, %v3166
        %v3169 = vor.u32 %v3167, %v3168
        %v3170 = vsub.s32 4294967266, %v3165
        %v3171 = vadd.s32 %v3170, 127
        %v3172 = vshll.u32 %v3171, 23
        %v3173 = vor.u32 4788187, %v3172
        %v3174 = vand.u32 2147483647, %v3173
        %v3176 = vcvt.s32.f32 %v3169
        %v3177 = vmul.f32 %v3176, %v3174
        %v3178 = vxor.u32 %v3177, 2147483648
        %v3179 = vsel %vm3096, %v3178, %v3177
        %v3180 = vsub.s32 4, %v3156
        %v3181 = vsel %vm3096, %v3180, %v3156
        %v3182 = vsel %vm3095, %v2352, %v3179
        %v3183 = vsel %vm3095, 0, %v3181
        %v3184 = vcosq.f32.pop %v3182
        %v3185 = vsinq.f32.pop %v3182
        %vm3186 = vweird.f32 %v2352
        %v3187 = vadd.s32 %v3183, 3
        %v3188 = vand.u32 %v3187, 3
        %vm3189 = vcmp.lt.s32.totalorder %v3188, 2
        %vm3190 = vcmp.eq.s32.totalorder %v3188, 0
        %v3191 = vxor.u32 %v3185, 2147483648
        %v3192 = vsel %vm3190, %v3184, %v3191
        %vm3193 = vcmp.eq.s32.totalorder %v3188, 2
        %v3194 = vxor.u32 %v3184, 2147483648
        %v3195 = vsel %vm3193, %v3194, %v3185
        %v3196 = vsel %vm3189, %v3192, %v3195
        %v3197 = vsel %vm3186, nan, %v3196
        %v3198 = vand.u32 2147483647, %v2267
        %vm3199 = vcmp.le.f32.partialorder %v3198, 0.7853982
        %vm3200 = vcmp.lt.s32.totalorder %v2267, 0
        %v3201 = vand.u32 %v2267, 2139095040
        %v3202 = vshrl.u32 %v3201, 23
        %v3203 = vsub.s32 %v3202, 127
        %v3204 = vand.u32 2147483647, %v2267
        %v3205 = vand.u32 %v3204, 8388607
        %v3206 = vor.u32 %v3205, 8388608
        %v3207 = vsub.s32 0, %v3206
        %v3208 = vadd.s32 %v3203, 1
        %vm3209 = vcmp.gt.s32.totalorder %v3208, 0
        %v3210 = vsel %vm3209, %v3208, 0
        %v3211 = vshrl.u32 %v3210, 5
        %v3212 = vand.u32 %v3210, 31
        %v3213 = vsub.s32 32, %v3212
        %v3214 = vshrl.u32 683565275, %v3213
        %v3215 = vshll.u32 683565275, %v3212
        %v3216 = vshrl.u32 2475754826, %v3213
        %v3217 = vor.u32 %v3215, %v3216
        %v3218 = vshll.u32 2475754826, %v3212
        %v3219 = vshrl.u32 2131351028, %v3213
        %v3220 = vor.u32 %v3218, %v3219
        %v3221 = vshll.u32 2131351028, %v3212
        %v3222 = vshrl.u32 2102212464, %v3213
        %v3223 = vor.u32 %v3221, %v3222
        %v3224 = vshll.u32 2102212464, %v3212
        %v3225 = vshrl.u32 920167782, %v3213
        %v3226 = vor.u32 %v3224, %v3225
        %v3227 = vshll.u32 920167782, %v3212
        %v3228 = vshrl.u32 1326507024, %v3213
        %v3229 = vor.u32 %v3227, %v3228
        %vm3230 = vcmp.lt.s32.totalorder %v3211, 1
        %vm3231 = vcmp.lt.s32.totalorder %v3211, 2
        %vm3232 = vcmp.lt.s32.totalorder %v3211, 3
        %vm3233 = vcmp.lt.s32.totalorder %v3211, 4
        %v3234 = vsel %vm3230, %v3214, %v3217
        %v3235 = vsel %vm3233, %v3223, 2102212464
        %v3236 = vsel %vm3232, %v3220, %v3235
        %v3237 = vsel %vm3231, %v3234, %v3236
        %v3238 = vsel %vm3230, %v3217, %v3220
        %v3239 = vsel %vm3233, %v3226, 920167782
        %v3240 = vsel %vm3232, %v3223, %v3239
        %v3241 = vsel %vm3231, %v3238, %v3240
        %v3242 = vsel %vm3230, %v3220, %v3223
        %v3243 = vsel %vm3233, %v3229, 1326507024
        %v3244 = vsel %vm3232, %v3226, %v3243
        %v3245 = vsel %vm3231, %v3242, %v3244
        %v3246 = vshll.u32 %v3206, 8
        %v3247 = vmul.u32.u64.compose %v3246, %v3245
        %v3248 = vextract.low.u32 %v3247
        %v3249 = vextract.high.u32 %v3247
        %v3250 = vmul.u32.u64.compose %v3246, %v3241
        %v3251 = vextract.low.u32 %v3250
        %v3252 = vextract.high.u32 %v3250
        %v3253 = vmul.u32 %v3246, %v3237
        %v3254 = vadd.s32 %v3249, %v3251
        %vm3255 = vc.u32 %v3249, %v3251
        %v3256 = vadd.s32 %v3252, 1
        %v3257 = vsel %vm3255, %v3256, %v3252
        %v3258 = vadd.s32 %v3253, %v3257
        %v3259 = vadd.s32 %v3258, 536870912
        %v3260 = vshrl.u32 %v3259, 30
        %v3261 = vshll.u32 %v3260, 30
        %v3262 = vsub.s32 %v3258, %v3261
        %vm3263 = vcmp.lt.s32.totalorder %v3262, 0
        %v3264 = vsub.s32 0, %v3262
        %v3265 = vsel %vm3263, %v3264, %v3262
        %v3266 = vclz %v3265
        %v3267 = vsub.s32 %v3266, 2
        %vm3268 = vcmp.gt.s32.totalorder 0, %v3267
        %v3269 = vsel %vm3268, 0, %v3267
        %v3270 = vsub.s32 32, %v3269
        %v3271 = vshll.u32 %v3262, %v3269
        %v3272 = vshrl.u32 %v3254, %v3270
        %v3273 = vor.u32 %v3271, %v3272
        %v3274 = vsub.s32 4294967266, %v3269
        %v3275 = vadd.s32 %v3274, 127
        %v3276 = vshll.u32 %v3275, 23
        %v3277 = vor.u32 4788187, %v3276
        %v3278 = vand.u32 2147483647, %v3277
        %v3280 = vcvt.s32.f32 %v3273
        %v3281 = vmul.f32 %v3280, %v3278
        %v3282 = vxor.u32 %v3281, 2147483648
        %v3283 = vsel %vm3200, %v3282, %v3281
        %v3284 = vsub.s32 4, %v3260
        %v3285 = vsel %vm3200, %v3284, %v3260
        %v3286 = vsel %vm3199, %v2267, %v3283
        %v3287 = vsel %vm3199, 0, %v3285
        %v3288 = vcosq.f32.pop %v3286
        %v3289 = vsinq.f32.pop %v3286
        %vm3290 = vweird.f32 %v2267
        %v3291 = vadd.s32 %v3287, 3
        %v3292 = vand.u32 %v3291, 3
        %vm3293 = vcmp.lt.s32.totalorder %v3292, 2
        %vm3294 = vcmp.eq.s32.totalorder %v3292, 0
        %v3295 = vxor.u32 %v3289, 2147483648
        %v3296 = vsel %vm3294, %v3288, %v3295
        %vm3297 = vcmp.eq.s32.totalorder %v3292, 2
        %v3298 = vxor.u32 %v3288, 2147483648
        %v3299 = vsel %vm3297, %v3298, %v3289
        %v3300 = vsel %vm3293, %v3296, %v3299
        %v3301 = vsel %vm3290, nan, %v3300
        %v3302 = vand.u32 2147483647, %v2269
        %vm3303 = vcmp.le.f32.partialorder %v3302, 0.7853982
        %vm3304 = vcmp.lt.s32.totalorder %v2269, 0
        %v3305 = vand.u32 %v2269, 2139095040
        %v3306 = vshrl.u32 %v3305, 23
        %v3307 = vsub.s32 %v3306, 127
        %v3308 = vand.u32 2147483647, %v2269
        %v3309 = vand.u32 %v3308, 8388607
        %v3310 = vor.u32 %v3309, 8388608
        %v3311 = vsub.s32 0, %v3310
        %v3312 = vadd.s32 %v3307, 1
        %vm3313 = vcmp.gt.s32.totalorder %v3312, 0
        %v3314 = vsel %vm3313, %v3312, 0
        %v3315 = vshrl.u32 %v3314, 5
        %v3316 = vand.u32 %v3314, 31
        %v3317 = vsub.s32 32, %v3316
        %v3318 = vshrl.u32 683565275, %v3317
        %v3319 = vshll.u32 683565275, %v3316
        %v3320 = vshrl.u32 2475754826, %v3317
        %v3321 = vor.u32 %v3319, %v3320
        %v3322 = vshll.u32 2475754826, %v3316
        %v3323 = vshrl.u32 2131351028, %v3317
        %v3324 = vor.u32 %v3322, %v3323
        %v3325 = vshll.u32 2131351028, %v3316
        %v3326 = vshrl.u32 2102212464, %v3317
        %v3327 = vor.u32 %v3325, %v3326
        %v3328 = vshll.u32 2102212464, %v3316
        %v3329 = vshrl.u32 920167782, %v3317
        %v3330 = vor.u32 %v3328, %v3329
        %v3331 = vshll.u32 920167782, %v3316
        %v3332 = vshrl.u32 1326507024, %v3317
        %v3333 = vor.u32 %v3331, %v3332
        %vm3334 = vcmp.lt.s32.totalorder %v3315, 1
        %vm3335 = vcmp.lt.s32.totalorder %v3315, 2
        %vm3336 = vcmp.lt.s32.totalorder %v3315, 3
        %vm3337 = vcmp.lt.s32.totalorder %v3315, 4
        %v3338 = vsel %vm3334, %v3318, %v3321
        %v3339 = vsel %vm3337, %v3327, 2102212464
        %v3340 = vsel %vm3336, %v3324, %v3339
        %v3341 = vsel %vm3335, %v3338, %v3340
        %v3342 = vsel %vm3334, %v3321, %v3324
        %v3343 = vsel %vm3337, %v3330, 920167782
        %v3344 = vsel %vm3336, %v3327, %v3343
        %v3345 = vsel %vm3335, %v3342, %v3344
        %v3346 = vsel %vm3334, %v3324, %v3327
        %v3347 = vsel %vm3337, %v3333, 1326507024
        %v3348 = vsel %vm3336, %v3330, %v3347
        %v3349 = vsel %vm3335, %v3346, %v3348
        %v3350 = vshll.u32 %v3310, 8
        %v3351 = vmul.u32.u64.compose %v3350, %v3349
        %v3352 = vextract.low.u32 %v3351
        %v3353 = vextract.high.u32 %v3351
        %v3354 = vmul.u32.u64.compose %v3350, %v3345
        %v3355 = vextract.low.u32 %v3354
        %v3356 = vextract.high.u32 %v3354
        %v3357 = vmul.u32 %v3350, %v3341
        %v3358 = vadd.s32 %v3353, %v3355
        %vm3359 = vc.u32 %v3353, %v3355
        %v3360 = vadd.s32 %v3356, 1
        %v3361 = vsel %vm3359, %v3360, %v3356
        %v3362 = vadd.s32 %v3357, %v3361
        %v3363 = vadd.s32 %v3362, 536870912
        %v3364 = vshrl.u32 %v3363, 30
        %v3365 = vshll.u32 %v3364, 30
        %v3366 = vsub.s32 %v3362, %v3365
        %vm3367 = vcmp.lt.s32.totalorder %v3366, 0
        %v3368 = vsub.s32 0, %v3366
        %v3369 = vsel %vm3367, %v3368, %v3366
        %v3370 = vclz %v3369
        %v3371 = vsub.s32 %v3370, 2
        %vm3372 = vcmp.gt.s32.totalorder 0, %v3371
        %v3373 = vsel %vm3372, 0, %v3371
        %v3374 = vsub.s32 32, %v3373
        %v3375 = vshll.u32 %v3366, %v3373
        %v3376 = vshrl.u32 %v3358, %v3374
        %v3377 = vor.u32 %v3375, %v3376
        %v3378 = vsub.s32 4294967266, %v3373
        %v3379 = vadd.s32 %v3378, 127
        %v3380 = vshll.u32 %v3379, 23
        %v3381 = vor.u32 4788187, %v3380
        %v3382 = vand.u32 2147483647, %v3381
        %v3384 = vcvt.s32.f32 %v3377
        %v3385 = vmul.f32 %v3384, %v3382
        %v3386 = vxor.u32 %v3385, 2147483648
        %v3387 = vsel %vm3304, %v3386, %v3385
        %v3388 = vsub.s32 4, %v3364
        %v3389 = vsel %vm3304, %v3388, %v3364
        %v3390 = vsel %vm3303, %v2269, %v3387
        %v3391 = vsel %vm3303, 0, %v3389
        %v3392 = vcosq.f32.pop %v3390
        %v3393 = vsinq.f32.pop %v3390
        %vm3394 = vweird.f32 %v2269
        %v3395 = vadd.s32 %v3391, 3
        %v3396 = vand.u32 %v3395, 3
        %vm3397 = vcmp.lt.s32.totalorder %v3396, 2
        %vm3398 = vcmp.eq.s32.totalorder %v3396, 0
        %v3399 = vxor.u32 %v3393, 2147483648
        %v3400 = vsel %vm3398, %v3392, %v3399
        %vm3401 = vcmp.eq.s32.totalorder %v3396, 2
        %v3402 = vxor.u32 %v3392, 2147483648
        %v3403 = vsel %vm3401, %v3402, %v3393
        %v3404 = vsel %vm3397, %v3400, %v3403
        %v3405 = vsel %vm3394, nan, %v3404
        %v3406 = vand.u32 2147483647, %v2356
        %vm3407 = vcmp.le.f32.partialorder %v3406, 0.7853982
        %vm3408 = vcmp.lt.s32.totalorder %v2356, 0
        %v3409 = vand.u32 %v2356, 2139095040
        %v3410 = vshrl.u32 %v3409, 23
        %v3411 = vsub.s32 %v3410, 127
        %v3412 = vand.u32 2147483647, %v2356
        %v3413 = vand.u32 %v3412, 8388607
        %v3414 = vor.u32 %v3413, 8388608
        %v3415 = vsub.s32 0, %v3414
        %v3416 = vadd.s32 %v3411, 1
        %vm3417 = vcmp.gt.s32.totalorder %v3416, 0
        %v3418 = vsel %vm3417, %v3416, 0
        %v3419 = vshrl.u32 %v3418, 5
        %v3420 = vand.u32 %v3418, 31
        %v3421 = vsub.s32 32, %v3420
        %v3422 = vshrl.u32 683565275, %v3421
        %v3423 = vshll.u32 683565275, %v3420
        %v3424 = vshrl.u32 2475754826, %v3421
        %v3425 = vor.u32 %v3423, %v3424
        %v3426 = vshll.u32 2475754826, %v3420
        %v3427 = vshrl.u32 2131351028, %v3421
        %v3428 = vor.u32 %v3426, %v3427
        %v3429 = vshll.u32 2131351028, %v3420
        %v3430 = vshrl.u32 2102212464, %v3421
        %v3431 = vor.u32 %v3429, %v3430
        %v3432 = vshll.u32 2102212464, %v3420
        %v3433 = vshrl.u32 920167782, %v3421
        %v3434 = vor.u32 %v3432, %v3433
        %v3435 = vshll.u32 920167782, %v3420
        %v3436 = vshrl.u32 1326507024, %v3421
        %v3437 = vor.u32 %v3435, %v3436
        %vm3438 = vcmp.lt.s32.totalorder %v3419, 1
        %vm3439 = vcmp.lt.s32.totalorder %v3419, 2
        %vm3440 = vcmp.lt.s32.totalorder %v3419, 3
        %vm3441 = vcmp.lt.s32.totalorder %v3419, 4
        %v3442 = vsel %vm3438, %v3422, %v3425
        %v3443 = vsel %vm3441, %v3431, 2102212464
        %v3444 = vsel %vm3440, %v3428, %v3443
        %v3445 = vsel %vm3439, %v3442, %v3444
        %v3446 = vsel %vm3438, %v3425, %v3428
        %v3447 = vsel %vm3441, %v3434, 920167782
        %v3448 = vsel %vm3440, %v3431, %v3447
        %v3449 = vsel %vm3439, %v3446, %v3448
        %v3450 = vsel %vm3438, %v3428, %v3431
        %v3451 = vsel %vm3441, %v3437, 1326507024
        %v3452 = vsel %vm3440, %v3434, %v3451
        %v3453 = vsel %vm3439, %v3450, %v3452
        %v3454 = vshll.u32 %v3414, 8
        %v3455 = vmul.u32.u64.compose %v3454, %v3453
        %v3456 = vextract.low.u32 %v3455
        %v3457 = vextract.high.u32 %v3455
        %v3458 = vmul.u32.u64.compose %v3454, %v3449
        %v3459 = vextract.low.u32 %v3458
        %v3460 = vextract.high.u32 %v3458
        %v3461 = vmul.u32 %v3454, %v3445
        %v3462 = vadd.s32 %v3457, %v3459
        %vm3463 = vc.u32 %v3457, %v3459
        %v3464 = vadd.s32 %v3460, 1
        %v3465 = vsel %vm3463, %v3464, %v3460
        %v3466 = vadd.s32 %v3461, %v3465
        %v3467 = vadd.s32 %v3466, 536870912
        %v3468 = vshrl.u32 %v3467, 30
        %v3469 = vshll.u32 %v3468, 30
        %v3470 = vsub.s32 %v3466, %v3469
        %vm3471 = vcmp.lt.s32.totalorder %v3470, 0
        %v3472 = vsub.s32 0, %v3470
        %v3473 = vsel %vm3471, %v3472, %v3470
        %v3474 = vclz %v3473
        %v3475 = vsub.s32 %v3474, 2
        %vm3476 = vcmp.gt.s32.totalorder 0, %v3475
        %v3477 = vsel %vm3476, 0, %v3475
        %v3478 = vsub.s32 32, %v3477
        %v3479 = vshll.u32 %v3470, %v3477
        %v3480 = vshrl.u32 %v3462, %v3478
        %v3481 = vor.u32 %v3479, %v3480
        %v3482 = vsub.s32 4294967266, %v3477
        %v3483 = vadd.s32 %v3482, 127
        %v3484 = vshll.u32 %v3483, 23
        %v3485 = vor.u32 4788187, %v3484
        %v3486 = vand.u32 2147483647, %v3485
        %v3488 = vcvt.s32.f32 %v3481
        %v3489 = vmul.f32 %v3488, %v3486
        %v3490 = vxor.u32 %v3489, 2147483648
        %v3491 = vsel %vm3408, %v3490, %v3489
        %v3492 = vsub.s32 4, %v3468
        %v3493 = vsel %vm3408, %v3492, %v3468
        %v3494 = vsel %vm3407, %v2356, %v3491
        %v3495 = vsel %vm3407, 0, %v3493
        %v3496 = vcosq.f32.pop %v3494
        %v3497 = vsinq.f32.pop %v3494
        %vm3498 = vweird.f32 %v2356
        %v3499 = vadd.s32 %v3495, 3
        %v3500 = vand.u32 %v3499, 3
        %vm3501 = vcmp.lt.s32.totalorder %v3500, 2
        %vm3502 = vcmp.eq.s32.totalorder %v3500, 0
        %v3503 = vxor.u32 %v3497, 2147483648
        %v3504 = vsel %vm3502, %v3496, %v3503
        %vm3505 = vcmp.eq.s32.totalorder %v3500, 2
        %v3506 = vxor.u32 %v3496, 2147483648
        %v3507 = vsel %vm3505, %v3506, %v3497
        %v3508 = vsel %vm3501, %v3504, %v3507
        %v3509 = vsel %vm3498, nan, %v3508
        %v3510 = vand.u32 2147483647, %v2358
        %vm3511 = vcmp.le.f32.partialorder %v3510, 0.7853982
        %vm3512 = vcmp.lt.s32.totalorder %v2358, 0
        %v3513 = vand.u32 %v2358, 2139095040
        %v3514 = vshrl.u32 %v3513, 23
        %v3515 = vsub.s32 %v3514, 127
        %v3516 = vand.u32 2147483647, %v2358
        %v3517 = vand.u32 %v3516, 8388607
        %v3518 = vor.u32 %v3517, 8388608
        %v3519 = vsub.s32 0, %v3518
        %v3520 = vadd.s32 %v3515, 1
        %vm3521 = vcmp.gt.s32.totalorder %v3520, 0
        %v3522 = vsel %vm3521, %v3520, 0
        %v3523 = vshrl.u32 %v3522, 5
        %v3524 = vand.u32 %v3522, 31
        %v3525 = vsub.s32 32, %v3524
        %v3526 = vshrl.u32 683565275, %v3525
        %v3527 = vshll.u32 683565275, %v3524
        %v3528 = vshrl.u32 2475754826, %v3525
        %v3529 = vor.u32 %v3527, %v3528
        %v3530 = vshll.u32 2475754826, %v3524
        %v3531 = vshrl.u32 2131351028, %v3525
        %v3532 = vor.u32 %v3530, %v3531
        %v3533 = vshll.u32 2131351028, %v3524
        %v3534 = vshrl.u32 2102212464, %v3525
        %v3535 = vor.u32 %v3533, %v3534
        %v3536 = vshll.u32 2102212464, %v3524
        %v3537 = vshrl.u32 920167782, %v3525
        %v3538 = vor.u32 %v3536, %v3537
        %v3539 = vshll.u32 920167782, %v3524
        %v3540 = vshrl.u32 1326507024, %v3525
        %v3541 = vor.u32 %v3539, %v3540
        %vm3542 = vcmp.lt.s32.totalorder %v3523, 1
        %vm3543 = vcmp.lt.s32.totalorder %v3523, 2
        %vm3544 = vcmp.lt.s32.totalorder %v3523, 3
        %vm3545 = vcmp.lt.s32.totalorder %v3523, 4
        %v3546 = vsel %vm3542, %v3526, %v3529
        %v3547 = vsel %vm3545, %v3535, 2102212464
        %v3548 = vsel %vm3544, %v3532, %v3547
        %v3549 = vsel %vm3543, %v3546, %v3548
        %v3550 = vsel %vm3542, %v3529, %v3532
        %v3551 = vsel %vm3545, %v3538, 920167782
        %v3552 = vsel %vm3544, %v3535, %v3551
        %v3553 = vsel %vm3543, %v3550, %v3552
        %v3554 = vsel %vm3542, %v3532, %v3535
        %v3555 = vsel %vm3545, %v3541, 1326507024
        %v3556 = vsel %vm3544, %v3538, %v3555
        %v3557 = vsel %vm3543, %v3554, %v3556
        %v3558 = vshll.u32 %v3518, 8
        %v3559 = vmul.u32.u64.compose %v3558, %v3557
        %v3560 = vextract.low.u32 %v3559
        %v3561 = vextract.high.u32 %v3559
        %v3562 = vmul.u32.u64.compose %v3558, %v3553
        %v3563 = vextract.low.u32 %v3562
        %v3564 = vextract.high.u32 %v3562
        %v3565 = vmul.u32 %v3558, %v3549
        %v3566 = vadd.s32 %v3561, %v3563
        %vm3567 = vc.u32 %v3561, %v3563
        %v3568 = vadd.s32 %v3564, 1
        %v3569 = vsel %vm3567, %v3568, %v3564
        %v3570 = vadd.s32 %v3565, %v3569
        %v3571 = vadd.s32 %v3570, 536870912
        %v3572 = vshrl.u32 %v3571, 30
        %v3573 = vshll.u32 %v3572, 30
        %v3574 = vsub.s32 %v3570, %v3573
        %vm3575 = vcmp.lt.s32.totalorder %v3574, 0
        %v3576 = vsub.s32 0, %v3574
        %v3577 = vsel %vm3575, %v3576, %v3574
        %v3578 = vclz %v3577
        %v3579 = vsub.s32 %v3578, 2
        %vm3580 = vcmp.gt.s32.totalorder 0, %v3579
        %v3581 = vsel %vm3580, 0, %v3579
        %v3582 = vsub.s32 32, %v3581
        %v3583 = vshll.u32 %v3574, %v3581
        %v3584 = vshrl.u32 %v3566, %v3582
        %v3585 = vor.u32 %v3583, %v3584
        %v3586 = vsub.s32 4294967266, %v3581
        %v3587 = vadd.s32 %v3586, 127
        %v3588 = vshll.u32 %v3587, 23
        %v3589 = vor.u32 4788187, %v3588
        %v3590 = vand.u32 2147483647, %v3589
        %v3592 = vcvt.s32.f32 %v3585
        %v3593 = vmul.f32 %v3592, %v3590
        %v3594 = vxor.u32 %v3593, 2147483648
        %v3595 = vsel %vm3512, %v3594, %v3593
        %v3596 = vsub.s32 4, %v3572
        %v3597 = vsel %vm3512, %v3596, %v3572
        %v3598 = vsel %vm3511, %v2358, %v3595
        %v3599 = vsel %vm3511, 0, %v3597
        %v3600 = vcosq.f32.pop %v3598
        %v3601 = vsinq.f32.pop %v3598
        %vm3602 = vweird.f32 %v2358
        %v3603 = vadd.s32 %v3599, 3
        %v3604 = vand.u32 %v3603, 3
        %vm3605 = vcmp.lt.s32.totalorder %v3604, 2
        %vm3606 = vcmp.eq.s32.totalorder %v3604, 0
        %v3607 = vxor.u32 %v3601, 2147483648
        %v3608 = vsel %vm3606, %v3600, %v3607
        %vm3609 = vcmp.eq.s32.totalorder %v3604, 2
        %v3610 = vxor.u32 %v3600, 2147483648
        %v3611 = vsel %vm3609, %v3610, %v3601
        %v3612 = vsel %vm3605, %v3608, %v3611
        %v3613 = vsel %vm3602, nan, %v3612
        %v3614 = vand.u32 2147483647, %v2273
        %vm3615 = vcmp.le.f32.partialorder %v3614, 0.7853982
        %vm3616 = vcmp.lt.s32.totalorder %v2273, 0
        %v3617 = vand.u32 %v2273, 2139095040
        %v3618 = vshrl.u32 %v3617, 23
        %v3619 = vsub.s32 %v3618, 127
        %v3620 = vand.u32 2147483647, %v2273
        %v3621 = vand.u32 %v3620, 8388607
        %v3622 = vor.u32 %v3621, 8388608
        %v3623 = vsub.s32 0, %v3622
        %v3624 = vadd.s32 %v3619, 1
        %vm3625 = vcmp.gt.s32.totalorder %v3624, 0
        %v3626 = vsel %vm3625, %v3624, 0
        %v3627 = vshrl.u32 %v3626, 5
        %v3628 = vand.u32 %v3626, 31
        %v3629 = vsub.s32 32, %v3628
        %v3630 = vshrl.u32 683565275, %v3629
        %v3631 = vshll.u32 683565275, %v3628
        %v3632 = vshrl.u32 2475754826, %v3629
        %v3633 = vor.u32 %v3631, %v3632
        %v3634 = vshll.u32 2475754826, %v3628
        %v3635 = vshrl.u32 2131351028, %v3629
        %v3636 = vor.u32 %v3634, %v3635
        %v3637 = vshll.u32 2131351028, %v3628
        %v3638 = vshrl.u32 2102212464, %v3629
        %v3639 = vor.u32 %v3637, %v3638
        %v3640 = vshll.u32 2102212464, %v3628
        %v3641 = vshrl.u32 920167782, %v3629
        %v3642 = vor.u32 %v3640, %v3641
        %v3643 = vshll.u32 920167782, %v3628
        %v3644 = vshrl.u32 1326507024, %v3629
        %v3645 = vor.u32 %v3643, %v3644
        %vm3646 = vcmp.lt.s32.totalorder %v3627, 1
        %vm3647 = vcmp.lt.s32.totalorder %v3627, 2
        %vm3648 = vcmp.lt.s32.totalorder %v3627, 3
        %vm3649 = vcmp.lt.s32.totalorder %v3627, 4
        %v3650 = vsel %vm3646, %v3630, %v3633
        %v3651 = vsel %vm3649, %v3639, 2102212464
        %v3652 = vsel %vm3648, %v3636, %v3651
        %v3653 = vsel %vm3647, %v3650, %v3652
        %v3654 = vsel %vm3646, %v3633, %v3636
        %v3655 = vsel %vm3649, %v3642, 920167782
        %v3656 = vsel %vm3648, %v3639, %v3655
        %v3657 = vsel %vm3647, %v3654, %v3656
        %v3658 = vsel %vm3646, %v3636, %v3639
        %v3659 = vsel %vm3649, %v3645, 1326507024
        %v3660 = vsel %vm3648, %v3642, %v3659
        %v3661 = vsel %vm3647, %v3658, %v3660
        %v3662 = vshll.u32 %v3622, 8
        %v3663 = vmul.u32.u64.compose %v3662, %v3661
        %v3664 = vextract.low.u32 %v3663
        %v3665 = vextract.high.u32 %v3663
        %v3666 = vmul.u32.u64.compose %v3662, %v3657
        %v3667 = vextract.low.u32 %v3666
        %v3668 = vextract.high.u32 %v3666
        %v3669 = vmul.u32 %v3662, %v3653
        %v3670 = vadd.s32 %v3665, %v3667
        %vm3671 = vc.u32 %v3665, %v3667
        %v3672 = vadd.s32 %v3668, 1
        %v3673 = vsel %vm3671, %v3672, %v3668
        %v3674 = vadd.s32 %v3669, %v3673
        %v3675 = vadd.s32 %v3674, 536870912
        %v3676 = vshrl.u32 %v3675, 30
        %v3677 = vshll.u32 %v3676, 30
        %v3678 = vsub.s32 %v3674, %v3677
        %vm3679 = vcmp.lt.s32.totalorder %v3678, 0
        %v3680 = vsub.s32 0, %v3678
        %v3681 = vsel %vm3679, %v3680, %v3678
        %v3682 = vclz %v3681
        %v3683 = vsub.s32 %v3682, 2
        %vm3684 = vcmp.gt.s32.totalorder 0, %v3683
        %v3685 = vsel %vm3684, 0, %v3683
        %v3686 = vsub.s32 32, %v3685
        %v3687 = vshll.u32 %v3678, %v3685
        %v3688 = vshrl.u32 %v3670, %v3686
        %v3689 = vor.u32 %v3687, %v3688
        %v3690 = vsub.s32 4294967266, %v3685
        %v3691 = vadd.s32 %v3690, 127
        %v3692 = vshll.u32 %v3691, 23
        %v3693 = vor.u32 4788187, %v3692
        %v3694 = vand.u32 2147483647, %v3693
        %v3696 = vcvt.s32.f32 %v3689
        %v3697 = vmul.f32 %v3696, %v3694
        %v3698 = vxor.u32 %v3697, 2147483648
        %v3699 = vsel %vm3616, %v3698, %v3697
        %v3700 = vsub.s32 4, %v3676
        %v3701 = vsel %vm3616, %v3700, %v3676
        %v3702 = vsel %vm3615, %v2273, %v3699
        %v3703 = vsel %vm3615, 0, %v3701
        %v3704 = vcosq.f32.pop %v3702
        %v3705 = vsinq.f32.pop %v3702
        %vm3706 = vweird.f32 %v2273
        %v3707 = vadd.s32 %v3703, 3
        %v3708 = vand.u32 %v3707, 3
        %vm3709 = vcmp.lt.s32.totalorder %v3708, 2
        %vm3710 = vcmp.eq.s32.totalorder %v3708, 0
        %v3711 = vxor.u32 %v3705, 2147483648
        %v3712 = vsel %vm3710, %v3704, %v3711
        %vm3713 = vcmp.eq.s32.totalorder %v3708, 2
        %v3714 = vxor.u32 %v3704, 2147483648
        %v3715 = vsel %vm3713, %v3714, %v3705
        %v3716 = vsel %vm3709, %v3712, %v3715
        %v3717 = vsel %vm3706, nan, %v3716
        %v3718 = vand.u32 2147483647, %v2275
        %vm3719 = vcmp.le.f32.partialorder %v3718, 0.7853982
        %vm3720 = vcmp.lt.s32.totalorder %v2275, 0
        %v3721 = vand.u32 %v2275, 2139095040
        %v3722 = vshrl.u32 %v3721, 23
        %v3723 = vsub.s32 %v3722, 127
        %v3724 = vand.u32 2147483647, %v2275
        %v3725 = vand.u32 %v3724, 8388607
        %v3726 = vor.u32 %v3725, 8388608
        %v3727 = vsub.s32 0, %v3726
        %v3728 = vadd.s32 %v3723, 1
        %vm3729 = vcmp.gt.s32.totalorder %v3728, 0
        %v3730 = vsel %vm3729, %v3728, 0
        %v3731 = vshrl.u32 %v3730, 5
        %v3732 = vand.u32 %v3730, 31
        %v3733 = vsub.s32 32, %v3732
        %v3734 = vshrl.u32 683565275, %v3733
        %v3735 = vshll.u32 683565275, %v3732
        %v3736 = vshrl.u32 2475754826, %v3733
        %v3737 = vor.u32 %v3735, %v3736
        %v3738 = vshll.u32 2475754826, %v3732
        %v3739 = vshrl.u32 2131351028, %v3733
        %v3740 = vor.u32 %v3738, %v3739
        %v3741 = vshll.u32 2131351028, %v3732
        %v3742 = vshrl.u32 2102212464, %v3733
        %v3743 = vor.u32 %v3741, %v3742
        %v3744 = vshll.u32 2102212464, %v3732
        %v3745 = vshrl.u32 920167782, %v3733
        %v3746 = vor.u32 %v3744, %v3745
        %v3747 = vshll.u32 920167782, %v3732
        %v3748 = vshrl.u32 1326507024, %v3733
        %v3749 = vor.u32 %v3747, %v3748
        %vm3750 = vcmp.lt.s32.totalorder %v3731, 1
        %vm3751 = vcmp.lt.s32.totalorder %v3731, 2
        %vm3752 = vcmp.lt.s32.totalorder %v3731, 3
        %vm3753 = vcmp.lt.s32.totalorder %v3731, 4
        %v3754 = vsel %vm3750, %v3734, %v3737
        %v3755 = vsel %vm3753, %v3743, 2102212464
        %v3756 = vsel %vm3752, %v3740, %v3755
        %v3757 = vsel %vm3751, %v3754, %v3756
        %v3758 = vsel %vm3750, %v3737, %v3740
        %v3759 = vsel %vm3753, %v3746, 920167782
        %v3760 = vsel %vm3752, %v3743, %v3759
        %v3761 = vsel %vm3751, %v3758, %v3760
        %v3762 = vsel %vm3750, %v3740, %v3743
        %v3763 = vsel %vm3753, %v3749, 1326507024
        %v3764 = vsel %vm3752, %v3746, %v3763
        %v3765 = vsel %vm3751, %v3762, %v3764
        %v3766 = vshll.u32 %v3726, 8
        %v3767 = vmul.u32.u64.compose %v3766, %v3765
        %v3768 = vextract.low.u32 %v3767
        %v3769 = vextract.high.u32 %v3767
        %v3770 = vmul.u32.u64.compose %v3766, %v3761
        %v3771 = vextract.low.u32 %v3770
        %v3772 = vextract.high.u32 %v3770
        %v3773 = vmul.u32 %v3766, %v3757
        %v3774 = vadd.s32 %v3769, %v3771
        %vm3775 = vc.u32 %v3769, %v3771
        %v3776 = vadd.s32 %v3772, 1
        %v3777 = vsel %vm3775, %v3776, %v3772
        %v3778 = vadd.s32 %v3773, %v3777
        %v3779 = vadd.s32 %v3778, 536870912
        %v3780 = vshrl.u32 %v3779, 30
        %v3781 = vshll.u32 %v3780, 30
        %v3782 = vsub.s32 %v3778, %v3781
        %vm3783 = vcmp.lt.s32.totalorder %v3782, 0
        %v3784 = vsub.s32 0, %v3782
        %v3785 = vsel %vm3783, %v3784, %v3782
        %v3786 = vclz %v3785
        %v3787 = vsub.s32 %v3786, 2
        %vm3788 = vcmp.gt.s32.totalorder 0, %v3787
        %v3789 = vsel %vm3788, 0, %v3787
        %v3790 = vsub.s32 32, %v3789
        %v3791 = vshll.u32 %v3782, %v3789
        %v3792 = vshrl.u32 %v3774, %v3790
        %v3793 = vor.u32 %v3791, %v3792
        %v3794 = vsub.s32 4294967266, %v3789
        %v3795 = vadd.s32 %v3794, 127
        %v3796 = vshll.u32 %v3795, 23
        %v3797 = vor.u32 4788187, %v3796
        %v3798 = vand.u32 2147483647, %v3797
        %v3800 = vcvt.s32.f32 %v3793
        %v3801 = vmul.f32 %v3800, %v3798
        %v3802 = vxor.u32 %v3801, 2147483648
        %v3803 = vsel %vm3720, %v3802, %v3801
        %v3804 = vsub.s32 4, %v3780
        %v3805 = vsel %vm3720, %v3804, %v3780
        %v3806 = vsel %vm3719, %v2275, %v3803
        %v3807 = vsel %vm3719, 0, %v3805
        %v3808 = vcosq.f32.pop %v3806
        %v3809 = vsinq.f32.pop %v3806
        %vm3810 = vweird.f32 %v2275
        %v3811 = vadd.s32 %v3807, 3
        %v3812 = vand.u32 %v3811, 3
        %vm3813 = vcmp.lt.s32.totalorder %v3812, 2
        %vm3814 = vcmp.eq.s32.totalorder %v3812, 0
        %v3815 = vxor.u32 %v3809, 2147483648
        %v3816 = vsel %vm3814, %v3808, %v3815
        %vm3817 = vcmp.eq.s32.totalorder %v3812, 2
        %v3818 = vxor.u32 %v3808, 2147483648
        %v3819 = vsel %vm3817, %v3818, %v3809
        %v3820 = vsel %vm3813, %v3816, %v3819
        %v3821 = vsel %vm3810, nan, %v3820
        %v3822 = vand.u32 2147483647, %v2362
        %vm3823 = vcmp.le.f32.partialorder %v3822, 0.7853982
        %vm3824 = vcmp.lt.s32.totalorder %v2362, 0
        %v3825 = vand.u32 %v2362, 2139095040
        %v3826 = vshrl.u32 %v3825, 23
        %v3827 = vsub.s32 %v3826, 127
        %v3828 = vand.u32 2147483647, %v2362
        %v3829 = vand.u32 %v3828, 8388607
        %v3830 = vor.u32 %v3829, 8388608
        %v3831 = vsub.s32 0, %v3830
        %v3832 = vadd.s32 %v3827, 1
        %vm3833 = vcmp.gt.s32.totalorder %v3832, 0
        %v3834 = vsel %vm3833, %v3832, 0
        %v3835 = vshrl.u32 %v3834, 5
        %v3836 = vand.u32 %v3834, 31
        %v3837 = vsub.s32 32, %v3836
        %v3838 = vshrl.u32 683565275, %v3837
        %v3839 = vshll.u32 683565275, %v3836
        %v3840 = vshrl.u32 2475754826, %v3837
        %v3841 = vor.u32 %v3839, %v3840
        %v3842 = vshll.u32 2475754826, %v3836
        %v3843 = vshrl.u32 2131351028, %v3837
        %v3844 = vor.u32 %v3842, %v3843
        %v3845 = vshll.u32 2131351028, %v3836
        %v3846 = vshrl.u32 2102212464, %v3837
        %v3847 = vor.u32 %v3845, %v3846
        %v3848 = vshll.u32 2102212464, %v3836
        %v3849 = vshrl.u32 920167782, %v3837
        %v3850 = vor.u32 %v3848, %v3849
        %v3851 = vshll.u32 920167782, %v3836
        %v3852 = vshrl.u32 1326507024, %v3837
        %v3853 = vor.u32 %v3851, %v3852
        %vm3854 = vcmp.lt.s32.totalorder %v3835, 1
        %vm3855 = vcmp.lt.s32.totalorder %v3835, 2
        %vm3856 = vcmp.lt.s32.totalorder %v3835, 3
        %vm3857 = vcmp.lt.s32.totalorder %v3835, 4
        %v3858 = vsel %vm3854, %v3838, %v3841
        %v3859 = vsel %vm3857, %v3847, 2102212464
        %v3860 = vsel %vm3856, %v3844, %v3859
        %v3861 = vsel %vm3855, %v3858, %v3860
        %v3862 = vsel %vm3854, %v3841, %v3844
        %v3863 = vsel %vm3857, %v3850, 920167782
        %v3864 = vsel %vm3856, %v3847, %v3863
        %v3865 = vsel %vm3855, %v3862, %v3864
        %v3866 = vsel %vm3854, %v3844, %v3847
        %v3867 = vsel %vm3857, %v3853, 1326507024
        %v3868 = vsel %vm3856, %v3850, %v3867
        %v3869 = vsel %vm3855, %v3866, %v3868
        %v3870 = vshll.u32 %v3830, 8
        %v3871 = vmul.u32.u64.compose %v3870, %v3869
        %v3872 = vextract.low.u32 %v3871
        %v3873 = vextract.high.u32 %v3871
        %v3874 = vmul.u32.u64.compose %v3870, %v3865
        %v3875 = vextract.low.u32 %v3874
        %v3876 = vextract.high.u32 %v3874
        %v3877 = vmul.u32 %v3870, %v3861
        %v3878 = vadd.s32 %v3873, %v3875
        %vm3879 = vc.u32 %v3873, %v3875
        %v3880 = vadd.s32 %v3876, 1
        %v3881 = vsel %vm3879, %v3880, %v3876
        %v3882 = vadd.s32 %v3877, %v3881
        %v3883 = vadd.s32 %v3882, 536870912
        %v3884 = vshrl.u32 %v3883, 30
        %v3885 = vshll.u32 %v3884, 30
        %v3886 = vsub.s32 %v3882, %v3885
        %vm3887 = vcmp.lt.s32.totalorder %v3886, 0
        %v3888 = vsub.s32 0, %v3886
        %v3889 = vsel %vm3887, %v3888, %v3886
        %v3890 = vclz %v3889
        %v3891 = vsub.s32 %v3890, 2
        %vm3892 = vcmp.gt.s32.totalorder 0, %v3891
        %v3893 = vsel %vm3892, 0, %v3891
        %v3894 = vsub.s32 32, %v3893
        %v3895 = vshll.u32 %v3886, %v3893
        %v3896 = vshrl.u32 %v3878, %v3894
        %v3897 = vor.u32 %v3895, %v3896
        %v3898 = vsub.s32 4294967266, %v3893
        %v3899 = vadd.s32 %v3898, 127
        %v3900 = vshll.u32 %v3899, 23
        %v3901 = vor.u32 4788187, %v3900
        %v3902 = vand.u32 2147483647, %v3901
        %v3904 = vcvt.s32.f32 %v3897
        %v3905 = vmul.f32 %v3904, %v3902
        %v3906 = vxor.u32 %v3905, 2147483648
        %v3907 = vsel %vm3824, %v3906, %v3905
        %v3908 = vsub.s32 4, %v3884
        %v3909 = vsel %vm3824, %v3908, %v3884
        %v3910 = vsel %vm3823, %v2362, %v3907
        %v3911 = vsel %vm3823, 0, %v3909
        %v3912 = vcosq.f32.pop %v3910
        %v3913 = vsinq.f32.pop %v3910
        %vm3914 = vweird.f32 %v2362
        %v3915 = vadd.s32 %v3911, 3
        %v3916 = vand.u32 %v3915, 3
        %vm3917 = vcmp.lt.s32.totalorder %v3916, 2
        %vm3918 = vcmp.eq.s32.totalorder %v3916, 0
        %v3919 = vxor.u32 %v3913, 2147483648
        %v3920 = vsel %vm3918, %v3912, %v3919
        %vm3921 = vcmp.eq.s32.totalorder %v3916, 2
        %v3922 = vxor.u32 %v3912, 2147483648
        %v3923 = vsel %vm3921, %v3922, %v3913
        %v3924 = vsel %vm3917, %v3920, %v3923
        %v3925 = vsel %vm3914, nan, %v3924
        %v3926 = vand.u32 2147483647, %v2364
        %vm3927 = vcmp.le.f32.partialorder %v3926, 0.7853982
        %vm3928 = vcmp.lt.s32.totalorder %v2364, 0
        %v3929 = vand.u32 %v2364, 2139095040
        %v3930 = vshrl.u32 %v3929, 23
        %v3931 = vsub.s32 %v3930, 127
        %v3932 = vand.u32 2147483647, %v2364
        %v3933 = vand.u32 %v3932, 8388607
        %v3934 = vor.u32 %v3933, 8388608
        %v3935 = vsub.s32 0, %v3934
        %v3936 = vadd.s32 %v3931, 1
        %vm3937 = vcmp.gt.s32.totalorder %v3936, 0
        %v3938 = vsel %vm3937, %v3936, 0
        %v3939 = vshrl.u32 %v3938, 5
        %v3940 = vand.u32 %v3938, 31
        %v3941 = vsub.s32 32, %v3940
        %v3942 = vshrl.u32 683565275, %v3941
        %v3943 = vshll.u32 683565275, %v3940
        %v3944 = vshrl.u32 2475754826, %v3941
        %v3945 = vor.u32 %v3943, %v3944
        %v3946 = vshll.u32 2475754826, %v3940
        %v3947 = vshrl.u32 2131351028, %v3941
        %v3948 = vor.u32 %v3946, %v3947
        %v3949 = vshll.u32 2131351028, %v3940
        %v3950 = vshrl.u32 2102212464, %v3941
        %v3951 = vor.u32 %v3949, %v3950
        %v3952 = vshll.u32 2102212464, %v3940
        %v3953 = vshrl.u32 920167782, %v3941
        %v3954 = vor.u32 %v3952, %v3953
        %v3955 = vshll.u32 920167782, %v3940
        %v3956 = vshrl.u32 1326507024, %v3941
        %v3957 = vor.u32 %v3955, %v3956
        %vm3958 = vcmp.lt.s32.totalorder %v3939, 1
        %vm3959 = vcmp.lt.s32.totalorder %v3939, 2
        %vm3960 = vcmp.lt.s32.totalorder %v3939, 3
        %vm3961 = vcmp.lt.s32.totalorder %v3939, 4
        %v3962 = vsel %vm3958, %v3942, %v3945
        %v3963 = vsel %vm3961, %v3951, 2102212464
        %v3964 = vsel %vm3960, %v3948, %v3963
        %v3965 = vsel %vm3959, %v3962, %v3964
        %v3966 = vsel %vm3958, %v3945, %v3948
        %v3967 = vsel %vm3961, %v3954, 920167782
        %v3968 = vsel %vm3960, %v3951, %v3967
        %v3969 = vsel %vm3959, %v3966, %v3968
        %v3970 = vsel %vm3958, %v3948, %v3951
        %v3971 = vsel %vm3961, %v3957, 1326507024
        %v3972 = vsel %vm3960, %v3954, %v3971
        %v3973 = vsel %vm3959, %v3970, %v3972
        %v3974 = vshll.u32 %v3934, 8
        %v3975 = vmul.u32.u64.compose %v3974, %v3973
        %v3976 = vextract.low.u32 %v3975
        %v3977 = vextract.high.u32 %v3975
        %v3978 = vmul.u32.u64.compose %v3974, %v3969
        %v3979 = vextract.low.u32 %v3978
        %v3980 = vextract.high.u32 %v3978
        %v3981 = vmul.u32 %v3974, %v3965
        %v3982 = vadd.s32 %v3977, %v3979
        %vm3983 = vc.u32 %v3977, %v3979
        %v3984 = vadd.s32 %v3980, 1
        %v3985 = vsel %vm3983, %v3984, %v3980
        %v3986 = vadd.s32 %v3981, %v3985
        %v3987 = vadd.s32 %v3986, 536870912
        %v3988 = vshrl.u32 %v3987, 30
        %v3989 = vshll.u32 %v3988, 30
        %v3990 = vsub.s32 %v3986, %v3989
        %vm3991 = vcmp.lt.s32.totalorder %v3990, 0
        %v3992 = vsub.s32 0, %v3990
        %v3993 = vsel %vm3991, %v3992, %v3990
        %v3994 = vclz %v3993
        %v3995 = vsub.s32 %v3994, 2
        %vm3996 = vcmp.gt.s32.totalorder 0, %v3995
        %v3997 = vsel %vm3996, 0, %v3995
        %v3998 = vsub.s32 32, %v3997
        %v3999 = vshll.u32 %v3990, %v3997
        %v4000 = vshrl.u32 %v3982, %v3998
        %v4001 = vor.u32 %v3999, %v4000
        %v4002 = vsub.s32 4294967266, %v3997
        %v4003 = vadd.s32 %v4002, 127
        %v4004 = vshll.u32 %v4003, 23
        %v4005 = vor.u32 4788187, %v4004
        %v4006 = vand.u32 2147483647, %v4005
        %v4008 = vcvt.s32.f32 %v4001
        %v4009 = vmul.f32 %v4008, %v4006
        %v4010 = vxor.u32 %v4009, 2147483648
        %v4011 = vsel %vm3928, %v4010, %v4009
        %v4012 = vsub.s32 4, %v3988
        %v4013 = vsel %vm3928, %v4012, %v3988
        %v4014 = vsel %vm3927, %v2364, %v4011
        %v4015 = vsel %vm3927, 0, %v4013
        %v4016 = vcosq.f32.pop %v4014
        %v4017 = vsinq.f32.pop %v4014
        %vm4018 = vweird.f32 %v2364
        %v4019 = vadd.s32 %v4015, 3
        %v4020 = vand.u32 %v4019, 3
        %vm4021 = vcmp.lt.s32.totalorder %v4020, 2
        %vm4022 = vcmp.eq.s32.totalorder %v4020, 0
        %v4023 = vxor.u32 %v4017, 2147483648
        %v4024 = vsel %vm4022, %v4016, %v4023
        %vm4025 = vcmp.eq.s32.totalorder %v4020, 2
        %v4026 = vxor.u32 %v4016, 2147483648
        %v4027 = vsel %vm4025, %v4026, %v4017
        %v4028 = vsel %vm4021, %v4024, %v4027
        %v4029 = vsel %vm4018, nan, %v4028
        %s4030 = scalar_lea.vmem %s3, 32
        %v4031 = vld [vmem:[%s4030] sm:$0xff]
        %v4032 = vld [vmem:[%s4030 + $0x8] sm:$0xff]
        %v4033 = vld [vmem:[%s4030 + $0x10] sm:$0xff]
        %v4034 = vld [vmem:[%s4030 + $0x18] sm:$0xff]
        %s4035 = scalar_lea.vmem %s4, 32
        %v4036 = vld [vmem:[%s4035] sm:$0xff]
        %v4037 = vld [vmem:[%s4035 + $0x8] sm:$0xff]
        %v4038 = vld [vmem:[%s4035 + $0x10] sm:$0xff]
        %v4039 = vld [vmem:[%s4035 + $0x18] sm:$0xff]
        %4041 = vset.pattern.permute.xlu0 0
        %4042 = vperm.xlu0 %4041, %v4036
        %v4043 = vpop.permute.xlu0 %4042
        %4046 = vset.pattern.permute.xlu0 0
        %4047 = vperm.xlu0 %4046, %v4037
        %v4048 = vpop.permute.xlu0 %4047
        %4051 = vset.pattern.permute.xlu0 0
        %4052 = vperm.xlu0 %4051, %v4038
        %v4053 = vpop.permute.xlu0 %4052
        %4056 = vset.pattern.permute.xlu0 0
        %4057 = vperm.xlu0 %4056, %v4039
        %v4058 = vpop.permute.xlu0 %4057
        %v4061 = vsel %vm2175, %v4031, 0
        %v4064 = vsel %vm2175, %v4032, 0
        %v4067 = vsel %vm2175, %v4033, 0
        %v4070 = vsel %vm2175, %v4034, 0
        %4072 = vmatprep.subr.mxu0 %v2573
        %4073 = vmatpush1.msra.mxu0 %v2469
        %4074 = vmatprep.subr.mxu0 %v2989
        %4075 = vmatpush1.msra.mxu0 %v2885
        %4076 = vmatprep.subr.mxu0 %v3405
        %4077 = vmatpush1.msra.mxu0 %v3301
        %4078 = vmatprep.subr.mxu0 %v3821
        %4079 = vmatpush1.msra.mxu0 %v3717
        %4080 = vmatprep.subr.mxu0 0.0
        %4081 = vmatpush1.msra.mxu0 0.0
        %4082 = vmatprep.subr.mxu0 0.0
        %4083 = vmatpush1.msra.mxu0 0.0
        %4084 = vmatprep.subr.mxu0 0.0
        %4085 = vmatpush1.msra.mxu0 0.0
        %4086 = vmatprep.subr.mxu0 0.0
        %4087 = vmatpush1.msra.mxu0 0.0
        %4088 = vmatprep.subr.mxu0 0.0
        %4089 = vmatpush1.msra.mxu0 0.0
        %4090 = vmatprep.subr.mxu0 0.0
        %4091 = vmatpush1.msra.mxu0 0.0
        %4092 = vmatprep.subr.mxu0 0.0
        %4093 = vmatpush1.msra.mxu0 0.0
        %4094 = vmatprep.subr.mxu0 0.0
        %4095 = vmatpush1.msra.mxu0 0.0
        %4096 = vmatprep.subr.mxu0 0.0
        %4097 = vmatpush1.msra.mxu0 0.0
        %4098 = vmatprep.subr.mxu0 0.0
        %4099 = vmatpush1.msra.mxu0 0.0
        %4100 = vmatprep.subr.mxu0 0.0
        %4101 = vmatpush1.msra.mxu0 0.0
        %4102 = vmatprep.subr.mxu0 0.0
        %4103 = vmatpush1.msra.mxu0 0.0
        %4104 = vmatprep.subr.mxu0 0.0
        %4105 = vmatpush1.msra.mxu0 0.0
        %4106 = vmatprep.subr.mxu0 0.0
        %4107 = vmatpush1.msra.mxu0 0.0
        %4108 = vmatprep.subr.mxu0 0.0
        %4109 = vmatpush1.msra.mxu0 0.0
        %4110 = vmatprep.subr.mxu0 0.0
        %4111 = vmatpush1.msra.mxu0 0.0
        %4112 = vmatprep.subr.mxu0 0.0
        %4113 = vmatpush1.msra.mxu0 0.0
        %4114 = vmatprep.subr.mxu0 0.0
        %4115 = vmatpush1.msra.mxu0 0.0
        %4116 = vmatprep.subr.mxu0 0.0
        %4117 = vmatpush1.msra.mxu0 0.0
        %4118 = vmatprep.subr.mxu0 0.0
        %4119 = vmatpush1.msra.mxu0 0.0
        %4120 = vmatprep.subr.mxu0 0.0
        %4121 = vmatpush1.msra.mxu0 0.0
        %4122 = vmatprep.subr.mxu0 0.0
        %4123 = vmatpush1.msra.mxu0 0.0
        %4124 = vmatprep.subr.mxu0 0.0
        %4125 = vmatpush1.msra.mxu0 0.0
        %4126 = vmatprep.subr.mxu0 0.0
        %4127 = vmatpush1.msra.mxu0 0.0
        %4128 = vmatprep.subr.mxu0 0.0
        %4129 = vmatpush1.msra.mxu0 0.0
        %4130 = vmatprep.subr.mxu0 0.0
        %4131 = vmatpush1.msra.mxu0 0.0
        %4132 = vmatprep.subr.mxu0 0.0
        %4133 = vmatpush1.msra.mxu0 0.0
        %4134 = vmatprep.subr.mxu0 0.0
        %4135 = vmatpush1.msra.mxu0 0.0
        %4136 = vmatprep.mubr.f32.mxu0 0.0
        %4137 = vmatmul.mubr.f32.gmra.mrb[0].mxu0 %v4061
        %v4138 = vpop.f32.mrb[0].mxu0
        %v4139 = vadd.f32 %v4043, %v4138
        %v4140 = vpop.f32.mrb[0].mxu0
        %v4141 = vadd.f32 %v4043, %v4140
        %4142 = vmatprep.mubr.f32.mxu0 0.0
        %4143 = vmatmul.mubr.f32.gmra.mrb[0].mxu0 %v4064
        %v4144 = vpop.f32.mrb[0].mxu0
        %v4145 = vadd.f32 %v4048, %v4144
        %v4146 = vpop.f32.mrb[0].mxu0
        %v4147 = vadd.f32 %v4048, %v4146
        %4148 = vmatprep.mubr.f32.mxu0 0.0
        %4149 = vmatmul.mubr.f32.gmra.mrb[0].mxu0 %v4067
        %v4150 = vpop.f32.mrb[0].mxu0
        %v4151 = vadd.f32 %v4053, %v4150
        %v4152 = vpop.f32.mrb[0].mxu0
        %v4153 = vadd.f32 %v4053, %v4152
        %4154 = vmatprep.mubr.f32.mxu0 0.0
        %4155 = vmatmul.mubr.f32.gmra.mrb[0].mxu0 %v4070
        %v4156 = vpop.f32.mrb[0].mxu0
        %v4157 = vadd.f32 %v4058, %v4156
        %v4158 = vpop.f32.mrb[0].mxu0
        %v4159 = vadd.f32 %v4058, %v4158
        %4160 = vdwg.mxu0
        %4161 = vmatprep.subr.mxu0 %v2781
        %4162 = vmatpush1.msra.mxu0 %v2677
        %4163 = vmatprep.subr.mxu0 %v3197
        %4164 = vmatpush1.msra.mxu0 %v3093
        %4165 = vmatprep.subr.mxu0 %v3613
        %4166 = vmatpush1.msra.mxu0 %v3509
        %4167 = vmatprep.subr.mxu0 %v4029
        %4168 = vmatpush1.msra.mxu0 %v3925
        %4169 = vmatprep.subr.mxu0 0.0
        %4170 = vmatpush1.msra.mxu0 0.0
        %4171 = vmatprep.subr.mxu0 0.0
        %4172 = vmatpush1.msra.mxu0 0.0
        %4173 = vmatprep.subr.mxu0 0.0
        %4174 = vmatpush1.msra.mxu0 0.0
        %4175 = vmatprep.subr.mxu0 0.0
        %4176 = vmatpush1.msra.mxu0 0.0
        %4177 = vmatprep.subr.mxu0 0.0
        %4178 = vmatpush1.msra.mxu0 0.0
        %4179 = vmatprep.subr.mxu0 0.0
        %4180 = vmatpush1.msra.mxu0 0.0
        %4181 = vmatprep.subr.mxu0 0.0
        %4182 = vmatpush1.msra.mxu0 0.0
        %4183 = vmatprep.subr.mxu0 0.0
        %4184 = vmatpush1.msra.mxu0 0.0
        %4185 = vmatprep.subr.mxu0 0.0
        %4186 = vmatpush1.msra.mxu0 0.0
        %4187 = vmatprep.subr.mxu0 0.0
        %4188 = vmatpush1.msra.mxu0 0.0
        %4189 = vmatprep.subr.mxu0 0.0
        %4190 = vmatpush1.msra.mxu0 0.0
        %4191 = vmatprep.subr.mxu0 0.0
        %4192 = vmatpush1.msra.mxu0 0.0
        %4193 = vmatprep.subr.mxu0 0.0
        %4194 = vmatpush1.msra.mxu0 0.0
        %4195 = vmatprep.subr.mxu0 0.0
        %4196 = vmatpush1.msra.mxu0 0.0
        %4197 = vmatprep.subr.mxu0 0.0
        %4198 = vmatpush1.msra.mxu0 0.0
        %4199 = vmatprep.subr.mxu0 0.0
        %4200 = vmatpush1.msra.mxu0 0.0
        %4201 = vmatprep.subr.mxu0 0.0
        %4202 = vmatpush1.msra.mxu0 0.0
        %4203 = vmatprep.subr.mxu0 0.0
        %4204 = vmatpush1.msra.mxu0 0.0
        %4205 = vmatprep.subr.mxu0 0.0
        %4206 = vmatpush1.msra.mxu0 0.0
        %4207 = vmatprep.subr.mxu0 0.0
        %4208 = vmatpush1.msra.mxu0 0.0
        %4209 = vmatprep.subr.mxu0 0.0
        %4210 = vmatpush1.msra.mxu0 0.0
        %4211 = vmatprep.subr.mxu0 0.0
        %4212 = vmatpush1.msra.mxu0 0.0
        %4213 = vmatprep.subr.mxu0 0.0
        %4214 = vmatpush1.msra.mxu0 0.0
        %4215 = vmatprep.subr.mxu0 0.0
        %4216 = vmatpush1.msra.mxu0 0.0
        %4217 = vmatprep.subr.mxu0 0.0
        %4218 = vmatpush1.msra.mxu0 0.0
        %4219 = vmatprep.subr.mxu0 0.0
        %4220 = vmatpush1.msra.mxu0 0.0
        %4221 = vmatprep.subr.mxu0 0.0
        %4222 = vmatpush1.msra.mxu0 0.0
        %4223 = vmatprep.subr.mxu0 0.0
        %4224 = vmatpush1.msra.mxu0 0.0
        %4225 = vmatprep.mubr.f32.mxu0 0.0
        %4226 = vmatmul.mubr.f32.gmra.mrb[0].mxu0 %v4061
        %v4227 = vpop.f32.mrb[0].mxu0
        %v4228 = vadd.f32 %v4043, %v4227
        %v4229 = vpop.f32.mrb[0].mxu0
        %v4230 = vadd.f32 %v4043, %v4229
        %4231 = vmatprep.mubr.f32.mxu0 0.0
        %4232 = vmatmul.mubr.f32.gmra.mrb[0].mxu0 %v4064
        %v4233 = vpop.f32.mrb[0].mxu0
        %v4234 = vadd.f32 %v4048, %v4233
        %v4235 = vpop.f32.mrb[0].mxu0
        %v4236 = vadd.f32 %v4048, %v4235
        %4237 = vmatprep.mubr.f32.mxu0 0.0
        %4238 = vmatmul.mubr.f32.gmra.mrb[0].mxu0 %v4067
        %v4239 = vpop.f32.mrb[0].mxu0
        %v4240 = vadd.f32 %v4053, %v4239
        %v4241 = vpop.f32.mrb[0].mxu0
        %v4242 = vadd.f32 %v4053, %v4241
        %4243 = vmatprep.mubr.f32.mxu0 0.0
        %4244 = vmatmul.mubr.f32.gmra.mrb[0].mxu0 %v4070
        %v4245 = vpop.f32.mrb[0].mxu0
        %v4246 = vadd.f32 %v4058, %v4245
        %v4247 = vpop.f32.mrb[0].mxu0
        %v4248 = vadd.f32 %v4058, %v4247
        %4249 = vdwg.mxu0
        %v4250 = vand.u32 2147483647, %v4139
        %vm4251 = vcmp.le.f32.partialorder %v4250, 0.7853982
        %vm4252 = vcmp.lt.s32.totalorder %v4139, 0
        %v4253 = vand.u32 %v4139, 2139095040
        %v4254 = vshrl.u32 %v4253, 23
        %v4255 = vsub.s32 %v4254, 127
        %v4256 = vand.u32 2147483647, %v4139
        %v4257 = vand.u32 %v4256, 8388607
        %v4258 = vor.u32 %v4257, 8388608
        %v4259 = vsub.s32 0, %v4258
        %v4260 = vadd.s32 %v4255, 1
        %vm4261 = vcmp.gt.s32.totalorder %v4260, 0
        %v4262 = vsel %vm4261, %v4260, 0
        %v4263 = vshrl.u32 %v4262, 5
        %v4264 = vand.u32 %v4262, 31
        %v4265 = vsub.s32 32, %v4264
        %v4266 = vshrl.u32 683565275, %v4265
        %v4267 = vshll.u32 683565275, %v4264
        %v4268 = vshrl.u32 2475754826, %v4265
        %v4269 = vor.u32 %v4267, %v4268
        %v4270 = vshll.u32 2475754826, %v4264
        %v4271 = vshrl.u32 2131351028, %v4265
        %v4272 = vor.u32 %v4270, %v4271
        %v4273 = vshll.u32 2131351028, %v4264
        %v4274 = vshrl.u32 2102212464, %v4265
        %v4275 = vor.u32 %v4273, %v4274
        %v4276 = vshll.u32 2102212464, %v4264
        %v4277 = vshrl.u32 920167782, %v4265
        %v4278 = vor.u32 %v4276, %v4277
        %v4279 = vshll.u32 920167782, %v4264
        %v4280 = vshrl.u32 1326507024, %v4265
        %v4281 = vor.u32 %v4279, %v4280
        %vm4282 = vcmp.lt.s32.totalorder %v4263, 1
        %vm4283 = vcmp.lt.s32.totalorder %v4263, 2
        %vm4284 = vcmp.lt.s32.totalorder %v4263, 3
        %vm4285 = vcmp.lt.s32.totalorder %v4263, 4
        %v4286 = vsel %vm4282, %v4266, %v4269
        %v4287 = vsel %vm4285, %v4275, 2102212464
        %v4288 = vsel %vm4284, %v4272, %v4287
        %v4289 = vsel %vm4283, %v4286, %v4288
        %v4290 = vsel %vm4282, %v4269, %v4272
        %v4291 = vsel %vm4285, %v4278, 920167782
        %v4292 = vsel %vm4284, %v4275, %v4291
        %v4293 = vsel %vm4283, %v4290, %v4292
        %v4294 = vsel %vm4282, %v4272, %v4275
        %v4295 = vsel %vm4285, %v4281, 1326507024
        %v4296 = vsel %vm4284, %v4278, %v4295
        %v4297 = vsel %vm4283, %v4294, %v4296
        %v4298 = vshll.u32 %v4258, 8
        %v4299 = vmul.u32.u64.compose %v4298, %v4297
        %v4300 = vextract.low.u32 %v4299
        %v4301 = vextract.high.u32 %v4299
        %v4302 = vmul.u32.u64.compose %v4298, %v4293
        %v4303 = vextract.low.u32 %v4302
        %v4304 = vextract.high.u32 %v4302
        %v4305 = vmul.u32 %v4298, %v4289
        %v4306 = vadd.s32 %v4301, %v4303
        %vm4307 = vc.u32 %v4301, %v4303
        %v4308 = vadd.s32 %v4304, 1
        %v4309 = vsel %vm4307, %v4308, %v4304
        %v4310 = vadd.s32 %v4305, %v4309
        %v4311 = vadd.s32 %v4310, 536870912
        %v4312 = vshrl.u32 %v4311, 30
        %v4313 = vshll.u32 %v4312, 30
        %v4314 = vsub.s32 %v4310, %v4313
        %vm4315 = vcmp.lt.s32.totalorder %v4314, 0
        %v4316 = vsub.s32 0, %v4314
        %v4317 = vsel %vm4315, %v4316, %v4314
        %v4318 = vclz %v4317
        %v4319 = vsub.s32 %v4318, 2
        %vm4320 = vcmp.gt.s32.totalorder 0, %v4319
        %v4321 = vsel %vm4320, 0, %v4319
        %v4322 = vsub.s32 32, %v4321
        %v4323 = vshll.u32 %v4314, %v4321
        %v4324 = vshrl.u32 %v4306, %v4322
        %v4325 = vor.u32 %v4323, %v4324
        %v4326 = vsub.s32 4294967266, %v4321
        %v4327 = vadd.s32 %v4326, 127
        %v4328 = vshll.u32 %v4327, 23
        %v4329 = vor.u32 4788187, %v4328
        %v4330 = vand.u32 2147483647, %v4329
        %v4332 = vcvt.s32.f32 %v4325
        %v4333 = vmul.f32 %v4332, %v4330
        %v4334 = vxor.u32 %v4333, 2147483648
        %v4335 = vsel %vm4252, %v4334, %v4333
        %v4336 = vsub.s32 4, %v4312
        %v4337 = vsel %vm4252, %v4336, %v4312
        %v4338 = vsel %vm4251, %v4139, %v4335
        %v4339 = vsel %vm4251, 0, %v4337
        %v4340 = vcosq.f32.pop %v4338
        %v4341 = vsinq.f32.pop %v4338
        %vm4342 = vweird.f32 %v4139
        %v4343 = vadd.s32 %v4339, 3
        %v4344 = vand.u32 %v4343, 3
        %vm4345 = vcmp.lt.s32.totalorder %v4344, 2
        %vm4346 = vcmp.eq.s32.totalorder %v4344, 0
        %v4347 = vxor.u32 %v4341, 2147483648
        %v4348 = vsel %vm4346, %v4340, %v4347
        %vm4349 = vcmp.eq.s32.totalorder %v4344, 2
        %v4350 = vxor.u32 %v4340, 2147483648
        %v4351 = vsel %vm4349, %v4350, %v4341
        %v4352 = vsel %vm4345, %v4348, %v4351
        %v4353 = vsel %vm4342, nan, %v4352
        %v4354 = vand.u32 2147483647, %v4141
        %vm4355 = vcmp.le.f32.partialorder %v4354, 0.7853982
        %vm4356 = vcmp.lt.s32.totalorder %v4141, 0
        %v4357 = vand.u32 %v4141, 2139095040
        %v4358 = vshrl.u32 %v4357, 23
        %v4359 = vsub.s32 %v4358, 127
        %v4360 = vand.u32 2147483647, %v4141
        %v4361 = vand.u32 %v4360, 8388607
        %v4362 = vor.u32 %v4361, 8388608
        %v4363 = vsub.s32 0, %v4362
        %v4364 = vadd.s32 %v4359, 1
        %vm4365 = vcmp.gt.s32.totalorder %v4364, 0
        %v4366 = vsel %vm4365, %v4364, 0
        %v4367 = vshrl.u32 %v4366, 5
        %v4368 = vand.u32 %v4366, 31
        %v4369 = vsub.s32 32, %v4368
        %v4370 = vshrl.u32 683565275, %v4369
        %v4371 = vshll.u32 683565275, %v4368
        %v4372 = vshrl.u32 2475754826, %v4369
        %v4373 = vor.u32 %v4371, %v4372
        %v4374 = vshll.u32 2475754826, %v4368
        %v4375 = vshrl.u32 2131351028, %v4369
        %v4376 = vor.u32 %v4374, %v4375
        %v4377 = vshll.u32 2131351028, %v4368
        %v4378 = vshrl.u32 2102212464, %v4369
        %v4379 = vor.u32 %v4377, %v4378
        %v4380 = vshll.u32 2102212464, %v4368
        %v4381 = vshrl.u32 920167782, %v4369
        %v4382 = vor.u32 %v4380, %v4381
        %v4383 = vshll.u32 920167782, %v4368
        %v4384 = vshrl.u32 1326507024, %v4369
        %v4385 = vor.u32 %v4383, %v4384
        %vm4386 = vcmp.lt.s32.totalorder %v4367, 1
        %vm4387 = vcmp.lt.s32.totalorder %v4367, 2
        %vm4388 = vcmp.lt.s32.totalorder %v4367, 3
        %vm4389 = vcmp.lt.s32.totalorder %v4367, 4
        %v4390 = vsel %vm4386, %v4370, %v4373
        %v4391 = vsel %vm4389, %v4379, 2102212464
        %v4392 = vsel %vm4388, %v4376, %v4391
        %v4393 = vsel %vm4387, %v4390, %v4392
        %v4394 = vsel %vm4386, %v4373, %v4376
        %v4395 = vsel %vm4389, %v4382, 920167782
        %v4396 = vsel %vm4388, %v4379, %v4395
        %v4397 = vsel %vm4387, %v4394, %v4396
        %v4398 = vsel %vm4386, %v4376, %v4379
        %v4399 = vsel %vm4389, %v4385, 1326507024
        %v4400 = vsel %vm4388, %v4382, %v4399
        %v4401 = vsel %vm4387, %v4398, %v4400
        %v4402 = vshll.u32 %v4362, 8
        %v4403 = vmul.u32.u64.compose %v4402, %v4401
        %v4404 = vextract.low.u32 %v4403
        %v4405 = vextract.high.u32 %v4403
        %v4406 = vmul.u32.u64.compose %v4402, %v4397
        %v4407 = vextract.low.u32 %v4406
        %v4408 = vextract.high.u32 %v4406
        %v4409 = vmul.u32 %v4402, %v4393
        %v4410 = vadd.s32 %v4405, %v4407
        %vm4411 = vc.u32 %v4405, %v4407
        %v4412 = vadd.s32 %v4408, 1
        %v4413 = vsel %vm4411, %v4412, %v4408
        %v4414 = vadd.s32 %v4409, %v4413
        %v4415 = vadd.s32 %v4414, 536870912
        %v4416 = vshrl.u32 %v4415, 30
        %v4417 = vshll.u32 %v4416, 30
        %v4418 = vsub.s32 %v4414, %v4417
        %vm4419 = vcmp.lt.s32.totalorder %v4418, 0
        %v4420 = vsub.s32 0, %v4418
        %v4421 = vsel %vm4419, %v4420, %v4418
        %v4422 = vclz %v4421
        %v4423 = vsub.s32 %v4422, 2
        %vm4424 = vcmp.gt.s32.totalorder 0, %v4423
        %v4425 = vsel %vm4424, 0, %v4423
        %v4426 = vsub.s32 32, %v4425
        %v4427 = vshll.u32 %v4418, %v4425
        %v4428 = vshrl.u32 %v4410, %v4426
        %v4429 = vor.u32 %v4427, %v4428
        %v4430 = vsub.s32 4294967266, %v4425
        %v4431 = vadd.s32 %v4430, 127
        %v4432 = vshll.u32 %v4431, 23
        %v4433 = vor.u32 4788187, %v4432
        %v4434 = vand.u32 2147483647, %v4433
        %v4436 = vcvt.s32.f32 %v4429
        %v4437 = vmul.f32 %v4436, %v4434
        %v4438 = vxor.u32 %v4437, 2147483648
        %v4439 = vsel %vm4356, %v4438, %v4437
        %v4440 = vsub.s32 4, %v4416
        %v4441 = vsel %vm4356, %v4440, %v4416
        %v4442 = vsel %vm4355, %v4141, %v4439
        %v4443 = vsel %vm4355, 0, %v4441
        %v4444 = vcosq.f32.pop %v4442
        %v4445 = vsinq.f32.pop %v4442
        %vm4446 = vweird.f32 %v4141
        %v4447 = vadd.s32 %v4443, 3
        %v4448 = vand.u32 %v4447, 3
        %vm4449 = vcmp.lt.s32.totalorder %v4448, 2
        %vm4450 = vcmp.eq.s32.totalorder %v4448, 0
        %v4451 = vxor.u32 %v4445, 2147483648
        %v4452 = vsel %vm4450, %v4444, %v4451
        %vm4453 = vcmp.eq.s32.totalorder %v4448, 2
        %v4454 = vxor.u32 %v4444, 2147483648
        %v4455 = vsel %vm4453, %v4454, %v4445
        %v4456 = vsel %vm4449, %v4452, %v4455
        %v4457 = vsel %vm4446, nan, %v4456
        %v4458 = vand.u32 2147483647, %v4228
        %vm4459 = vcmp.le.f32.partialorder %v4458, 0.7853982
        %vm4460 = vcmp.lt.s32.totalorder %v4228, 0
        %v4461 = vand.u32 %v4228, 2139095040
        %v4462 = vshrl.u32 %v4461, 23
        %v4463 = vsub.s32 %v4462, 127
        %v4464 = vand.u32 2147483647, %v4228
        %v4465 = vand.u32 %v4464, 8388607
        %v4466 = vor.u32 %v4465, 8388608
        %v4467 = vsub.s32 0, %v4466
        %v4468 = vadd.s32 %v4463, 1
        %vm4469 = vcmp.gt.s32.totalorder %v4468, 0
        %v4470 = vsel %vm4469, %v4468, 0
        %v4471 = vshrl.u32 %v4470, 5
        %v4472 = vand.u32 %v4470, 31
        %v4473 = vsub.s32 32, %v4472
        %v4474 = vshrl.u32 683565275, %v4473
        %v4475 = vshll.u32 683565275, %v4472
        %v4476 = vshrl.u32 2475754826, %v4473
        %v4477 = vor.u32 %v4475, %v4476
        %v4478 = vshll.u32 2475754826, %v4472
        %v4479 = vshrl.u32 2131351028, %v4473
        %v4480 = vor.u32 %v4478, %v4479
        %v4481 = vshll.u32 2131351028, %v4472
        %v4482 = vshrl.u32 2102212464, %v4473
        %v4483 = vor.u32 %v4481, %v4482
        %v4484 = vshll.u32 2102212464, %v4472
        %v4485 = vshrl.u32 920167782, %v4473
        %v4486 = vor.u32 %v4484, %v4485
        %v4487 = vshll.u32 920167782, %v4472
        %v4488 = vshrl.u32 1326507024, %v4473
        %v4489 = vor.u32 %v4487, %v4488
        %vm4490 = vcmp.lt.s32.totalorder %v4471, 1
        %vm4491 = vcmp.lt.s32.totalorder %v4471, 2
        %vm4492 = vcmp.lt.s32.totalorder %v4471, 3
        %vm4493 = vcmp.lt.s32.totalorder %v4471, 4
        %v4494 = vsel %vm4490, %v4474, %v4477
        %v4495 = vsel %vm4493, %v4483, 2102212464
        %v4496 = vsel %vm4492, %v4480, %v4495
        %v4497 = vsel %vm4491, %v4494, %v4496
        %v4498 = vsel %vm4490, %v4477, %v4480
        %v4499 = vsel %vm4493, %v4486, 920167782
        %v4500 = vsel %vm4492, %v4483, %v4499
        %v4501 = vsel %vm4491, %v4498, %v4500
        %v4502 = vsel %vm4490, %v4480, %v4483
        %v4503 = vsel %vm4493, %v4489, 1326507024
        %v4504 = vsel %vm4492, %v4486, %v4503
        %v4505 = vsel %vm4491, %v4502, %v4504
        %v4506 = vshll.u32 %v4466, 8
        %v4507 = vmul.u32.u64.compose %v4506, %v4505
        %v4508 = vextract.low.u32 %v4507
        %v4509 = vextract.high.u32 %v4507
        %v4510 = vmul.u32.u64.compose %v4506, %v4501
        %v4511 = vextract.low.u32 %v4510
        %v4512 = vextract.high.u32 %v4510
        %v4513 = vmul.u32 %v4506, %v4497
        %v4514 = vadd.s32 %v4509, %v4511
        %vm4515 = vc.u32 %v4509, %v4511
        %v4516 = vadd.s32 %v4512, 1
        %v4517 = vsel %vm4515, %v4516, %v4512
        %v4518 = vadd.s32 %v4513, %v4517
        %v4519 = vadd.s32 %v4518, 536870912
        %v4520 = vshrl.u32 %v4519, 30
        %v4521 = vshll.u32 %v4520, 30
        %v4522 = vsub.s32 %v4518, %v4521
        %vm4523 = vcmp.lt.s32.totalorder %v4522, 0
        %v4524 = vsub.s32 0, %v4522
        %v4525 = vsel %vm4523, %v4524, %v4522
        %v4526 = vclz %v4525
        %v4527 = vsub.s32 %v4526, 2
        %vm4528 = vcmp.gt.s32.totalorder 0, %v4527
        %v4529 = vsel %vm4528, 0, %v4527
        %v4530 = vsub.s32 32, %v4529
        %v4531 = vshll.u32 %v4522, %v4529
        %v4532 = vshrl.u32 %v4514, %v4530
        %v4533 = vor.u32 %v4531, %v4532
        %v4534 = vsub.s32 4294967266, %v4529
        %v4535 = vadd.s32 %v4534, 127
        %v4536 = vshll.u32 %v4535, 23
        %v4537 = vor.u32 4788187, %v4536
        %v4538 = vand.u32 2147483647, %v4537
        %v4540 = vcvt.s32.f32 %v4533
        %v4541 = vmul.f32 %v4540, %v4538
        %v4542 = vxor.u32 %v4541, 2147483648
        %v4543 = vsel %vm4460, %v4542, %v4541
        %v4544 = vsub.s32 4, %v4520
        %v4545 = vsel %vm4460, %v4544, %v4520
        %v4546 = vsel %vm4459, %v4228, %v4543
        %v4547 = vsel %vm4459, 0, %v4545
        %v4548 = vcosq.f32.pop %v4546
        %v4549 = vsinq.f32.pop %v4546
        %vm4550 = vweird.f32 %v4228
        %v4551 = vadd.s32 %v4547, 3
        %v4552 = vand.u32 %v4551, 3
        %vm4553 = vcmp.lt.s32.totalorder %v4552, 2
        %vm4554 = vcmp.eq.s32.totalorder %v4552, 0
        %v4555 = vxor.u32 %v4549, 2147483648
        %v4556 = vsel %vm4554, %v4548, %v4555
        %vm4557 = vcmp.eq.s32.totalorder %v4552, 2
        %v4558 = vxor.u32 %v4548, 2147483648
        %v4559 = vsel %vm4557, %v4558, %v4549
        %v4560 = vsel %vm4553, %v4556, %v4559
        %v4561 = vsel %vm4550, nan, %v4560
        %v4562 = vand.u32 2147483647, %v4230
        %vm4563 = vcmp.le.f32.partialorder %v4562, 0.7853982
        %vm4564 = vcmp.lt.s32.totalorder %v4230, 0
        %v4565 = vand.u32 %v4230, 2139095040
        %v4566 = vshrl.u32 %v4565, 23
        %v4567 = vsub.s32 %v4566, 127
        %v4568 = vand.u32 2147483647, %v4230
        %v4569 = vand.u32 %v4568, 8388607
        %v4570 = vor.u32 %v4569, 8388608
        %v4571 = vsub.s32 0, %v4570
        %v4572 = vadd.s32 %v4567, 1
        %vm4573 = vcmp.gt.s32.totalorder %v4572, 0
        %v4574 = vsel %vm4573, %v4572, 0
        %v4575 = vshrl.u32 %v4574, 5
        %v4576 = vand.u32 %v4574, 31
        %v4577 = vsub.s32 32, %v4576
        %v4578 = vshrl.u32 683565275, %v4577
        %v4579 = vshll.u32 683565275, %v4576
        %v4580 = vshrl.u32 2475754826, %v4577
        %v4581 = vor.u32 %v4579, %v4580
        %v4582 = vshll.u32 2475754826, %v4576
        %v4583 = vshrl.u32 2131351028, %v4577
        %v4584 = vor.u32 %v4582, %v4583
        %v4585 = vshll.u32 2131351028, %v4576
        %v4586 = vshrl.u32 2102212464, %v4577
        %v4587 = vor.u32 %v4585, %v4586
        %v4588 = vshll.u32 2102212464, %v4576
        %v4589 = vshrl.u32 920167782, %v4577
        %v4590 = vor.u32 %v4588, %v4589
        %v4591 = vshll.u32 920167782, %v4576
        %v4592 = vshrl.u32 1326507024, %v4577
        %v4593 = vor.u32 %v4591, %v4592
        %vm4594 = vcmp.lt.s32.totalorder %v4575, 1
        %vm4595 = vcmp.lt.s32.totalorder %v4575, 2
        %vm4596 = vcmp.lt.s32.totalorder %v4575, 3
        %vm4597 = vcmp.lt.s32.totalorder %v4575, 4
        %v4598 = vsel %vm4594, %v4578, %v4581
        %v4599 = vsel %vm4597, %v4587, 2102212464
        %v4600 = vsel %vm4596, %v4584, %v4599
        %v4601 = vsel %vm4595, %v4598, %v4600
        %v4602 = vsel %vm4594, %v4581, %v4584
        %v4603 = vsel %vm4597, %v4590, 920167782
        %v4604 = vsel %vm4596, %v4587, %v4603
        %v4605 = vsel %vm4595, %v4602, %v4604
        %v4606 = vsel %vm4594, %v4584, %v4587
        %v4607 = vsel %vm4597, %v4593, 1326507024
        %v4608 = vsel %vm4596, %v4590, %v4607
        %v4609 = vsel %vm4595, %v4606, %v4608
        %v4610 = vshll.u32 %v4570, 8
        %v4611 = vmul.u32.u64.compose %v4610, %v4609
        %v4612 = vextract.low.u32 %v4611
        %v4613 = vextract.high.u32 %v4611
        %v4614 = vmul.u32.u64.compose %v4610, %v4605
        %v4615 = vextract.low.u32 %v4614
        %v4616 = vextract.high.u32 %v4614
        %v4617 = vmul.u32 %v4610, %v4601
        %v4618 = vadd.s32 %v4613, %v4615
        %vm4619 = vc.u32 %v4613, %v4615
        %v4620 = vadd.s32 %v4616, 1
        %v4621 = vsel %vm4619, %v4620, %v4616
        %v4622 = vadd.s32 %v4617, %v4621
        %v4623 = vadd.s32 %v4622, 536870912
        %v4624 = vshrl.u32 %v4623, 30
        %v4625 = vshll.u32 %v4624, 30
        %v4626 = vsub.s32 %v4622, %v4625
        %vm4627 = vcmp.lt.s32.totalorder %v4626, 0
        %v4628 = vsub.s32 0, %v4626
        %v4629 = vsel %vm4627, %v4628, %v4626
        %v4630 = vclz %v4629
        %v4631 = vsub.s32 %v4630, 2
        %vm4632 = vcmp.gt.s32.totalorder 0, %v4631
        %v4633 = vsel %vm4632, 0, %v4631
        %v4634 = vsub.s32 32, %v4633
        %v4635 = vshll.u32 %v4626, %v4633
        %v4636 = vshrl.u32 %v4618, %v4634
        %v4637 = vor.u32 %v4635, %v4636
        %v4638 = vsub.s32 4294967266, %v4633
        %v4639 = vadd.s32 %v4638, 127
        %v4640 = vshll.u32 %v4639, 23
        %v4641 = vor.u32 4788187, %v4640
        %v4642 = vand.u32 2147483647, %v4641
        %v4644 = vcvt.s32.f32 %v4637
        %v4645 = vmul.f32 %v4644, %v4642
        %v4646 = vxor.u32 %v4645, 2147483648
        %v4647 = vsel %vm4564, %v4646, %v4645
        %v4648 = vsub.s32 4, %v4624
        %v4649 = vsel %vm4564, %v4648, %v4624
        %v4650 = vsel %vm4563, %v4230, %v4647
        %v4651 = vsel %vm4563, 0, %v4649
        %v4652 = vcosq.f32.pop %v4650
        %v4653 = vsinq.f32.pop %v4650
        %vm4654 = vweird.f32 %v4230
        %v4655 = vadd.s32 %v4651, 3
        %v4656 = vand.u32 %v4655, 3
        %vm4657 = vcmp.lt.s32.totalorder %v4656, 2
        %vm4658 = vcmp.eq.s32.totalorder %v4656, 0
        %v4659 = vxor.u32 %v4653, 2147483648
        %v4660 = vsel %vm4658, %v4652, %v4659
        %vm4661 = vcmp.eq.s32.totalorder %v4656, 2
        %v4662 = vxor.u32 %v4652, 2147483648
        %v4663 = vsel %vm4661, %v4662, %v4653
        %v4664 = vsel %vm4657, %v4660, %v4663
        %v4665 = vsel %vm4654, nan, %v4664
        %v4666 = vand.u32 2147483647, %v4145
        %vm4667 = vcmp.le.f32.partialorder %v4666, 0.7853982
        %vm4668 = vcmp.lt.s32.totalorder %v4145, 0
        %v4669 = vand.u32 %v4145, 2139095040
        %v4670 = vshrl.u32 %v4669, 23
        %v4671 = vsub.s32 %v4670, 127
        %v4672 = vand.u32 2147483647, %v4145
        %v4673 = vand.u32 %v4672, 8388607
        %v4674 = vor.u32 %v4673, 8388608
        %v4675 = vsub.s32 0, %v4674
        %v4676 = vadd.s32 %v4671, 1
        %vm4677 = vcmp.gt.s32.totalorder %v4676, 0
        %v4678 = vsel %vm4677, %v4676, 0
        %v4679 = vshrl.u32 %v4678, 5
        %v4680 = vand.u32 %v4678, 31
        %v4681 = vsub.s32 32, %v4680
        %v4682 = vshrl.u32 683565275, %v4681
        %v4683 = vshll.u32 683565275, %v4680
        %v4684 = vshrl.u32 2475754826, %v4681
        %v4685 = vor.u32 %v4683, %v4684
        %v4686 = vshll.u32 2475754826, %v4680
        %v4687 = vshrl.u32 2131351028, %v4681
        %v4688 = vor.u32 %v4686, %v4687
        %v4689 = vshll.u32 2131351028, %v4680
        %v4690 = vshrl.u32 2102212464, %v4681
        %v4691 = vor.u32 %v4689, %v4690
        %v4692 = vshll.u32 2102212464, %v4680
        %v4693 = vshrl.u32 920167782, %v4681
        %v4694 = vor.u32 %v4692, %v4693
        %v4695 = vshll.u32 920167782, %v4680
        %v4696 = vshrl.u32 1326507024, %v4681
        %v4697 = vor.u32 %v4695, %v4696
        %vm4698 = vcmp.lt.s32.totalorder %v4679, 1
        %vm4699 = vcmp.lt.s32.totalorder %v4679, 2
        %vm4700 = vcmp.lt.s32.totalorder %v4679, 3
        %vm4701 = vcmp.lt.s32.totalorder %v4679, 4
        %v4702 = vsel %vm4698, %v4682, %v4685
        %v4703 = vsel %vm4701, %v4691, 2102212464
        %v4704 = vsel %vm4700, %v4688, %v4703
        %v4705 = vsel %vm4699, %v4702, %v4704
        %v4706 = vsel %vm4698, %v4685, %v4688
        %v4707 = vsel %vm4701, %v4694, 920167782
        %v4708 = vsel %vm4700, %v4691, %v4707
        %v4709 = vsel %vm4699, %v4706, %v4708
        %v4710 = vsel %vm4698, %v4688, %v4691
        %v4711 = vsel %vm4701, %v4697, 1326507024
        %v4712 = vsel %vm4700, %v4694, %v4711
        %v4713 = vsel %vm4699, %v4710, %v4712
        %v4714 = vshll.u32 %v4674, 8
        %v4715 = vmul.u32.u64.compose %v4714, %v4713
        %v4716 = vextract.low.u32 %v4715
        %v4717 = vextract.high.u32 %v4715
        %v4718 = vmul.u32.u64.compose %v4714, %v4709
        %v4719 = vextract.low.u32 %v4718
        %v4720 = vextract.high.u32 %v4718
        %v4721 = vmul.u32 %v4714, %v4705
        %v4722 = vadd.s32 %v4717, %v4719
        %vm4723 = vc.u32 %v4717, %v4719
        %v4724 = vadd.s32 %v4720, 1
        %v4725 = vsel %vm4723, %v4724, %v4720
        %v4726 = vadd.s32 %v4721, %v4725
        %v4727 = vadd.s32 %v4726, 536870912
        %v4728 = vshrl.u32 %v4727, 30
        %v4729 = vshll.u32 %v4728, 30
        %v4730 = vsub.s32 %v4726, %v4729
        %vm4731 = vcmp.lt.s32.totalorder %v4730, 0
        %v4732 = vsub.s32 0, %v4730
        %v4733 = vsel %vm4731, %v4732, %v4730
        %v4734 = vclz %v4733
        %v4735 = vsub.s32 %v4734, 2
        %vm4736 = vcmp.gt.s32.totalorder 0, %v4735
        %v4737 = vsel %vm4736, 0, %v4735
        %v4738 = vsub.s32 32, %v4737
        %v4739 = vshll.u32 %v4730, %v4737
        %v4740 = vshrl.u32 %v4722, %v4738
        %v4741 = vor.u32 %v4739, %v4740
        %v4742 = vsub.s32 4294967266, %v4737
        %v4743 = vadd.s32 %v4742, 127
        %v4744 = vshll.u32 %v4743, 23
        %v4745 = vor.u32 4788187, %v4744
        %v4746 = vand.u32 2147483647, %v4745
        %v4748 = vcvt.s32.f32 %v4741
        %v4749 = vmul.f32 %v4748, %v4746
        %v4750 = vxor.u32 %v4749, 2147483648
        %v4751 = vsel %vm4668, %v4750, %v4749
        %v4752 = vsub.s32 4, %v4728
        %v4753 = vsel %vm4668, %v4752, %v4728
        %v4754 = vsel %vm4667, %v4145, %v4751
        %v4755 = vsel %vm4667, 0, %v4753
        %v4756 = vcosq.f32.pop %v4754
        %v4757 = vsinq.f32.pop %v4754
        %vm4758 = vweird.f32 %v4145
        %v4759 = vadd.s32 %v4755, 3
        %v4760 = vand.u32 %v4759, 3
        %vm4761 = vcmp.lt.s32.totalorder %v4760, 2
        %vm4762 = vcmp.eq.s32.totalorder %v4760, 0
        %v4763 = vxor.u32 %v4757, 2147483648
        %v4764 = vsel %vm4762, %v4756, %v4763
        %vm4765 = vcmp.eq.s32.totalorder %v4760, 2
        %v4766 = vxor.u32 %v4756, 2147483648
        %v4767 = vsel %vm4765, %v4766, %v4757
        %v4768 = vsel %vm4761, %v4764, %v4767
        %v4769 = vsel %vm4758, nan, %v4768
        %v4770 = vand.u32 2147483647, %v4147
        %vm4771 = vcmp.le.f32.partialorder %v4770, 0.7853982
        %vm4772 = vcmp.lt.s32.totalorder %v4147, 0
        %v4773 = vand.u32 %v4147, 2139095040
        %v4774 = vshrl.u32 %v4773, 23
        %v4775 = vsub.s32 %v4774, 127
        %v4776 = vand.u32 2147483647, %v4147
        %v4777 = vand.u32 %v4776, 8388607
        %v4778 = vor.u32 %v4777, 8388608
        %v4779 = vsub.s32 0, %v4778
        %v4780 = vadd.s32 %v4775, 1
        %vm4781 = vcmp.gt.s32.totalorder %v4780, 0
        %v4782 = vsel %vm4781, %v4780, 0
        %v4783 = vshrl.u32 %v4782, 5
        %v4784 = vand.u32 %v4782, 31
        %v4785 = vsub.s32 32, %v4784
        %v4786 = vshrl.u32 683565275, %v4785
        %v4787 = vshll.u32 683565275, %v4784
        %v4788 = vshrl.u32 2475754826, %v4785
        %v4789 = vor.u32 %v4787, %v4788
        %v4790 = vshll.u32 2475754826, %v4784
        %v4791 = vshrl.u32 2131351028, %v4785
        %v4792 = vor.u32 %v4790, %v4791
        %v4793 = vshll.u32 2131351028, %v4784
        %v4794 = vshrl.u32 2102212464, %v4785
        %v4795 = vor.u32 %v4793, %v4794
        %v4796 = vshll.u32 2102212464, %v4784
        %v4797 = vshrl.u32 920167782, %v4785
        %v4798 = vor.u32 %v4796, %v4797
        %v4799 = vshll.u32 920167782, %v4784
        %v4800 = vshrl.u32 1326507024, %v4785
        %v4801 = vor.u32 %v4799, %v4800
        %vm4802 = vcmp.lt.s32.totalorder %v4783, 1
        %vm4803 = vcmp.lt.s32.totalorder %v4783, 2
        %vm4804 = vcmp.lt.s32.totalorder %v4783, 3
        %vm4805 = vcmp.lt.s32.totalorder %v4783, 4
        %v4806 = vsel %vm4802, %v4786, %v4789
        %v4807 = vsel %vm4805, %v4795, 2102212464
        %v4808 = vsel %vm4804, %v4792, %v4807
        %v4809 = vsel %vm4803, %v4806, %v4808
        %v4810 = vsel %vm4802, %v4789, %v4792
        %v4811 = vsel %vm4805, %v4798, 920167782
        %v4812 = vsel %vm4804, %v4795, %v4811
        %v4813 = vsel %vm4803, %v4810, %v4812
        %v4814 = vsel %vm4802, %v4792, %v4795
        %v4815 = vsel %vm4805, %v4801, 1326507024
        %v4816 = vsel %vm4804, %v4798, %v4815
        %v4817 = vsel %vm4803, %v4814, %v4816
        %v4818 = vshll.u32 %v4778, 8
        %v4819 = vmul.u32.u64.compose %v4818, %v4817
        %v4820 = vextract.low.u32 %v4819
        %v4821 = vextract.high.u32 %v4819
        %v4822 = vmul.u32.u64.compose %v4818, %v4813
        %v4823 = vextract.low.u32 %v4822
        %v4824 = vextract.high.u32 %v4822
        %v4825 = vmul.u32 %v4818, %v4809
        %v4826 = vadd.s32 %v4821, %v4823
        %vm4827 = vc.u32 %v4821, %v4823
        %v4828 = vadd.s32 %v4824, 1
        %v4829 = vsel %vm4827, %v4828, %v4824
        %v4830 = vadd.s32 %v4825, %v4829
        %v4831 = vadd.s32 %v4830, 536870912
        %v4832 = vshrl.u32 %v4831, 30
        %v4833 = vshll.u32 %v4832, 30
        %v4834 = vsub.s32 %v4830, %v4833
        %vm4835 = vcmp.lt.s32.totalorder %v4834, 0
        %v4836 = vsub.s32 0, %v4834
        %v4837 = vsel %vm4835, %v4836, %v4834
        %v4838 = vclz %v4837
        %v4839 = vsub.s32 %v4838, 2
        %vm4840 = vcmp.gt.s32.totalorder 0, %v4839
        %v4841 = vsel %vm4840, 0, %v4839
        %v4842 = vsub.s32 32, %v4841
        %v4843 = vshll.u32 %v4834, %v4841
        %v4844 = vshrl.u32 %v4826, %v4842
        %v4845 = vor.u32 %v4843, %v4844
        %v4846 = vsub.s32 4294967266, %v4841
        %v4847 = vadd.s32 %v4846, 127
        %v4848 = vshll.u32 %v4847, 23
        %v4849 = vor.u32 4788187, %v4848
        %v4850 = vand.u32 2147483647, %v4849
        %v4852 = vcvt.s32.f32 %v4845
        %v4853 = vmul.f32 %v4852, %v4850
        %v4854 = vxor.u32 %v4853, 2147483648
        %v4855 = vsel %vm4772, %v4854, %v4853
        %v4856 = vsub.s32 4, %v4832
        %v4857 = vsel %vm4772, %v4856, %v4832
        %v4858 = vsel %vm4771, %v4147, %v4855
        %v4859 = vsel %vm4771, 0, %v4857
        %v4860 = vcosq.f32.pop %v4858
        %v4861 = vsinq.f32.pop %v4858
        %vm4862 = vweird.f32 %v4147
        %v4863 = vadd.s32 %v4859, 3
        %v4864 = vand.u32 %v4863, 3
        %vm4865 = vcmp.lt.s32.totalorder %v4864, 2
        %vm4866 = vcmp.eq.s32.totalorder %v4864, 0
        %v4867 = vxor.u32 %v4861, 2147483648
        %v4868 = vsel %vm4866, %v4860, %v4867
        %vm4869 = vcmp.eq.s32.totalorder %v4864, 2
        %v4870 = vxor.u32 %v4860, 2147483648
        %v4871 = vsel %vm4869, %v4870, %v4861
        %v4872 = vsel %vm4865, %v4868, %v4871
        %v4873 = vsel %vm4862, nan, %v4872
        %v4874 = vand.u32 2147483647, %v4234
        %vm4875 = vcmp.le.f32.partialorder %v4874, 0.7853982
        %vm4876 = vcmp.lt.s32.totalorder %v4234, 0
        %v4877 = vand.u32 %v4234, 2139095040
        %v4878 = vshrl.u32 %v4877, 23
        %v4879 = vsub.s32 %v4878, 127
        %v4880 = vand.u32 2147483647, %v4234
        %v4881 = vand.u32 %v4880, 8388607
        %v4882 = vor.u32 %v4881, 8388608
        %v4883 = vsub.s32 0, %v4882
        %v4884 = vadd.s32 %v4879, 1
        %vm4885 = vcmp.gt.s32.totalorder %v4884, 0
        %v4886 = vsel %vm4885, %v4884, 0
        %v4887 = vshrl.u32 %v4886, 5
        %v4888 = vand.u32 %v4886, 31
        %v4889 = vsub.s32 32, %v4888
        %v4890 = vshrl.u32 683565275, %v4889
        %v4891 = vshll.u32 683565275, %v4888
        %v4892 = vshrl.u32 2475754826, %v4889
        %v4893 = vor.u32 %v4891, %v4892
        %v4894 = vshll.u32 2475754826, %v4888
        %v4895 = vshrl.u32 2131351028, %v4889
        %v4896 = vor.u32 %v4894, %v4895
        %v4897 = vshll.u32 2131351028, %v4888
        %v4898 = vshrl.u32 2102212464, %v4889
        %v4899 = vor.u32 %v4897, %v4898
        %v4900 = vshll.u32 2102212464, %v4888
        %v4901 = vshrl.u32 920167782, %v4889
        %v4902 = vor.u32 %v4900, %v4901
        %v4903 = vshll.u32 920167782, %v4888
        %v4904 = vshrl.u32 1326507024, %v4889
        %v4905 = vor.u32 %v4903, %v4904
        %vm4906 = vcmp.lt.s32.totalorder %v4887, 1
        %vm4907 = vcmp.lt.s32.totalorder %v4887, 2
        %vm4908 = vcmp.lt.s32.totalorder %v4887, 3
        %vm4909 = vcmp.lt.s32.totalorder %v4887, 4
        %v4910 = vsel %vm4906, %v4890, %v4893
        %v4911 = vsel %vm4909, %v4899, 2102212464
        %v4912 = vsel %vm4908, %v4896, %v4911
        %v4913 = vsel %vm4907, %v4910, %v4912
        %v4914 = vsel %vm4906, %v4893, %v4896
        %v4915 = vsel %vm4909, %v4902, 920167782
        %v4916 = vsel %vm4908, %v4899, %v4915
        %v4917 = vsel %vm4907, %v4914, %v4916
        %v4918 = vsel %vm4906, %v4896, %v4899
        %v4919 = vsel %vm4909, %v4905, 1326507024
        %v4920 = vsel %vm4908, %v4902, %v4919
        %v4921 = vsel %vm4907, %v4918, %v4920
        %v4922 = vshll.u32 %v4882, 8
        %v4923 = vmul.u32.u64.compose %v4922, %v4921
        %v4924 = vextract.low.u32 %v4923
        %v4925 = vextract.high.u32 %v4923
        %v4926 = vmul.u32.u64.compose %v4922, %v4917
        %v4927 = vextract.low.u32 %v4926
        %v4928 = vextract.high.u32 %v4926
        %v4929 = vmul.u32 %v4922, %v4913
        %v4930 = vadd.s32 %v4925, %v4927
        %vm4931 = vc.u32 %v4925, %v4927
        %v4932 = vadd.s32 %v4928, 1
        %v4933 = vsel %vm4931, %v4932, %v4928
        %v4934 = vadd.s32 %v4929, %v4933
        %v4935 = vadd.s32 %v4934, 536870912
        %v4936 = vshrl.u32 %v4935, 30
        %v4937 = vshll.u32 %v4936, 30
        %v4938 = vsub.s32 %v4934, %v4937
        %vm4939 = vcmp.lt.s32.totalorder %v4938, 0
        %v4940 = vsub.s32 0, %v4938
        %v4941 = vsel %vm4939, %v4940, %v4938
        %v4942 = vclz %v4941
        %v4943 = vsub.s32 %v4942, 2
        %vm4944 = vcmp.gt.s32.totalorder 0, %v4943
        %v4945 = vsel %vm4944, 0, %v4943
        %v4946 = vsub.s32 32, %v4945
        %v4947 = vshll.u32 %v4938, %v4945
        %v4948 = vshrl.u32 %v4930, %v4946
        %v4949 = vor.u32 %v4947, %v4948
        %v4950 = vsub.s32 4294967266, %v4945
        %v4951 = vadd.s32 %v4950, 127
        %v4952 = vshll.u32 %v4951, 23
        %v4953 = vor.u32 4788187, %v4952
        %v4954 = vand.u32 2147483647, %v4953
        %v4956 = vcvt.s32.f32 %v4949
        %v4957 = vmul.f32 %v4956, %v4954
        %v4958 = vxor.u32 %v4957, 2147483648
        %v4959 = vsel %vm4876, %v4958, %v4957
        %v4960 = vsub.s32 4, %v4936
        %v4961 = vsel %vm4876, %v4960, %v4936
        %v4962 = vsel %vm4875, %v4234, %v4959
        %v4963 = vsel %vm4875, 0, %v4961
        %v4964 = vcosq.f32.pop %v4962
        %v4965 = vsinq.f32.pop %v4962
        %vm4966 = vweird.f32 %v4234
        %v4967 = vadd.s32 %v4963, 3
        %v4968 = vand.u32 %v4967, 3
        %vm4969 = vcmp.lt.s32.totalorder %v4968, 2
        %vm4970 = vcmp.eq.s32.totalorder %v4968, 0
        %v4971 = vxor.u32 %v4965, 2147483648
        %v4972 = vsel %vm4970, %v4964, %v4971
        %vm4973 = vcmp.eq.s32.totalorder %v4968, 2
        %v4974 = vxor.u32 %v4964, 2147483648
        %v4975 = vsel %vm4973, %v4974, %v4965
        %v4976 = vsel %vm4969, %v4972, %v4975
        %v4977 = vsel %vm4966, nan, %v4976
        %v4978 = vand.u32 2147483647, %v4236
        %vm4979 = vcmp.le.f32.partialorder %v4978, 0.7853982
        %vm4980 = vcmp.lt.s32.totalorder %v4236, 0
        %v4981 = vand.u32 %v4236, 2139095040
        %v4982 = vshrl.u32 %v4981, 23
        %v4983 = vsub.s32 %v4982, 127
        %v4984 = vand.u32 2147483647, %v4236
        %v4985 = vand.u32 %v4984, 8388607
        %v4986 = vor.u32 %v4985, 8388608
        %v4987 = vsub.s32 0, %v4986
        %v4988 = vadd.s32 %v4983, 1
        %vm4989 = vcmp.gt.s32.totalorder %v4988, 0
        %v4990 = vsel %vm4989, %v4988, 0
        %v4991 = vshrl.u32 %v4990, 5
        %v4992 = vand.u32 %v4990, 31
        %v4993 = vsub.s32 32, %v4992
        %v4994 = vshrl.u32 683565275, %v4993
        %v4995 = vshll.u32 683565275, %v4992
        %v4996 = vshrl.u32 2475754826, %v4993
        %v4997 = vor.u32 %v4995, %v4996
        %v4998 = vshll.u32 2475754826, %v4992
        %v4999 = vshrl.u32 2131351028, %v4993
        %v5000 = vor.u32 %v4998, %v4999
        %v5001 = vshll.u32 2131351028, %v4992
        %v5002 = vshrl.u32 2102212464, %v4993
        %v5003 = vor.u32 %v5001, %v5002
        %v5004 = vshll.u32 2102212464, %v4992
        %v5005 = vshrl.u32 920167782, %v4993
        %v5006 = vor.u32 %v5004, %v5005
        %v5007 = vshll.u32 920167782, %v4992
        %v5008 = vshrl.u32 1326507024, %v4993
        %v5009 = vor.u32 %v5007, %v5008
        %vm5010 = vcmp.lt.s32.totalorder %v4991, 1
        %vm5011 = vcmp.lt.s32.totalorder %v4991, 2
        %vm5012 = vcmp.lt.s32.totalorder %v4991, 3
        %vm5013 = vcmp.lt.s32.totalorder %v4991, 4
        %v5014 = vsel %vm5010, %v4994, %v4997
        %v5015 = vsel %vm5013, %v5003, 2102212464
        %v5016 = vsel %vm5012, %v5000, %v5015
        %v5017 = vsel %vm5011, %v5014, %v5016
        %v5018 = vsel %vm5010, %v4997, %v5000
        %v5019 = vsel %vm5013, %v5006, 920167782
        %v5020 = vsel %vm5012, %v5003, %v5019
        %v5021 = vsel %vm5011, %v5018, %v5020
        %v5022 = vsel %vm5010, %v5000, %v5003
        %v5023 = vsel %vm5013, %v5009, 1326507024
        %v5024 = vsel %vm5012, %v5006, %v5023
        %v5025 = vsel %vm5011, %v5022, %v5024
        %v5026 = vshll.u32 %v4986, 8
        %v5027 = vmul.u32.u64.compose %v5026, %v5025
        %v5028 = vextract.low.u32 %v5027
        %v5029 = vextract.high.u32 %v5027
        %v5030 = vmul.u32.u64.compose %v5026, %v5021
        %v5031 = vextract.low.u32 %v5030
        %v5032 = vextract.high.u32 %v5030
        %v5033 = vmul.u32 %v5026, %v5017
        %v5034 = vadd.s32 %v5029, %v5031
        %vm5035 = vc.u32 %v5029, %v5031
        %v5036 = vadd.s32 %v5032, 1
        %v5037 = vsel %vm5035, %v5036, %v5032
        %v5038 = vadd.s32 %v5033, %v5037
        %v5039 = vadd.s32 %v5038, 536870912
        %v5040 = vshrl.u32 %v5039, 30
        %v5041 = vshll.u32 %v5040, 30
        %v5042 = vsub.s32 %v5038, %v5041
        %vm5043 = vcmp.lt.s32.totalorder %v5042, 0
        %v5044 = vsub.s32 0, %v5042
        %v5045 = vsel %vm5043, %v5044, %v5042
        %v5046 = vclz %v5045
        %v5047 = vsub.s32 %v5046, 2
        %vm5048 = vcmp.gt.s32.totalorder 0, %v5047
        %v5049 = vsel %vm5048, 0, %v5047
        %v5050 = vsub.s32 32, %v5049
        %v5051 = vshll.u32 %v5042, %v5049
        %v5052 = vshrl.u32 %v5034, %v5050
        %v5053 = vor.u32 %v5051, %v5052
        %v5054 = vsub.s32 4294967266, %v5049
        %v5055 = vadd.s32 %v5054, 127
        %v5056 = vshll.u32 %v5055, 23
        %v5057 = vor.u32 4788187, %v5056
        %v5058 = vand.u32 2147483647, %v5057
        %v5060 = vcvt.s32.f32 %v5053
        %v5061 = vmul.f32 %v5060, %v5058
        %v5062 = vxor.u32 %v5061, 2147483648
        %v5063 = vsel %vm4980, %v5062, %v5061
        %v5064 = vsub.s32 4, %v5040
        %v5065 = vsel %vm4980, %v5064, %v5040
        %v5066 = vsel %vm4979, %v4236, %v5063
        %v5067 = vsel %vm4979, 0, %v5065
        %v5068 = vcosq.f32.pop %v5066
        %v5069 = vsinq.f32.pop %v5066
        %vm5070 = vweird.f32 %v4236
        %v5071 = vadd.s32 %v5067, 3
        %v5072 = vand.u32 %v5071, 3
        %vm5073 = vcmp.lt.s32.totalorder %v5072, 2
        %vm5074 = vcmp.eq.s32.totalorder %v5072, 0
        %v5075 = vxor.u32 %v5069, 2147483648
        %v5076 = vsel %vm5074, %v5068, %v5075
        %vm5077 = vcmp.eq.s32.totalorder %v5072, 2
        %v5078 = vxor.u32 %v5068, 2147483648
        %v5079 = vsel %vm5077, %v5078, %v5069
        %v5080 = vsel %vm5073, %v5076, %v5079
        %v5081 = vsel %vm5070, nan, %v5080
        %v5082 = vand.u32 2147483647, %v4151
        %vm5083 = vcmp.le.f32.partialorder %v5082, 0.7853982
        %vm5084 = vcmp.lt.s32.totalorder %v4151, 0
        %v5085 = vand.u32 %v4151, 2139095040
        %v5086 = vshrl.u32 %v5085, 23
        %v5087 = vsub.s32 %v5086, 127
        %v5088 = vand.u32 2147483647, %v4151
        %v5089 = vand.u32 %v5088, 8388607
        %v5090 = vor.u32 %v5089, 8388608
        %v5091 = vsub.s32 0, %v5090
        %v5092 = vadd.s32 %v5087, 1
        %vm5093 = vcmp.gt.s32.totalorder %v5092, 0
        %v5094 = vsel %vm5093, %v5092, 0
        %v5095 = vshrl.u32 %v5094, 5
        %v5096 = vand.u32 %v5094, 31
        %v5097 = vsub.s32 32, %v5096
        %v5098 = vshrl.u32 683565275, %v5097
        %v5099 = vshll.u32 683565275, %v5096
        %v5100 = vshrl.u32 2475754826, %v5097
        %v5101 = vor.u32 %v5099, %v5100
        %v5102 = vshll.u32 2475754826, %v5096
        %v5103 = vshrl.u32 2131351028, %v5097
        %v5104 = vor.u32 %v5102, %v5103
        %v5105 = vshll.u32 2131351028, %v5096
        %v5106 = vshrl.u32 2102212464, %v5097
        %v5107 = vor.u32 %v5105, %v5106
        %v5108 = vshll.u32 2102212464, %v5096
        %v5109 = vshrl.u32 920167782, %v5097
        %v5110 = vor.u32 %v5108, %v5109
        %v5111 = vshll.u32 920167782, %v5096
        %v5112 = vshrl.u32 1326507024, %v5097
        %v5113 = vor.u32 %v5111, %v5112
        %vm5114 = vcmp.lt.s32.totalorder %v5095, 1
        %vm5115 = vcmp.lt.s32.totalorder %v5095, 2
        %vm5116 = vcmp.lt.s32.totalorder %v5095, 3
        %vm5117 = vcmp.lt.s32.totalorder %v5095, 4
        %v5118 = vsel %vm5114, %v5098, %v5101
        %v5119 = vsel %vm5117, %v5107, 2102212464
        %v5120 = vsel %vm5116, %v5104, %v5119
        %v5121 = vsel %vm5115, %v5118, %v5120
        %v5122 = vsel %vm5114, %v5101, %v5104
        %v5123 = vsel %vm5117, %v5110, 920167782
        %v5124 = vsel %vm5116, %v5107, %v5123
        %v5125 = vsel %vm5115, %v5122, %v5124
        %v5126 = vsel %vm5114, %v5104, %v5107
        %v5127 = vsel %vm5117, %v5113, 1326507024
        %v5128 = vsel %vm5116, %v5110, %v5127
        %v5129 = vsel %vm5115, %v5126, %v5128
        %v5130 = vshll.u32 %v5090, 8
        %v5131 = vmul.u32.u64.compose %v5130, %v5129
        %v5132 = vextract.low.u32 %v5131
        %v5133 = vextract.high.u32 %v5131
        %v5134 = vmul.u32.u64.compose %v5130, %v5125
        %v5135 = vextract.low.u32 %v5134
        %v5136 = vextract.high.u32 %v5134
        %v5137 = vmul.u32 %v5130, %v5121
        %v5138 = vadd.s32 %v5133, %v5135
        %vm5139 = vc.u32 %v5133, %v5135
        %v5140 = vadd.s32 %v5136, 1
        %v5141 = vsel %vm5139, %v5140, %v5136
        %v5142 = vadd.s32 %v5137, %v5141
        %v5143 = vadd.s32 %v5142, 536870912
        %v5144 = vshrl.u32 %v5143, 30
        %v5145 = vshll.u32 %v5144, 30
        %v5146 = vsub.s32 %v5142, %v5145
        %vm5147 = vcmp.lt.s32.totalorder %v5146, 0
        %v5148 = vsub.s32 0, %v5146
        %v5149 = vsel %vm5147, %v5148, %v5146
        %v5150 = vclz %v5149
        %v5151 = vsub.s32 %v5150, 2
        %vm5152 = vcmp.gt.s32.totalorder 0, %v5151
        %v5153 = vsel %vm5152, 0, %v5151
        %v5154 = vsub.s32 32, %v5153
        %v5155 = vshll.u32 %v5146, %v5153
        %v5156 = vshrl.u32 %v5138, %v5154
        %v5157 = vor.u32 %v5155, %v5156
        %v5158 = vsub.s32 4294967266, %v5153
        %v5159 = vadd.s32 %v5158, 127
        %v5160 = vshll.u32 %v5159, 23
        %v5161 = vor.u32 4788187, %v5160
        %v5162 = vand.u32 2147483647, %v5161
        %v5164 = vcvt.s32.f32 %v5157
        %v5165 = vmul.f32 %v5164, %v5162
        %v5166 = vxor.u32 %v5165, 2147483648
        %v5167 = vsel %vm5084, %v5166, %v5165
        %v5168 = vsub.s32 4, %v5144
        %v5169 = vsel %vm5084, %v5168, %v5144
        %v5170 = vsel %vm5083, %v4151, %v5167
        %v5171 = vsel %vm5083, 0, %v5169
        %v5172 = vcosq.f32.pop %v5170
        %v5173 = vsinq.f32.pop %v5170
        %vm5174 = vweird.f32 %v4151
        %v5175 = vadd.s32 %v5171, 3
        %v5176 = vand.u32 %v5175, 3
        %vm5177 = vcmp.lt.s32.totalorder %v5176, 2
        %vm5178 = vcmp.eq.s32.totalorder %v5176, 0
        %v5179 = vxor.u32 %v5173, 2147483648
        %v5180 = vsel %vm5178, %v5172, %v5179
        %vm5181 = vcmp.eq.s32.totalorder %v5176, 2
        %v5182 = vxor.u32 %v5172, 2147483648
        %v5183 = vsel %vm5181, %v5182, %v5173
        %v5184 = vsel %vm5177, %v5180, %v5183
        %v5185 = vsel %vm5174, nan, %v5184
        %v5186 = vand.u32 2147483647, %v4153
        %vm5187 = vcmp.le.f32.partialorder %v5186, 0.7853982
        %vm5188 = vcmp.lt.s32.totalorder %v4153, 0
        %v5189 = vand.u32 %v4153, 2139095040
        %v5190 = vshrl.u32 %v5189, 23
        %v5191 = vsub.s32 %v5190, 127
        %v5192 = vand.u32 2147483647, %v4153
        %v5193 = vand.u32 %v5192, 8388607
        %v5194 = vor.u32 %v5193, 8388608
        %v5195 = vsub.s32 0, %v5194
        %v5196 = vadd.s32 %v5191, 1
        %vm5197 = vcmp.gt.s32.totalorder %v5196, 0
        %v5198 = vsel %vm5197, %v5196, 0
        %v5199 = vshrl.u32 %v5198, 5
        %v5200 = vand.u32 %v5198, 31
        %v5201 = vsub.s32 32, %v5200
        %v5202 = vshrl.u32 683565275, %v5201
        %v5203 = vshll.u32 683565275, %v5200
        %v5204 = vshrl.u32 2475754826, %v5201
        %v5205 = vor.u32 %v5203, %v5204
        %v5206 = vshll.u32 2475754826, %v5200
        %v5207 = vshrl.u32 2131351028, %v5201
        %v5208 = vor.u32 %v5206, %v5207
        %v5209 = vshll.u32 2131351028, %v5200
        %v5210 = vshrl.u32 2102212464, %v5201
        %v5211 = vor.u32 %v5209, %v5210
        %v5212 = vshll.u32 2102212464, %v5200
        %v5213 = vshrl.u32 920167782, %v5201
        %v5214 = vor.u32 %v5212, %v5213
        %v5215 = vshll.u32 920167782, %v5200
        %v5216 = vshrl.u32 1326507024, %v5201
        %v5217 = vor.u32 %v5215, %v5216
        %vm5218 = vcmp.lt.s32.totalorder %v5199, 1
        %vm5219 = vcmp.lt.s32.totalorder %v5199, 2
        %vm5220 = vcmp.lt.s32.totalorder %v5199, 3
        %vm5221 = vcmp.lt.s32.totalorder %v5199, 4
        %v5222 = vsel %vm5218, %v5202, %v5205
        %v5223 = vsel %vm5221, %v5211, 2102212464
        %v5224 = vsel %vm5220, %v5208, %v5223
        %v5225 = vsel %vm5219, %v5222, %v5224
        %v5226 = vsel %vm5218, %v5205, %v5208
        %v5227 = vsel %vm5221, %v5214, 920167782
        %v5228 = vsel %vm5220, %v5211, %v5227
        %v5229 = vsel %vm5219, %v5226, %v5228
        %v5230 = vsel %vm5218, %v5208, %v5211
        %v5231 = vsel %vm5221, %v5217, 1326507024
        %v5232 = vsel %vm5220, %v5214, %v5231
        %v5233 = vsel %vm5219, %v5230, %v5232
        %v5234 = vshll.u32 %v5194, 8
        %v5235 = vmul.u32.u64.compose %v5234, %v5233
        %v5236 = vextract.low.u32 %v5235
        %v5237 = vextract.high.u32 %v5235
        %v5238 = vmul.u32.u64.compose %v5234, %v5229
        %v5239 = vextract.low.u32 %v5238
        %v5240 = vextract.high.u32 %v5238
        %v5241 = vmul.u32 %v5234, %v5225
        %v5242 = vadd.s32 %v5237, %v5239
        %vm5243 = vc.u32 %v5237, %v5239
        %v5244 = vadd.s32 %v5240, 1
        %v5245 = vsel %vm5243, %v5244, %v5240
        %v5246 = vadd.s32 %v5241, %v5245
        %v5247 = vadd.s32 %v5246, 536870912
        %v5248 = vshrl.u32 %v5247, 30
        %v5249 = vshll.u32 %v5248, 30
        %v5250 = vsub.s32 %v5246, %v5249
        %vm5251 = vcmp.lt.s32.totalorder %v5250, 0
        %v5252 = vsub.s32 0, %v5250
        %v5253 = vsel %vm5251, %v5252, %v5250
        %v5254 = vclz %v5253
        %v5255 = vsub.s32 %v5254, 2
        %vm5256 = vcmp.gt.s32.totalorder 0, %v5255
        %v5257 = vsel %vm5256, 0, %v5255
        %v5258 = vsub.s32 32, %v5257
        %v5259 = vshll.u32 %v5250, %v5257
        %v5260 = vshrl.u32 %v5242, %v5258
        %v5261 = vor.u32 %v5259, %v5260
        %v5262 = vsub.s32 4294967266, %v5257
        %v5263 = vadd.s32 %v5262, 127
        %v5264 = vshll.u32 %v5263, 23
        %v5265 = vor.u32 4788187, %v5264
        %v5266 = vand.u32 2147483647, %v5265
        %v5268 = vcvt.s32.f32 %v5261
        %v5269 = vmul.f32 %v5268, %v5266
        %v5270 = vxor.u32 %v5269, 2147483648
        %v5271 = vsel %vm5188, %v5270, %v5269
        %v5272 = vsub.s32 4, %v5248
        %v5273 = vsel %vm5188, %v5272, %v5248
        %v5274 = vsel %vm5187, %v4153, %v5271
        %v5275 = vsel %vm5187, 0, %v5273
        %v5276 = vcosq.f32.pop %v5274
        %v5277 = vsinq.f32.pop %v5274
        %vm5278 = vweird.f32 %v4153
        %v5279 = vadd.s32 %v5275, 3
        %v5280 = vand.u32 %v5279, 3
        %vm5281 = vcmp.lt.s32.totalorder %v5280, 2
        %vm5282 = vcmp.eq.s32.totalorder %v5280, 0
        %v5283 = vxor.u32 %v5277, 2147483648
        %v5284 = vsel %vm5282, %v5276, %v5283
        %vm5285 = vcmp.eq.s32.totalorder %v5280, 2
        %v5286 = vxor.u32 %v5276, 2147483648
        %v5287 = vsel %vm5285, %v5286, %v5277
        %v5288 = vsel %vm5281, %v5284, %v5287
        %v5289 = vsel %vm5278, nan, %v5288
        %v5290 = vand.u32 2147483647, %v4240
        %vm5291 = vcmp.le.f32.partialorder %v5290, 0.7853982
        %vm5292 = vcmp.lt.s32.totalorder %v4240, 0
        %v5293 = vand.u32 %v4240, 2139095040
        %v5294 = vshrl.u32 %v5293, 23
        %v5295 = vsub.s32 %v5294, 127
        %v5296 = vand.u32 2147483647, %v4240
        %v5297 = vand.u32 %v5296, 8388607
        %v5298 = vor.u32 %v5297, 8388608
        %v5299 = vsub.s32 0, %v5298
        %v5300 = vadd.s32 %v5295, 1
        %vm5301 = vcmp.gt.s32.totalorder %v5300, 0
        %v5302 = vsel %vm5301, %v5300, 0
        %v5303 = vshrl.u32 %v5302, 5
        %v5304 = vand.u32 %v5302, 31
        %v5305 = vsub.s32 32, %v5304
        %v5306 = vshrl.u32 683565275, %v5305
        %v5307 = vshll.u32 683565275, %v5304
        %v5308 = vshrl.u32 2475754826, %v5305
        %v5309 = vor.u32 %v5307, %v5308
        %v5310 = vshll.u32 2475754826, %v5304
        %v5311 = vshrl.u32 2131351028, %v5305
        %v5312 = vor.u32 %v5310, %v5311
        %v5313 = vshll.u32 2131351028, %v5304
        %v5314 = vshrl.u32 2102212464, %v5305
        %v5315 = vor.u32 %v5313, %v5314
        %v5316 = vshll.u32 2102212464, %v5304
        %v5317 = vshrl.u32 920167782, %v5305
        %v5318 = vor.u32 %v5316, %v5317
        %v5319 = vshll.u32 920167782, %v5304
        %v5320 = vshrl.u32 1326507024, %v5305
        %v5321 = vor.u32 %v5319, %v5320
        %vm5322 = vcmp.lt.s32.totalorder %v5303, 1
        %vm5323 = vcmp.lt.s32.totalorder %v5303, 2
        %vm5324 = vcmp.lt.s32.totalorder %v5303, 3
        %vm5325 = vcmp.lt.s32.totalorder %v5303, 4
        %v5326 = vsel %vm5322, %v5306, %v5309
        %v5327 = vsel %vm5325, %v5315, 2102212464
        %v5328 = vsel %vm5324, %v5312, %v5327
        %v5329 = vsel %vm5323, %v5326, %v5328
        %v5330 = vsel %vm5322, %v5309, %v5312
        %v5331 = vsel %vm5325, %v5318, 920167782
        %v5332 = vsel %vm5324, %v5315, %v5331
        %v5333 = vsel %vm5323, %v5330, %v5332
        %v5334 = vsel %vm5322, %v5312, %v5315
        %v5335 = vsel %vm5325, %v5321, 1326507024
        %v5336 = vsel %vm5324, %v5318, %v5335
        %v5337 = vsel %vm5323, %v5334, %v5336
        %v5338 = vshll.u32 %v5298, 8
        %v5339 = vmul.u32.u64.compose %v5338, %v5337
        %v5340 = vextract.low.u32 %v5339
        %v5341 = vextract.high.u32 %v5339
        %v5342 = vmul.u32.u64.compose %v5338, %v5333
        %v5343 = vextract.low.u32 %v5342
        %v5344 = vextract.high.u32 %v5342
        %v5345 = vmul.u32 %v5338, %v5329
        %v5346 = vadd.s32 %v5341, %v5343
        %vm5347 = vc.u32 %v5341, %v5343
        %v5348 = vadd.s32 %v5344, 1
        %v5349 = vsel %vm5347, %v5348, %v5344
        %v5350 = vadd.s32 %v5345, %v5349
        %v5351 = vadd.s32 %v5350, 536870912
        %v5352 = vshrl.u32 %v5351, 30
        %v5353 = vshll.u32 %v5352, 30
        %v5354 = vsub.s32 %v5350, %v5353
        %vm5355 = vcmp.lt.s32.totalorder %v5354, 0
        %v5356 = vsub.s32 0, %v5354
        %v5357 = vsel %vm5355, %v5356, %v5354
        %v5358 = vclz %v5357
        %v5359 = vsub.s32 %v5358, 2
        %vm5360 = vcmp.gt.s32.totalorder 0, %v5359
        %v5361 = vsel %vm5360, 0, %v5359
        %v5362 = vsub.s32 32, %v5361
        %v5363 = vshll.u32 %v5354, %v5361
        %v5364 = vshrl.u32 %v5346, %v5362
        %v5365 = vor.u32 %v5363, %v5364
        %v5366 = vsub.s32 4294967266, %v5361
        %v5367 = vadd.s32 %v5366, 127
        %v5368 = vshll.u32 %v5367, 23
        %v5369 = vor.u32 4788187, %v5368
        %v5370 = vand.u32 2147483647, %v5369
        %v5372 = vcvt.s32.f32 %v5365
        %v5373 = vmul.f32 %v5372, %v5370
        %v5374 = vxor.u32 %v5373, 2147483648
        %v5375 = vsel %vm5292, %v5374, %v5373
        %v5376 = vsub.s32 4, %v5352
        %v5377 = vsel %vm5292, %v5376, %v5352
        %v5378 = vsel %vm5291, %v4240, %v5375
        %v5379 = vsel %vm5291, 0, %v5377
        %v5380 = vcosq.f32.pop %v5378
        %v5381 = vsinq.f32.pop %v5378
        %vm5382 = vweird.f32 %v4240
        %v5383 = vadd.s32 %v5379, 3
        %v5384 = vand.u32 %v5383, 3
        %vm5385 = vcmp.lt.s32.totalorder %v5384, 2
        %vm5386 = vcmp.eq.s32.totalorder %v5384, 0
        %v5387 = vxor.u32 %v5381, 2147483648
        %v5388 = vsel %vm5386, %v5380, %v5387
        %vm5389 = vcmp.eq.s32.totalorder %v5384, 2
        %v5390 = vxor.u32 %v5380, 2147483648
        %v5391 = vsel %vm5389, %v5390, %v5381
        %v5392 = vsel %vm5385, %v5388, %v5391
        %v5393 = vsel %vm5382, nan, %v5392
        %v5394 = vand.u32 2147483647, %v4242
        %vm5395 = vcmp.le.f32.partialorder %v5394, 0.7853982
        %vm5396 = vcmp.lt.s32.totalorder %v4242, 0
        %v5397 = vand.u32 %v4242, 2139095040
        %v5398 = vshrl.u32 %v5397, 23
        %v5399 = vsub.s32 %v5398, 127
        %v5400 = vand.u32 2147483647, %v4242
        %v5401 = vand.u32 %v5400, 8388607
        %v5402 = vor.u32 %v5401, 8388608
        %v5403 = vsub.s32 0, %v5402
        %v5404 = vadd.s32 %v5399, 1
        %vm5405 = vcmp.gt.s32.totalorder %v5404, 0
        %v5406 = vsel %vm5405, %v5404, 0
        %v5407 = vshrl.u32 %v5406, 5
        %v5408 = vand.u32 %v5406, 31
        %v5409 = vsub.s32 32, %v5408
        %v5410 = vshrl.u32 683565275, %v5409
        %v5411 = vshll.u32 683565275, %v5408
        %v5412 = vshrl.u32 2475754826, %v5409
        %v5413 = vor.u32 %v5411, %v5412
        %v5414 = vshll.u32 2475754826, %v5408
        %v5415 = vshrl.u32 2131351028, %v5409
        %v5416 = vor.u32 %v5414, %v5415
        %v5417 = vshll.u32 2131351028, %v5408
        %v5418 = vshrl.u32 2102212464, %v5409
        %v5419 = vor.u32 %v5417, %v5418
        %v5420 = vshll.u32 2102212464, %v5408
        %v5421 = vshrl.u32 920167782, %v5409
        %v5422 = vor.u32 %v5420, %v5421
        %v5423 = vshll.u32 920167782, %v5408
        %v5424 = vshrl.u32 1326507024, %v5409
        %v5425 = vor.u32 %v5423, %v5424
        %vm5426 = vcmp.lt.s32.totalorder %v5407, 1
        %vm5427 = vcmp.lt.s32.totalorder %v5407, 2
        %vm5428 = vcmp.lt.s32.totalorder %v5407, 3
        %vm5429 = vcmp.lt.s32.totalorder %v5407, 4
        %v5430 = vsel %vm5426, %v5410, %v5413
        %v5431 = vsel %vm5429, %v5419, 2102212464
        %v5432 = vsel %vm5428, %v5416, %v5431
        %v5433 = vsel %vm5427, %v5430, %v5432
        %v5434 = vsel %vm5426, %v5413, %v5416
        %v5435 = vsel %vm5429, %v5422, 920167782
        %v5436 = vsel %vm5428, %v5419, %v5435
        %v5437 = vsel %vm5427, %v5434, %v5436
        %v5438 = vsel %vm5426, %v5416, %v5419
        %v5439 = vsel %vm5429, %v5425, 1326507024
        %v5440 = vsel %vm5428, %v5422, %v5439
        %v5441 = vsel %vm5427, %v5438, %v5440
        %v5442 = vshll.u32 %v5402, 8
        %v5443 = vmul.u32.u64.compose %v5442, %v5441
        %v5444 = vextract.low.u32 %v5443
        %v5445 = vextract.high.u32 %v5443
        %v5446 = vmul.u32.u64.compose %v5442, %v5437
        %v5447 = vextract.low.u32 %v5446
        %v5448 = vextract.high.u32 %v5446
        %v5449 = vmul.u32 %v5442, %v5433
        %v5450 = vadd.s32 %v5445, %v5447
        %vm5451 = vc.u32 %v5445, %v5447
        %v5452 = vadd.s32 %v5448, 1
        %v5453 = vsel %vm5451, %v5452, %v5448
        %v5454 = vadd.s32 %v5449, %v5453
        %v5455 = vadd.s32 %v5454, 536870912
        %v5456 = vshrl.u32 %v5455, 30
        %v5457 = vshll.u32 %v5456, 30
        %v5458 = vsub.s32 %v5454, %v5457
        %vm5459 = vcmp.lt.s32.totalorder %v5458, 0
        %v5460 = vsub.s32 0, %v5458
        %v5461 = vsel %vm5459, %v5460, %v5458
        %v5462 = vclz %v5461
        %v5463 = vsub.s32 %v5462, 2
        %vm5464 = vcmp.gt.s32.totalorder 0, %v5463
        %v5465 = vsel %vm5464, 0, %v5463
        %v5466 = vsub.s32 32, %v5465
        %v5467 = vshll.u32 %v5458, %v5465
        %v5468 = vshrl.u32 %v5450, %v5466
        %v5469 = vor.u32 %v5467, %v5468
        %v5470 = vsub.s32 4294967266, %v5465
        %v5471 = vadd.s32 %v5470, 127
        %v5472 = vshll.u32 %v5471, 23
        %v5473 = vor.u32 4788187, %v5472
        %v5474 = vand.u32 2147483647, %v5473
        %v5476 = vcvt.s32.f32 %v5469
        %v5477 = vmul.f32 %v5476, %v5474
        %v5478 = vxor.u32 %v5477, 2147483648
        %v5479 = vsel %vm5396, %v5478, %v5477
        %v5480 = vsub.s32 4, %v5456
        %v5481 = vsel %vm5396, %v5480, %v5456
        %v5482 = vsel %vm5395, %v4242, %v5479
        %v5483 = vsel %vm5395, 0, %v5481
        %v5484 = vcosq.f32.pop %v5482
        %v5485 = vsinq.f32.pop %v5482
        %vm5486 = vweird.f32 %v4242
        %v5487 = vadd.s32 %v5483, 3
        %v5488 = vand.u32 %v5487, 3
        %vm5489 = vcmp.lt.s32.totalorder %v5488, 2
        %vm5490 = vcmp.eq.s32.totalorder %v5488, 0
        %v5491 = vxor.u32 %v5485, 2147483648
        %v5492 = vsel %vm5490, %v5484, %v5491
        %vm5493 = vcmp.eq.s32.totalorder %v5488, 2
        %v5494 = vxor.u32 %v5484, 2147483648
        %v5495 = vsel %vm5493, %v5494, %v5485
        %v5496 = vsel %vm5489, %v5492, %v5495
        %v5497 = vsel %vm5486, nan, %v5496
        %v5498 = vand.u32 2147483647, %v4157
        %vm5499 = vcmp.le.f32.partialorder %v5498, 0.7853982
        %vm5500 = vcmp.lt.s32.totalorder %v4157, 0
        %v5501 = vand.u32 %v4157, 2139095040
        %v5502 = vshrl.u32 %v5501, 23
        %v5503 = vsub.s32 %v5502, 127
        %v5504 = vand.u32 2147483647, %v4157
        %v5505 = vand.u32 %v5504, 8388607
        %v5506 = vor.u32 %v5505, 8388608
        %v5507 = vsub.s32 0, %v5506
        %v5508 = vadd.s32 %v5503, 1
        %vm5509 = vcmp.gt.s32.totalorder %v5508, 0
        %v5510 = vsel %vm5509, %v5508, 0
        %v5511 = vshrl.u32 %v5510, 5
        %v5512 = vand.u32 %v5510, 31
        %v5513 = vsub.s32 32, %v5512
        %v5514 = vshrl.u32 683565275, %v5513
        %v5515 = vshll.u32 683565275, %v5512
        %v5516 = vshrl.u32 2475754826, %v5513
        %v5517 = vor.u32 %v5515, %v5516
        %v5518 = vshll.u32 2475754826, %v5512
        %v5519 = vshrl.u32 2131351028, %v5513
        %v5520 = vor.u32 %v5518, %v5519
        %v5521 = vshll.u32 2131351028, %v5512
        %v5522 = vshrl.u32 2102212464, %v5513
        %v5523 = vor.u32 %v5521, %v5522
        %v5524 = vshll.u32 2102212464, %v5512
        %v5525 = vshrl.u32 920167782, %v5513
        %v5526 = vor.u32 %v5524, %v5525
        %v5527 = vshll.u32 920167782, %v5512
        %v5528 = vshrl.u32 1326507024, %v5513
        %v5529 = vor.u32 %v5527, %v5528
        %vm5530 = vcmp.lt.s32.totalorder %v5511, 1
        %vm5531 = vcmp.lt.s32.totalorder %v5511, 2
        %vm5532 = vcmp.lt.s32.totalorder %v5511, 3
        %vm5533 = vcmp.lt.s32.totalorder %v5511, 4
        %v5534 = vsel %vm5530, %v5514, %v5517
        %v5535 = vsel %vm5533, %v5523, 2102212464
        %v5536 = vsel %vm5532, %v5520, %v5535
        %v5537 = vsel %vm5531, %v5534, %v5536
        %v5538 = vsel %vm5530, %v5517, %v5520
        %v5539 = vsel %vm5533, %v5526, 920167782
        %v5540 = vsel %vm5532, %v5523, %v5539
        %v5541 = vsel %vm5531, %v5538, %v5540
        %v5542 = vsel %vm5530, %v5520, %v5523
        %v5543 = vsel %vm5533, %v5529, 1326507024
        %v5544 = vsel %vm5532, %v5526, %v5543
        %v5545 = vsel %vm5531, %v5542, %v5544
        %v5546 = vshll.u32 %v5506, 8
        %v5547 = vmul.u32.u64.compose %v5546, %v5545
        %v5548 = vextract.low.u32 %v5547
        %v5549 = vextract.high.u32 %v5547
        %v5550 = vmul.u32.u64.compose %v5546, %v5541
        %v5551 = vextract.low.u32 %v5550
        %v5552 = vextract.high.u32 %v5550
        %v5553 = vmul.u32 %v5546, %v5537
        %v5554 = vadd.s32 %v5549, %v5551
        %vm5555 = vc.u32 %v5549, %v5551
        %v5556 = vadd.s32 %v5552, 1
        %v5557 = vsel %vm5555, %v5556, %v5552
        %v5558 = vadd.s32 %v5553, %v5557
        %v5559 = vadd.s32 %v5558, 536870912
        %v5560 = vshrl.u32 %v5559, 30
        %v5561 = vshll.u32 %v5560, 30
        %v5562 = vsub.s32 %v5558, %v5561
        %vm5563 = vcmp.lt.s32.totalorder %v5562, 0
        %v5564 = vsub.s32 0, %v5562
        %v5565 = vsel %vm5563, %v5564, %v5562
        %v5566 = vclz %v5565
        %v5567 = vsub.s32 %v5566, 2
        %vm5568 = vcmp.gt.s32.totalorder 0, %v5567
        %v5569 = vsel %vm5568, 0, %v5567
        %v5570 = vsub.s32 32, %v5569
        %v5571 = vshll.u32 %v5562, %v5569
        %v5572 = vshrl.u32 %v5554, %v5570
        %v5573 = vor.u32 %v5571, %v5572
        %v5574 = vsub.s32 4294967266, %v5569
        %v5575 = vadd.s32 %v5574, 127
        %v5576 = vshll.u32 %v5575, 23
        %v5577 = vor.u32 4788187, %v5576
        %v5578 = vand.u32 2147483647, %v5577
        %v5580 = vcvt.s32.f32 %v5573
        %v5581 = vmul.f32 %v5580, %v5578
        %v5582 = vxor.u32 %v5581, 2147483648
        %v5583 = vsel %vm5500, %v5582, %v5581
        %v5584 = vsub.s32 4, %v5560
        %v5585 = vsel %vm5500, %v5584, %v5560
        %v5586 = vsel %vm5499, %v4157, %v5583
        %v5587 = vsel %vm5499, 0, %v5585
        %v5588 = vcosq.f32.pop %v5586
        %v5589 = vsinq.f32.pop %v5586
        %vm5590 = vweird.f32 %v4157
        %v5591 = vadd.s32 %v5587, 3
        %v5592 = vand.u32 %v5591, 3
        %vm5593 = vcmp.lt.s32.totalorder %v5592, 2
        %vm5594 = vcmp.eq.s32.totalorder %v5592, 0
        %v5595 = vxor.u32 %v5589, 2147483648
        %v5596 = vsel %vm5594, %v5588, %v5595
        %vm5597 = vcmp.eq.s32.totalorder %v5592, 2
        %v5598 = vxor.u32 %v5588, 2147483648
        %v5599 = vsel %vm5597, %v5598, %v5589
        %v5600 = vsel %vm5593, %v5596, %v5599
        %v5601 = vsel %vm5590, nan, %v5600
        %v5602 = vand.u32 2147483647, %v4159
        %vm5603 = vcmp.le.f32.partialorder %v5602, 0.7853982
        %vm5604 = vcmp.lt.s32.totalorder %v4159, 0
        %v5605 = vand.u32 %v4159, 2139095040
        %v5606 = vshrl.u32 %v5605, 23
        %v5607 = vsub.s32 %v5606, 127
        %v5608 = vand.u32 2147483647, %v4159
        %v5609 = vand.u32 %v5608, 8388607
        %v5610 = vor.u32 %v5609, 8388608
        %v5611 = vsub.s32 0, %v5610
        %v5612 = vadd.s32 %v5607, 1
        %vm5613 = vcmp.gt.s32.totalorder %v5612, 0
        %v5614 = vsel %vm5613, %v5612, 0
        %v5615 = vshrl.u32 %v5614, 5
        %v5616 = vand.u32 %v5614, 31
        %v5617 = vsub.s32 32, %v5616
        %v5618 = vshrl.u32 683565275, %v5617
        %v5619 = vshll.u32 683565275, %v5616
        %v5620 = vshrl.u32 2475754826, %v5617
        %v5621 = vor.u32 %v5619, %v5620
        %v5622 = vshll.u32 2475754826, %v5616
        %v5623 = vshrl.u32 2131351028, %v5617
        %v5624 = vor.u32 %v5622, %v5623
        %v5625 = vshll.u32 2131351028, %v5616
        %v5626 = vshrl.u32 2102212464, %v5617
        %v5627 = vor.u32 %v5625, %v5626
        %v5628 = vshll.u32 2102212464, %v5616
        %v5629 = vshrl.u32 920167782, %v5617
        %v5630 = vor.u32 %v5628, %v5629
        %v5631 = vshll.u32 920167782, %v5616
        %v5632 = vshrl.u32 1326507024, %v5617
        %v5633 = vor.u32 %v5631, %v5632
        %vm5634 = vcmp.lt.s32.totalorder %v5615, 1
        %vm5635 = vcmp.lt.s32.totalorder %v5615, 2
        %vm5636 = vcmp.lt.s32.totalorder %v5615, 3
        %vm5637 = vcmp.lt.s32.totalorder %v5615, 4
        %v5638 = vsel %vm5634, %v5618, %v5621
        %v5639 = vsel %vm5637, %v5627, 2102212464
        %v5640 = vsel %vm5636, %v5624, %v5639
        %v5641 = vsel %vm5635, %v5638, %v5640
        %v5642 = vsel %vm5634, %v5621, %v5624
        %v5643 = vsel %vm5637, %v5630, 920167782
        %v5644 = vsel %vm5636, %v5627, %v5643
        %v5645 = vsel %vm5635, %v5642, %v5644
        %v5646 = vsel %vm5634, %v5624, %v5627
        %v5647 = vsel %vm5637, %v5633, 1326507024
        %v5648 = vsel %vm5636, %v5630, %v5647
        %v5649 = vsel %vm5635, %v5646, %v5648
        %v5650 = vshll.u32 %v5610, 8
        %v5651 = vmul.u32.u64.compose %v5650, %v5649
        %v5652 = vextract.low.u32 %v5651
        %v5653 = vextract.high.u32 %v5651
        %v5654 = vmul.u32.u64.compose %v5650, %v5645
        %v5655 = vextract.low.u32 %v5654
        %v5656 = vextract.high.u32 %v5654
        %v5657 = vmul.u32 %v5650, %v5641
        %v5658 = vadd.s32 %v5653, %v5655
        %vm5659 = vc.u32 %v5653, %v5655
        %v5660 = vadd.s32 %v5656, 1
        %v5661 = vsel %vm5659, %v5660, %v5656
        %v5662 = vadd.s32 %v5657, %v5661
        %v5663 = vadd.s32 %v5662, 536870912
        %v5664 = vshrl.u32 %v5663, 30
        %v5665 = vshll.u32 %v5664, 30
        %v5666 = vsub.s32 %v5662, %v5665
        %vm5667 = vcmp.lt.s32.totalorder %v5666, 0
        %v5668 = vsub.s32 0, %v5666
        %v5669 = vsel %vm5667, %v5668, %v5666
        %v5670 = vclz %v5669
        %v5671 = vsub.s32 %v5670, 2
        %vm5672 = vcmp.gt.s32.totalorder 0, %v5671
        %v5673 = vsel %vm5672, 0, %v5671
        %v5674 = vsub.s32 32, %v5673
        %v5675 = vshll.u32 %v5666, %v5673
        %v5676 = vshrl.u32 %v5658, %v5674
        %v5677 = vor.u32 %v5675, %v5676
        %v5678 = vsub.s32 4294967266, %v5673
        %v5679 = vadd.s32 %v5678, 127
        %v5680 = vshll.u32 %v5679, 23
        %v5681 = vor.u32 4788187, %v5680
        %v5682 = vand.u32 2147483647, %v5681
        %v5684 = vcvt.s32.f32 %v5677
        %v5685 = vmul.f32 %v5684, %v5682
        %v5686 = vxor.u32 %v5685, 2147483648
        %v5687 = vsel %vm5604, %v5686, %v5685
        %v5688 = vsub.s32 4, %v5664
        %v5689 = vsel %vm5604, %v5688, %v5664
        %v5690 = vsel %vm5603, %v4159, %v5687
        %v5691 = vsel %vm5603, 0, %v5689
        %v5692 = vcosq.f32.pop %v5690
        %v5693 = vsinq.f32.pop %v5690
        %vm5694 = vweird.f32 %v4159
        %v5695 = vadd.s32 %v5691, 3
        %v5696 = vand.u32 %v5695, 3
        %vm5697 = vcmp.lt.s32.totalorder %v5696, 2
        %vm5698 = vcmp.eq.s32.totalorder %v5696, 0
        %v5699 = vxor.u32 %v5693, 2147483648
        %v5700 = vsel %vm5698, %v5692, %v5699
        %vm5701 = vcmp.eq.s32.totalorder %v5696, 2
        %v5702 = vxor.u32 %v5692, 2147483648
        %v5703 = vsel %vm5701, %v5702, %v5693
        %v5704 = vsel %vm5697, %v5700, %v5703
        %v5705 = vsel %vm5694, nan, %v5704
        %v5706 = vand.u32 2147483647, %v4246
        %vm5707 = vcmp.le.f32.partialorder %v5706, 0.7853982
        %vm5708 = vcmp.lt.s32.totalorder %v4246, 0
        %v5709 = vand.u32 %v4246, 2139095040
        %v5710 = vshrl.u32 %v5709, 23
        %v5711 = vsub.s32 %v5710, 127
        %v5712 = vand.u32 2147483647, %v4246
        %v5713 = vand.u32 %v5712, 8388607
        %v5714 = vor.u32 %v5713, 8388608
        %v5715 = vsub.s32 0, %v5714
        %v5716 = vadd.s32 %v5711, 1
        %vm5717 = vcmp.gt.s32.totalorder %v5716, 0
        %v5718 = vsel %vm5717, %v5716, 0
        %v5719 = vshrl.u32 %v5718, 5
        %v5720 = vand.u32 %v5718, 31
        %v5721 = vsub.s32 32, %v5720
        %v5722 = vshrl.u32 683565275, %v5721
        %v5723 = vshll.u32 683565275, %v5720
        %v5724 = vshrl.u32 2475754826, %v5721
        %v5725 = vor.u32 %v5723, %v5724
        %v5726 = vshll.u32 2475754826, %v5720
        %v5727 = vshrl.u32 2131351028, %v5721
        %v5728 = vor.u32 %v5726, %v5727
        %v5729 = vshll.u32 2131351028, %v5720
        %v5730 = vshrl.u32 2102212464, %v5721
        %v5731 = vor.u32 %v5729, %v5730
        %v5732 = vshll.u32 2102212464, %v5720
        %v5733 = vshrl.u32 920167782, %v5721
        %v5734 = vor.u32 %v5732, %v5733
        %v5735 = vshll.u32 920167782, %v5720
        %v5736 = vshrl.u32 1326507024, %v5721
        %v5737 = vor.u32 %v5735, %v5736
        %vm5738 = vcmp.lt.s32.totalorder %v5719, 1
        %vm5739 = vcmp.lt.s32.totalorder %v5719, 2
        %vm5740 = vcmp.lt.s32.totalorder %v5719, 3
        %vm5741 = vcmp.lt.s32.totalorder %v5719, 4
        %v5742 = vsel %vm5738, %v5722, %v5725
        %v5743 = vsel %vm5741, %v5731, 2102212464
        %v5744 = vsel %vm5740, %v5728, %v5743
        %v5745 = vsel %vm5739, %v5742, %v5744
        %v5746 = vsel %vm5738, %v5725, %v5728
        %v5747 = vsel %vm5741, %v5734, 920167782
        %v5748 = vsel %vm5740, %v5731, %v5747
        %v5749 = vsel %vm5739, %v5746, %v5748
        %v5750 = vsel %vm5738, %v5728, %v5731
        %v5751 = vsel %vm5741, %v5737, 1326507024
        %v5752 = vsel %vm5740, %v5734, %v5751
        %v5753 = vsel %vm5739, %v5750, %v5752
        %v5754 = vshll.u32 %v5714, 8
        %v5755 = vmul.u32.u64.compose %v5754, %v5753
        %v5756 = vextract.low.u32 %v5755
        %v5757 = vextract.high.u32 %v5755
        %v5758 = vmul.u32.u64.compose %v5754, %v5749
        %v5759 = vextract.low.u32 %v5758
        %v5760 = vextract.high.u32 %v5758
        %v5761 = vmul.u32 %v5754, %v5745
        %v5762 = vadd.s32 %v5757, %v5759
        %vm5763 = vc.u32 %v5757, %v5759
        %v5764 = vadd.s32 %v5760, 1
        %v5765 = vsel %vm5763, %v5764, %v5760
        %v5766 = vadd.s32 %v5761, %v5765
        %v5767 = vadd.s32 %v5766, 536870912
        %v5768 = vshrl.u32 %v5767, 30
        %v5769 = vshll.u32 %v5768, 30
        %v5770 = vsub.s32 %v5766, %v5769
        %vm5771 = vcmp.lt.s32.totalorder %v5770, 0
        %v5772 = vsub.s32 0, %v5770
        %v5773 = vsel %vm5771, %v5772, %v5770
        %v5774 = vclz %v5773
        %v5775 = vsub.s32 %v5774, 2
        %vm5776 = vcmp.gt.s32.totalorder 0, %v5775
        %v5777 = vsel %vm5776, 0, %v5775
        %v5778 = vsub.s32 32, %v5777
        %v5779 = vshll.u32 %v5770, %v5777
        %v5780 = vshrl.u32 %v5762, %v5778
        %v5781 = vor.u32 %v5779, %v5780
        %v5782 = vsub.s32 4294967266, %v5777
        %v5783 = vadd.s32 %v5782, 127
        %v5784 = vshll.u32 %v5783, 23
        %v5785 = vor.u32 4788187, %v5784
        %v5786 = vand.u32 2147483647, %v5785
        %v5788 = vcvt.s32.f32 %v5781
        %v5789 = vmul.f32 %v5788, %v5786
        %v5790 = vxor.u32 %v5789, 2147483648
        %v5791 = vsel %vm5708, %v5790, %v5789
        %v5792 = vsub.s32 4, %v5768
        %v5793 = vsel %vm5708, %v5792, %v5768
        %v5794 = vsel %vm5707, %v4246, %v5791
        %v5795 = vsel %vm5707, 0, %v5793
        %v5796 = vcosq.f32.pop %v5794
        %v5797 = vsinq.f32.pop %v5794
        %vm5798 = vweird.f32 %v4246
        %v5799 = vadd.s32 %v5795, 3
        %v5800 = vand.u32 %v5799, 3
        %vm5801 = vcmp.lt.s32.totalorder %v5800, 2
        %vm5802 = vcmp.eq.s32.totalorder %v5800, 0
        %v5803 = vxor.u32 %v5797, 2147483648
        %v5804 = vsel %vm5802, %v5796, %v5803
        %vm5805 = vcmp.eq.s32.totalorder %v5800, 2
        %v5806 = vxor.u32 %v5796, 2147483648
        %v5807 = vsel %vm5805, %v5806, %v5797
        %v5808 = vsel %vm5801, %v5804, %v5807
        %v5809 = vsel %vm5798, nan, %v5808
        %v5810 = vand.u32 2147483647, %v4248
        %vm5811 = vcmp.le.f32.partialorder %v5810, 0.7853982
        %vm5812 = vcmp.lt.s32.totalorder %v4248, 0
        %v5813 = vand.u32 %v4248, 2139095040
        %v5814 = vshrl.u32 %v5813, 23
        %v5815 = vsub.s32 %v5814, 127
        %v5816 = vand.u32 2147483647, %v4248
        %v5817 = vand.u32 %v5816, 8388607
        %v5818 = vor.u32 %v5817, 8388608
        %v5819 = vsub.s32 0, %v5818
        %v5820 = vadd.s32 %v5815, 1
        %vm5821 = vcmp.gt.s32.totalorder %v5820, 0
        %v5822 = vsel %vm5821, %v5820, 0
        %v5823 = vshrl.u32 %v5822, 5
        %v5824 = vand.u32 %v5822, 31
        %v5825 = vsub.s32 32, %v5824
        %v5826 = vshrl.u32 683565275, %v5825
        %v5827 = vshll.u32 683565275, %v5824
        %v5828 = vshrl.u32 2475754826, %v5825
        %v5829 = vor.u32 %v5827, %v5828
        %v5830 = vshll.u32 2475754826, %v5824
        %v5831 = vshrl.u32 2131351028, %v5825
        %v5832 = vor.u32 %v5830, %v5831
        %v5833 = vshll.u32 2131351028, %v5824
        %v5834 = vshrl.u32 2102212464, %v5825
        %v5835 = vor.u32 %v5833, %v5834
        %v5836 = vshll.u32 2102212464, %v5824
        %v5837 = vshrl.u32 920167782, %v5825
        %v5838 = vor.u32 %v5836, %v5837
        %v5839 = vshll.u32 920167782, %v5824
        %v5840 = vshrl.u32 1326507024, %v5825
        %v5841 = vor.u32 %v5839, %v5840
        %vm5842 = vcmp.lt.s32.totalorder %v5823, 1
        %vm5843 = vcmp.lt.s32.totalorder %v5823, 2
        %vm5844 = vcmp.lt.s32.totalorder %v5823, 3
        %vm5845 = vcmp.lt.s32.totalorder %v5823, 4
        %v5846 = vsel %vm5842, %v5826, %v5829
        %v5847 = vsel %vm5845, %v5835, 2102212464
        %v5848 = vsel %vm5844, %v5832, %v5847
        %v5849 = vsel %vm5843, %v5846, %v5848
        %v5850 = vsel %vm5842, %v5829, %v5832
        %v5851 = vsel %vm5845, %v5838, 920167782
        %v5852 = vsel %vm5844, %v5835, %v5851
        %v5853 = vsel %vm5843, %v5850, %v5852
        %v5854 = vsel %vm5842, %v5832, %v5835
        %v5855 = vsel %vm5845, %v5841, 1326507024
        %v5856 = vsel %vm5844, %v5838, %v5855
        %v5857 = vsel %vm5843, %v5854, %v5856
        %v5858 = vshll.u32 %v5818, 8
        %v5859 = vmul.u32.u64.compose %v5858, %v5857
        %v5860 = vextract.low.u32 %v5859
        %v5861 = vextract.high.u32 %v5859
        %v5862 = vmul.u32.u64.compose %v5858, %v5853
        %v5863 = vextract.low.u32 %v5862
        %v5864 = vextract.high.u32 %v5862
        %v5865 = vmul.u32 %v5858, %v5849
        %v5866 = vadd.s32 %v5861, %v5863
        %vm5867 = vc.u32 %v5861, %v5863
        %v5868 = vadd.s32 %v5864, 1
        %v5869 = vsel %vm5867, %v5868, %v5864
        %v5870 = vadd.s32 %v5865, %v5869
        %v5871 = vadd.s32 %v5870, 536870912
        %v5872 = vshrl.u32 %v5871, 30
        %v5873 = vshll.u32 %v5872, 30
        %v5874 = vsub.s32 %v5870, %v5873
        %vm5875 = vcmp.lt.s32.totalorder %v5874, 0
        %v5876 = vsub.s32 0, %v5874
        %v5877 = vsel %vm5875, %v5876, %v5874
        %v5878 = vclz %v5877
        %v5879 = vsub.s32 %v5878, 2
        %vm5880 = vcmp.gt.s32.totalorder 0, %v5879
        %v5881 = vsel %vm5880, 0, %v5879
        %v5882 = vsub.s32 32, %v5881
        %v5883 = vshll.u32 %v5874, %v5881
        %v5884 = vshrl.u32 %v5866, %v5882
        %v5885 = vor.u32 %v5883, %v5884
        %v5886 = vsub.s32 4294967266, %v5881
        %v5887 = vadd.s32 %v5886, 127
        %v5888 = vshll.u32 %v5887, 23
        %v5889 = vor.u32 4788187, %v5888
        %v5890 = vand.u32 2147483647, %v5889
        %v5892 = vcvt.s32.f32 %v5885
        %v5893 = vmul.f32 %v5892, %v5890
        %v5894 = vxor.u32 %v5893, 2147483648
        %v5895 = vsel %vm5812, %v5894, %v5893
        %v5896 = vsub.s32 4, %v5872
        %v5897 = vsel %vm5812, %v5896, %v5872
        %v5898 = vsel %vm5811, %v4248, %v5895
        %v5899 = vsel %vm5811, 0, %v5897
        %v5900 = vcosq.f32.pop %v5898
        %v5901 = vsinq.f32.pop %v5898
        %vm5902 = vweird.f32 %v4248
        %v5903 = vadd.s32 %v5899, 3
        %v5904 = vand.u32 %v5903, 3
        %vm5905 = vcmp.lt.s32.totalorder %v5904, 2
        %vm5906 = vcmp.eq.s32.totalorder %v5904, 0
        %v5907 = vxor.u32 %v5901, 2147483648
        %v5908 = vsel %vm5906, %v5900, %v5907
        %vm5909 = vcmp.eq.s32.totalorder %v5904, 2
        %v5910 = vxor.u32 %v5900, 2147483648
        %v5911 = vsel %vm5909, %v5910, %v5901
        %v5912 = vsel %vm5905, %v5908, %v5911
        %v5913 = vsel %vm5902, nan, %v5912
        %v5914 = vld [vmem:[%s5] sm:$0xff]
        %v5915 = vld [vmem:[%s5 + $0x8] sm:$0xff]
        %v5916 = vld [vmem:[%s5 + $0x10] sm:$0xff]
        %v5917 = vld [vmem:[%s5 + $0x18] sm:$0xff]
        %5919 = vset.pattern.permute.xlu0 0
        %5920 = vperm.xlu0 %5919, %v5914
        %v5921 = vpop.permute.xlu0 %5920
        %5924 = vset.pattern.permute.xlu0 0
        %5925 = vperm.xlu0 %5924, %v5915
        %v5926 = vpop.permute.xlu0 %5925
        %5929 = vset.pattern.permute.xlu0 0
        %5930 = vperm.xlu0 %5929, %v5916
        %v5931 = vpop.permute.xlu0 %5930
        %5934 = vset.pattern.permute.xlu0 0
        %5935 = vperm.xlu0 %5934, %v5917
        %v5936 = vpop.permute.xlu0 %5935
        %v5938 = vmul.f32 %v4353, %v5921
        %v5939 = vmul.f32 %v4457, %v5921
        %v5940 = vmul.f32 %v4561, %v5921
        %v5941 = vmul.f32 %v4665, %v5921
        %v5942 = vmul.f32 %v4769, %v5926
        %v5943 = vmul.f32 %v4873, %v5926
        %v5944 = vmul.f32 %v4977, %v5926
        %v5945 = vmul.f32 %v5081, %v5926
        %v5946 = vmul.f32 %v5185, %v5931
        %v5947 = vmul.f32 %v5289, %v5931
        %v5948 = vmul.f32 %v5393, %v5931
        %v5949 = vmul.f32 %v5497, %v5931
        %v5950 = vmul.f32 %v5601, %v5936
        %v5951 = vmul.f32 %v5705, %v5936
        %v5952 = vmul.f32 %v5809, %v5936
        %v5953 = vmul.f32 %v5913, %v5936
        %v5954 = vadd.f32 %v5938, %v5942
        %v5955 = vadd.f32 %v5954, %v5946
        %v5956 = vadd.f32 %v5955, %v5950
        %v5957 = vrot.slane %v5956, 4
        %v5958 = vadd.f32 %v5956, %v5957
        %v5959 = vrot.slane %v5958, 2
        %v5960 = vadd.f32 %v5958, %v5959
        %v5961 = vrot.slane %v5960, 1
        %v5962 = vadd.f32 %v5960, %v5961
        %v5963 = vadd.f32 %v5939, %v5943
        %v5964 = vadd.f32 %v5963, %v5947
        %v5965 = vadd.f32 %v5964, %v5951
        %v5966 = vrot.slane %v5965, 4
        %v5967 = vadd.f32 %v5965, %v5966
        %v5968 = vrot.slane %v5967, 2
        %v5969 = vadd.f32 %v5967, %v5968
        %v5970 = vrot.slane %v5969, 1
        %v5971 = vadd.f32 %v5969, %v5970
        %v5972 = vadd.f32 %v5940, %v5944
        %v5973 = vadd.f32 %v5972, %v5948
        %v5974 = vadd.f32 %v5973, %v5952
        %v5975 = vrot.slane %v5974, 4
        %v5976 = vadd.f32 %v5974, %v5975
        %v5977 = vrot.slane %v5976, 2
        %v5978 = vadd.f32 %v5976, %v5977
        %v5979 = vrot.slane %v5978, 1
        %v5980 = vadd.f32 %v5978, %v5979
        %v5981 = vadd.f32 %v5941, %v5945
        %v5982 = vadd.f32 %v5981, %v5949
        %v5983 = vadd.f32 %v5982, %v5953
        %v5984 = vrot.slane %v5983, 4
        %v5985 = vadd.f32 %v5983, %v5984
        %v5986 = vrot.slane %v5985, 2
        %v5987 = vadd.f32 %v5985, %v5986
        %v5988 = vrot.slane %v5987, 1
        %v5989 = vadd.f32 %v5987, %v5988
        %s5990 = sld [smem:[#allocation2]]
        %v5991 = vstv %s5990
        %v5992 = vadd.f32 %v5962, %v5991
        %v5993 = vadd.f32 %v5971, %v5991
        %v5994 = vadd.f32 %v5980, %v5991
        %v5995 = vadd.f32 %v5989, %v5991
        %v6000 = vcombine.low %v5992, %v5993
        %v6001 = vcombine.low %v5994, %v5995
        %v6003 = vunpack.c.l.s4 1966171168
        %v6004 = vunpack.c.0.s8 %v6003
        %v6005 = vlaneseq
        %v6006 = vshrl.u32 %v6005, 7
        %v6007 = vsub.s32 %v6004, %v6006
        %v6008 = vrot.slane %v6000, %v6007
        %v6010 = vunpack.c.l.s4 1966171168
        %v6011 = vunpack.c.0.s8 %v6010
        %v6012 = vlaneseq
        %v6013 = vshrl.u32 %v6012, 7
        %v6014 = vsub.s32 %v6011, %v6013
        %v6015 = vrot.slane %v6001, %v6014
        %v6016 = vcombine.low %v6008, %v6015
        %v6018 = vunpack.c.l.s4 1966171168
        %v6019 = vunpack.c.0.s8 %v6018
        %v6020 = vlaneseq
        %v6021 = vshrl.u32 %v6020, 7
        %v6022 = vsub.s32 %v6019, %v6021
        %v6023 = vrot.slane %v6016, %v6022
        %v6025 = vlaneseq
        %vm6026 = vcmp.ge.s32.totalorder %v6025, 0
        %vm6027 = vcmp.lt.s32.totalorder %v6025, 512
        %vm6028 = vmand %vm6026, %vm6027
        %6029 = vst.msk [vmem:[%s273] sm:$0xf] %vm6028, %v6023
        %s6030 = sand.u32 %s182, 1
        %s6031 = scalar_lea.sflag [#allocation4], %s6030
        %s6032 = sand.u32 %s182, 1
        %s6033 = smul.addr %s6032, 4
        %s6034 = scalar_lea.vmem [#allocation3], %s6033
        // Predicated region
        $region49: #{tpu_custom_call.1} parent=47 // pred_check
          %p6035 = pneg %p192
        $region50: #{tpu_custom_call.1} parent=47 // pred_check_branch
          %6037 = sbr.rel (%p6035) target = $region52
        $region51: #{tpu_custom_call.1} parent=47 // pred_region
          %s6038 = smul.u32 4, %s22
          %s6040 = ssub.s32 64, 64
          %6041 = vsyncadd %s6031, %s6040
          %s6042 = smul.addr %s6038, 16
          %s6043 = scalar_lea.hbm %s7, %s6042
          %s6045 = sshll.u32 %s6034, 4
          %s6046 = int_to_ptr.vmem [resolvable:$true] %s6045
          %6048 = dma.vmem_to_hbm [thread:$0]  %s6046, 64, %s6043, %s6031
        $region52: #{tpu_custom_call.1} parent=47 // pred_fallthru
          _
      $region48: #{tpu_custom_call.1} parent=5 // pred_fallthru
        _
      %p6049 = scmp.le.s32.totalorder 2, %s17
      // Predicated region
      $region53: #{tpu_custom_call.1} parent=5 // pred_check
        %p6050 = pneg %p6049
      $region54: #{tpu_custom_call.1} parent=5 // pred_check_branch
        %6052 = sbr.rel (%p6050) target = $region56
      $region55: #{tpu_custom_call.1} parent=5 // pred_region
        %s6053 = ssub.s32 %s17, 2
        // Predicated region
        $region57: #{tpu_custom_call.1} parent=55 // pred_check
          %p6054 = pneg %p198
        $region58: #{tpu_custom_call.1} parent=55 // pred_check_branch
          %6056 = sbr.rel (%p6054) target = $region60
        $region59: #{tpu_custom_call.1} parent=55 // pred_region
          %s6057 = sand.u32 %s183, 1
          %s6058 = scalar_lea.sflag [#allocation4], %s6057
          %s6059 = sand.u32 %s183, 1
          %s6060 = smul.addr %s6059, 4
          %s6061 = scalar_lea.vmem [#allocation3], %s6060
          %6062 = dma.done %s6058, 64
        $region60: #{tpu_custom_call.1} parent=55 // pred_fallthru
          _
      $region56: #{tpu_custom_call.1} parent=5 // pred_fallthru
        _
    $region6: #{tpu_custom_call.1} parent=1 // loop_footer
      %s21 = sadd.s32 1, %s17
    $region7: #{tpu_custom_call.1} parent=1 // loop_footer_branch
      %16 = sbr.rel target = $region3
    $region8: #{tpu_custom_call.1} parent=1 // loop_exit
      _
    %6063 = vsyncpa [#allocation4], 1
    %s6064 = scalar_lea.sflag [#allocation4], 1
    %6065 = vsyncpa %s6064, 1

</llo_original>
